<compile_context>
chip_gen: v6e
topology: v6e:2x2x1
jax: 0.10.0
libtpu: 0.0.40
codegen_flags: <defaults>
</compile_context>

<pallas_src>
import jax
import jax.numpy as jnp
from jax import lax
from jax.experimental import pallas as pl
from jax.experimental.pallas import tpu as pltpu

H_IN, W_IN = 16, 16          # spatial size of the small example input
H_OUT, W_OUT = 480, 640      # fixed by the module's forward()
TILE_H = 120                 # H_OUT row block (480 = 4 * 120)


# ----------------------------- wrapper-side glue -----------------------------
def _interp_matrix(in_size, out_size):
    """PyTorch bilinear (align_corners=False) interpolation matrix (out, in)."""
    i = jnp.arange(out_size, dtype=jnp.float32)
    scale = in_size / out_size
    src = (i + 0.5) * scale - 0.5
    src = jnp.maximum(src, 0.0)                                  # clamp negatives
    i0 = jnp.minimum(jnp.floor(src), in_size - 1).astype(jnp.int32)
    frac = src - i0.astype(jnp.float32)
    i1 = jnp.minimum(i0 + 1, in_size - 1)
    return (jax.nn.one_hot(i0, in_size, dtype=jnp.float32) * (1.0 - frac)[:, None]
            + jax.nn.one_hot(i1, in_size, dtype=jnp.float32) * frac[:, None])


def _tap_masks(h, w):
    """(9, h*w) f32 validity mask for each 3x3 tap (the zero-padding pattern)."""
    p = jnp.arange(h * w, dtype=jnp.int32)
    y, x = p // w, p % w
    rows = []
    for ky in range(3):
        for kx in range(3):
            dy, dx = ky - 1, kx - 1
            rows.append((y + dy >= 0) & (y + dy < h) & (x + dx >= 0) & (x + dx < w))
    return jnp.stack(rows, axis=0).astype(jnp.float32)


def _fold_bias(w, b):
    """(Cout, Cin, 3, 3), (Cout,) -> (Cout, 9*Cin + 1), tap-major, bias last."""
    cout, cin = w.shape[0], w.shape[1]
    w2d = jnp.transpose(w, (0, 2, 3, 1)).reshape(cout, 9 * cin)
    return jnp.concatenate([w2d, b[:, None]], axis=1)


def _row_select_mask(h, w):
    """(h, h*w) f32: S[y, p] = 1 iff p // w == y (selects spatial row y)."""
    p = jnp.arange(h * w, dtype=jnp.int32)
    y = jnp.arange(h, dtype=jnp.int32)
    return (p[None, :] // w == y[:, None]).astype(jnp.float32)


def _gather_awt(h, w, w_out):
    """(h*w, w_out): GAWT[p, q] = Aw[q, p % w] (W-interp applied to the flat layout)."""
    a_w = _interp_matrix(w, w_out)                       # (w_out, w)
    x_of_p = jnp.arange(h * w, dtype=jnp.int32) % w
    return a_w[:, x_of_p].T                              # (h*w, w_out)


# ------------------------------- fused kernel --------------------------------
def _fused_kernel(x_ref, mask_ref, w1_ref, w2_ref, s_ref, gawt_ref, ah_ref, o_ref):
    # x_ref:    (Cin, H*W)          flattened input, one batch element
    # mask_ref: (9, H*W)            per-tap zero-padding mask
    # w1_ref:   (C1, 9*Cin + 1)     conv1 weights, bias folded in (last column)
    # w2_ref:   (C2, 9*C1 + 1)      conv2 weights, bias folded in
    # s_ref:    (H, H*W)            row-selection mask S[y, p] = [p // W == y]
    # gawt_ref: (H*W, W_OUT) bf16   expanded W-interp GAWT[p, q] = Aw[q, p % W]
    # ah_ref:   (TILE_H, H) f32     block of the bilinear H-interp matrix
    # o_ref:    (C2, TILE_H, W_OUT)
    hw = x_ref.shape[1]
    c2 = o_ref.shape[0]
    w_in = hw // s_ref.shape[0]

    mask = mask_ref[...]
    ones_row = jnp.ones((1, hw), jnp.float32)

    def im2col_bias(a):
        """(C, H*W) activation -> (9*C + 1, H*W) im2col columns + ones row."""
        aa = jnp.concatenate([a, a], axis=1)            # (C, 2*H*W), aligned concat
        pieces = []
        t = 0
        for ky in range(3):
            for kx in range(3):
                s = (ky - 1) * w_in + (kx - 1)          # flat offset of this tap
                if s == 0:
                    pieces.append(a)                    # centre tap: mask is all-ones
                else:
                    k = s % hw
                    # shifted[:, p] == a[:, (p + s) mod hw]; spatially invalid
                    # positions are zeroed by the precomputed padding mask.
                    shifted = aa[:, k:k + hw]
                    pieces.append(shifted * mask[t:t + 1, :])
                t += 1
        pieces.append(ones_row)                         # bias row
        return jnp.concatenate(pieces, axis=0)

    # ---- conv1 + ReLU, conv2: one MXU matmul each (bias folded in, f32) ------
    h1 = jnp.maximum(
        jnp.dot(w1_ref[...], im2col_bias(x_ref[...]),
                preferred_element_type=jnp.float32), 0.0)            # (C1, H*W)
    h2 = jnp.dot(w2_ref[...], im2col_bias(h1),
                 preferred_element_type=jnp.float32)                 # (C2, H*W)

    # ---- bilinear resize: per channel, results stored straight into o_ref ----
    smask = s_ref[...]                                   # (H, H*W) f32
    gawt = gawt_ref[...]                                 # (H*W, W_OUT) bf16
    ah = ah_ref[...].astype(jnp.bfloat16)                # (TILE_H, H)
    for c in range(c2):
        # W-resize directly from the flat layout, no lane->sublane relayout:
        #   tmp[y, q] = sum_x h2[c, y*W + x] * Aw[q, x]
        lhs = (smask * h2[c:c + 1, :]).astype(jnp.bfloat16)              # (H, H*W)
        tmp = jnp.dot(lhs, gawt, preferred_element_type=jnp.float32)     # (H, W_OUT)
        # H-resize for this row block, written directly into the output window.
        o_ref[c, :, :] = jnp.dot(ah, tmp.astype(jnp.bfloat16),
                                 preferred_element_type=jnp.float32
                                 ).astype(o_ref.dtype)                   # (TILE_H, W_OUT)


# --------------------------------- wrapper ------------------------------------
def representation_adapter(x, params):
    """x: (N, 8, H, W) -> (N, 3, 480, 640); conv -> ReLU -> conv -> bilinear."""
    w1, b1, w2, b2 = params
    n, cin, h, w = x.shape
    hw = h * w
    c1, c2 = w1.shape[0], w2.shape[0]
    assert H_OUT % TILE_H == 0
    n_hblk = H_OUT // TILE_H

    x_flat = x.reshape(n, cin, hw)
    w1aug = _fold_bias(w1, b1)                                 # (32, 73)
    w2aug = _fold_bias(w2, b2)                                 # (3, 289)
    a_h = _interp_matrix(h, H_OUT)                             # (480, 16) f32
    gawt = _gather_awt(h, w, W_OUT).astype(jnp.bfloat16)       # (256, 640) bf16
    smask = _row_select_mask(h, w)                             # (16, 256) f32
    tap_mask = _tap_masks(h, w)                                # (9, 256)  f32

    return pl.pallas_call(
        _fused_kernel,
        out_shape=jax.ShapeDtypeStruct((n, c2, H_OUT, W_OUT), jnp.float32),
        grid=(n, n_hblk),
        in_specs=[
            pl.BlockSpec((None, cin, hw), lambda i, j: (i, 0, 0)),
            pl.BlockSpec((9, hw), lambda i, j: (0, 0)),
            pl.BlockSpec((c1, 9 * cin + 1), lambda i, j: (0, 0)),
            pl.BlockSpec((c2, 9 * c1 + 1), lambda i, j: (0, 0)),
            pl.BlockSpec((h, hw), lambda i, j: (0, 0)),
            pl.BlockSpec((hw, W_OUT), lambda i, j: (0, 0)),
            pl.BlockSpec((TILE_H, h), lambda i, j: (j, 0)),
        ],
        out_specs=pl.BlockSpec((None, c2, TILE_H, W_OUT), lambda i, j: (i, 0, j, 0)),
        compiler_params=pltpu.CompilerParams(
            dimension_semantics=("parallel", "parallel"),   # batch x H_OUT blocks
            vmem_limit_bytes=16 * 1024 * 1024),             # footprint ~4 MB
    )(x_flat, tap_mask, w1aug, w2aug, smask, gawt, a_h)


# ------------------------------- parameters ------------------------------------
def init_params(key):
    k1, k2, k3, k4 = jax.random.split(key, 4)
    w1 = jax.random.normal(k1, (32, 8, 3, 3), jnp.float32) / jnp.sqrt(8.0 * 9.0)
    b1 = jax.random.normal(k2, (32,), jnp.float32) * 0.01
    w2 = jax.random.normal(k3, (3, 32, 3, 3), jnp.float32) / jnp.sqrt(32.0 * 9.0)
    b2 = jax.random.normal(k4, (3,), jnp.float32) * 0.01
    return w1, b1, w2, b2


# --------------------------- pure-JAX reference --------------------------------
def _reference(x, params):
    w1, b1, w2, b2 = params
    dn = ('NCHW', 'OIHW', 'NCHW')
    h = lax.conv_general_dilated(x, w1, (1, 1), 'SAME', dimension_numbers=dn)
    h = jnp.maximum(h + b1[None, :, None, None], 0.0)
    h = lax.conv_general_dilated(h, w2, (1, 1), 'SAME', dimension_numbers=dn)
    h = h + b2[None, :, None, None]
    a_h = _interp_matrix(H_IN, H_OUT)
    a_w = _interp_matrix(W_IN, W_OUT)
    return jnp.einsum('ph,nchw,qw->ncpq', a_h, h, a_w)


if __name__ == "__main__":
    key = jax.random.PRNGKey(0)
    kx, kp = jax.random.split(key)
    x = jax.random.normal(kx, (2, 8, H_IN, W_IN), jnp.float32)   # NCHW, 8 channels
    params = init_params(kp)

    fwd = jax.jit(representation_adapter)
    out = jax.block_until_ready(fwd(x, params))
    assert out.shape == (2, 3, H_OUT, W_OUT), out.shape
    assert out.dtype == jnp.float32

    ref = _reference(x, params)
    err = jnp.abs(out - ref)
    max_err = float(jnp.max(err))
    mean_err = float(jnp.mean(err))
    # Tolerances sized for bf16 resize-matmul operands (f32 accumulation); real
    # bugs (wrong tap/interp indexing) produce O(0.3+) errors.
    assert max_err < 6e-2, f"max mismatch vs reference: {max_err}"
    assert mean_err < 8e-3, f"mean mismatch vs reference: {mean_err}"

    print("KERNEL_OK")
</pallas_src>

<mosaic_0001>
module attributes {stable_mosaic.version = 11 : i64} {
  func.func @_fused_kernel(%arg0: i32, %arg1: i32, %arg2: memref<1x8x256xf32, #tpu.memory_space<vmem>>, %arg3: memref<9x256xf32, #tpu.memory_space<vmem>>, %arg4: memref<32x73xf32, #tpu.memory_space<vmem>>, %arg5: memref<3x289xf32, #tpu.memory_space<vmem>>, %arg6: memref<16x256xf32, #tpu.memory_space<vmem>>, %arg7: memref<256x640xbf16, #tpu.memory_space<vmem>>, %arg8: memref<120x16xf32, #tpu.memory_space<vmem>>, %arg9: memref<1x3x120x640xf32, #tpu.memory_space<vmem>>) attributes {dimension_semantics = [#tpu.dimension_semantics<parallel>, #tpu.dimension_semantics<parallel>], iteration_bounds = array<i64: 2, 4>, scalar_prefetch = 0 : i64, scratch_operands = 0 : i64, tpu.core_type = #tpu.core_type<tc>, window_params = [{transform_indices = @transform_0, window_bounds = array<i64: 1, 8, 256>}, {pipeline_mode = #tpu.pipeline_mode<synchronous>, transform_indices = @transform_1, window_bounds = array<i64: 9, 256>}, {pipeline_mode = #tpu.pipeline_mode<synchronous>, transform_indices = @transform_2, window_bounds = array<i64: 32, 73>}, {pipeline_mode = #tpu.pipeline_mode<synchronous>, transform_indices = @transform_3, window_bounds = array<i64: 3, 289>}, {pipeline_mode = #tpu.pipeline_mode<synchronous>, transform_indices = @transform_4, window_bounds = array<i64: 16, 256>}, {pipeline_mode = #tpu.pipeline_mode<synchronous>, transform_indices = @transform_5, window_bounds = array<i64: 256, 640>}, {transform_indices = @transform_6, window_bounds = array<i64: 120, 16>}, {transform_indices = @transform_7, window_bounds = array<i64: 1, 3, 120, 640>}]} {
    %c0 = arith.constant 0 : index
    %c0_0 = arith.constant 0 : index
    %0 = vector.load %arg3[%c0, %c0_0] : memref<9x256xf32, #tpu.memory_space<vmem>>, vector<9x256xf32>
    %cst = arith.constant 1.000000e+00 : f32
    %1 = vector.broadcast %cst : f32 to vector<1x256xf32>
    %c0_1 = arith.constant 0 : index
    %c0_2 = arith.constant 0 : index
    %2 = vector.load %arg4[%c0_1, %c0_2] : memref<32x73xf32, #tpu.memory_space<vmem>>, vector<32x73xf32>
    %c0_3 = arith.constant 0 : index
    %c0_4 = arith.constant 0 : index
    %c0_5 = arith.constant 0 : index
    %3 = vector.load %arg2[%c0_3, %c0_4, %c0_5] : memref<1x8x256xf32, #tpu.memory_space<vmem>>, vector<1x8x256xf32>
    %4 = vector.shape_cast %3 : vector<1x8x256xf32> to vector<8x256xf32>
    %5 = tpu.concatenate %4, %4 in 1 : vector<8x256xf32>, vector<8x256xf32> -> vector<8x512xf32>
    %6 = vector.extract_strided_slice %5 {offsets = [0, 239], sizes = [8, 256], strides = [1, 1]} : vector<8x512xf32> to vector<8x256xf32>
    %7 = vector.extract_strided_slice %0 {offsets = [0, 0], sizes = [1, 256], strides = [1, 1]} : vector<9x256xf32> to vector<1x256xf32>
    %8 = vector.broadcast %7 : vector<1x256xf32> to vector<8x256xf32>
    %9 = arith.mulf %6, %8 : vector<8x256xf32>
    %10 = vector.extract_strided_slice %5 {offsets = [0, 240], sizes = [8, 256], strides = [1, 1]} : vector<8x512xf32> to vector<8x256xf32>
    %11 = vector.extract_strided_slice %0 {offsets = [1, 0], sizes = [1, 256], strides = [1, 1]} : vector<9x256xf32> to vector<1x256xf32>
    %12 = vector.broadcast %11 : vector<1x256xf32> to vector<8x256xf32>
    %13 = arith.mulf %10, %12 : vector<8x256xf32>
    %14 = vector.extract_strided_slice %5 {offsets = [0, 241], sizes = [8, 256], strides = [1, 1]} : vector<8x512xf32> to vector<8x256xf32>
    %15 = vector.extract_strided_slice %0 {offsets = [2, 0], sizes = [1, 256], strides = [1, 1]} : vector<9x256xf32> to vector<1x256xf32>
    %16 = vector.broadcast %15 : vector<1x256xf32> to vector<8x256xf32>
    %17 = arith.mulf %14, %16 : vector<8x256xf32>
    %18 = vector.extract_strided_slice %5 {offsets = [0, 255], sizes = [8, 256], strides = [1, 1]} : vector<8x512xf32> to vector<8x256xf32>
    %19 = vector.extract_strided_slice %0 {offsets = [3, 0], sizes = [1, 256], strides = [1, 1]} : vector<9x256xf32> to vector<1x256xf32>
    %20 = vector.broadcast %19 : vector<1x256xf32> to vector<8x256xf32>
    %21 = arith.mulf %18, %20 : vector<8x256xf32>
    %22 = vector.extract_strided_slice %5 {offsets = [0, 1], sizes = [8, 256], strides = [1, 1]} : vector<8x512xf32> to vector<8x256xf32>
    %23 = vector.extract_strided_slice %0 {offsets = [5, 0], sizes = [1, 256], strides = [1, 1]} : vector<9x256xf32> to vector<1x256xf32>
    %24 = vector.broadcast %23 : vector<1x256xf32> to vector<8x256xf32>
    %25 = arith.mulf %22, %24 : vector<8x256xf32>
    %26 = vector.extract_strided_slice %5 {offsets = [0, 15], sizes = [8, 256], strides = [1, 1]} : vector<8x512xf32> to vector<8x256xf32>
    %27 = vector.extract_strided_slice %0 {offsets = [6, 0], sizes = [1, 256], strides = [1, 1]} : vector<9x256xf32> to vector<1x256xf32>
    %28 = vector.broadcast %27 : vector<1x256xf32> to vector<8x256xf32>
    %29 = arith.mulf %26, %28 : vector<8x256xf32>
    %30 = vector.extract_strided_slice %5 {offsets = [0, 16], sizes = [8, 256], strides = [1, 1]} : vector<8x512xf32> to vector<8x256xf32>
    %31 = vector.extract_strided_slice %0 {offsets = [7, 0], sizes = [1, 256], strides = [1, 1]} : vector<9x256xf32> to vector<1x256xf32>
    %32 = vector.broadcast %31 : vector<1x256xf32> to vector<8x256xf32>
    %33 = arith.mulf %30, %32 : vector<8x256xf32>
    %34 = vector.extract_strided_slice %5 {offsets = [0, 17], sizes = [8, 256], strides = [1, 1]} : vector<8x512xf32> to vector<8x256xf32>
    %35 = vector.extract_strided_slice %0 {offsets = [8, 0], sizes = [1, 256], strides = [1, 1]} : vector<9x256xf32> to vector<1x256xf32>
    %36 = vector.broadcast %35 : vector<1x256xf32> to vector<8x256xf32>
    %37 = arith.mulf %34, %36 : vector<8x256xf32>
    %38 = tpu.concatenate %9, %13, %17, %21, %4, %25, %29, %33, %37, %1 in 0 : vector<8x256xf32>, vector<8x256xf32>, vector<8x256xf32>, vector<8x256xf32>, vector<8x256xf32>, vector<8x256xf32>, vector<8x256xf32>, vector<8x256xf32>, vector<8x256xf32>, vector<1x256xf32> -> vector<73x256xf32>
    %cst_6 = arith.constant dense<0.000000e+00> : vector<32x256xf32>
    %39 = tpu.matmul %2, %38, %cst_6 {dimension_numbers = #tpu.dot_dimension_numbers<[1], [0], [0], [1], [0, 0, 1, 1], [], []>} : vector<32x73xf32>, vector<73x256xf32>, vector<32x256xf32> -> vector<32x256xf32>
    %cst_7 = arith.constant 0.000000e+00 : f32
    %40 = vector.broadcast %cst_7 : f32 to vector<32x256xf32>
    %41 = arith.maximumf %39, %40 : vector<32x256xf32>
    %c0_8 = arith.constant 0 : index
    %c0_9 = arith.constant 0 : index
    %42 = vector.load %arg5[%c0_8, %c0_9] : memref<3x289xf32, #tpu.memory_space<vmem>>, vector<3x289xf32>
    %43 = tpu.concatenate %41, %41 in 1 : vector<32x256xf32>, vector<32x256xf32> -> vector<32x512xf32>
    %44 = vector.extract_strided_slice %43 {offsets = [0, 239], sizes = [32, 256], strides = [1, 1]} : vector<32x512xf32> to vector<32x256xf32>
    %45 = vector.extract_strided_slice %0 {offsets = [0, 0], sizes = [1, 256], strides = [1, 1]} : vector<9x256xf32> to vector<1x256xf32>
    %46 = vector.broadcast %45 : vector<1x256xf32> to vector<32x256xf32>
    %47 = arith.mulf %44, %46 : vector<32x256xf32>
    %48 = vector.extract_strided_slice %43 {offsets = [0, 240], sizes = [32, 256], strides = [1, 1]} : vector<32x512xf32> to vector<32x256xf32>
    %49 = vector.extract_strided_slice %0 {offsets = [1, 0], sizes = [1, 256], strides = [1, 1]} : vector<9x256xf32> to vector<1x256xf32>
    %50 = vector.broadcast %49 : vector<1x256xf32> to vector<32x256xf32>
    %51 = arith.mulf %48, %50 : vector<32x256xf32>
    %52 = vector.extract_strided_slice %43 {offsets = [0, 241], sizes = [32, 256], strides = [1, 1]} : vector<32x512xf32> to vector<32x256xf32>
    %53 = vector.extract_strided_slice %0 {offsets = [2, 0], sizes = [1, 256], strides = [1, 1]} : vector<9x256xf32> to vector<1x256xf32>
    %54 = vector.broadcast %53 : vector<1x256xf32> to vector<32x256xf32>
    %55 = arith.mulf %52, %54 : vector<32x256xf32>
    %56 = vector.extract_strided_slice %43 {offsets = [0, 255], sizes = [32, 256], strides = [1, 1]} : vector<32x512xf32> to vector<32x256xf32>
    %57 = vector.extract_strided_slice %0 {offsets = [3, 0], sizes = [1, 256], strides = [1, 1]} : vector<9x256xf32> to vector<1x256xf32>
    %58 = vector.broadcast %57 : vector<1x256xf32> to vector<32x256xf32>
    %59 = arith.mulf %56, %58 : vector<32x256xf32>
    %60 = vector.extract_strided_slice %43 {offsets = [0, 1], sizes = [32, 256], strides = [1, 1]} : vector<32x512xf32> to vector<32x256xf32>
    %61 = vector.extract_strided_slice %0 {offsets = [5, 0], sizes = [1, 256], strides = [1, 1]} : vector<9x256xf32> to vector<1x256xf32>
    %62 = vector.broadcast %61 : vector<1x256xf32> to vector<32x256xf32>
    %63 = arith.mulf %60, %62 : vector<32x256xf32>
    %64 = vector.extract_strided_slice %43 {offsets = [0, 15], sizes = [32, 256], strides = [1, 1]} : vector<32x512xf32> to vector<32x256xf32>
    %65 = vector.extract_strided_slice %0 {offsets = [6, 0], sizes = [1, 256], strides = [1, 1]} : vector<9x256xf32> to vector<1x256xf32>
    %66 = vector.broadcast %65 : vector<1x256xf32> to vector<32x256xf32>
    %67 = arith.mulf %64, %66 : vector<32x256xf32>
    %68 = vector.extract_strided_slice %43 {offsets = [0, 16], sizes = [32, 256], strides = [1, 1]} : vector<32x512xf32> to vector<32x256xf32>
    %69 = vector.extract_strided_slice %0 {offsets = [7, 0], sizes = [1, 256], strides = [1, 1]} : vector<9x256xf32> to vector<1x256xf32>
    %70 = vector.broadcast %69 : vector<1x256xf32> to vector<32x256xf32>
    %71 = arith.mulf %68, %70 : vector<32x256xf32>
    %72 = vector.extract_strided_slice %43 {offsets = [0, 17], sizes = [32, 256], strides = [1, 1]} : vector<32x512xf32> to vector<32x256xf32>
    %73 = vector.extract_strided_slice %0 {offsets = [8, 0], sizes = [1, 256], strides = [1, 1]} : vector<9x256xf32> to vector<1x256xf32>
    %74 = vector.broadcast %73 : vector<1x256xf32> to vector<32x256xf32>
    %75 = arith.mulf %72, %74 : vector<32x256xf32>
    %76 = tpu.concatenate %47, %51, %55, %59, %41, %63, %67, %71, %75, %1 in 0 : vector<32x256xf32>, vector<32x256xf32>, vector<32x256xf32>, vector<32x256xf32>, vector<32x256xf32>, vector<32x256xf32>, vector<32x256xf32>, vector<32x256xf32>, vector<32x256xf32>, vector<1x256xf32> -> vector<289x256xf32>
    %cst_10 = arith.constant dense<0.000000e+00> : vector<3x256xf32>
    %77 = tpu.matmul %42, %76, %cst_10 {dimension_numbers = #tpu.dot_dimension_numbers<[1], [0], [0], [1], [0, 0, 1, 1], [], []>} : vector<3x289xf32>, vector<289x256xf32>, vector<3x256xf32> -> vector<3x256xf32>
    %c0_11 = arith.constant 0 : index
    %c0_12 = arith.constant 0 : index
    %78 = vector.load %arg6[%c0_11, %c0_12] : memref<16x256xf32, #tpu.memory_space<vmem>>, vector<16x256xf32>
    %c0_13 = arith.constant 0 : index
    %c0_14 = arith.constant 0 : index
    %79 = vector.load %arg7[%c0_13, %c0_14] : memref<256x640xbf16, #tpu.memory_space<vmem>>, vector<256x640xbf16>
    %c0_15 = arith.constant 0 : index
    %c0_16 = arith.constant 0 : index
    %80 = vector.load %arg8[%c0_15, %c0_16] : memref<120x16xf32, #tpu.memory_space<vmem>>, vector<120x16xf32>
    %81 = arith.truncf %80 : vector<120x16xf32> to vector<120x16xbf16>
    %82 = vector.extract_strided_slice %77 {offsets = [0, 0], sizes = [1, 256], strides = [1, 1]} : vector<3x256xf32> to vector<1x256xf32>
    %83 = vector.broadcast %82 : vector<1x256xf32> to vector<16x256xf32>
    %84 = arith.mulf %78, %83 : vector<16x256xf32>
    %85 = arith.truncf %84 : vector<16x256xf32> to vector<16x256xbf16>
    %cst_17 = arith.constant dense<0.000000e+00> : vector<16x640xf32>
    %86 = tpu.matmul %85, %79, %cst_17 {dimension_numbers = #tpu.dot_dimension_numbers<[1], [0], [0], [1], [0, 0, 1, 1], [], []>} : vector<16x256xbf16>, vector<256x640xbf16>, vector<16x640xf32> -> vector<16x640xf32>
    %87 = arith.truncf %86 : vector<16x640xf32> to vector<16x640xbf16>
    %cst_18 = arith.constant dense<0.000000e+00> : vector<120x640xf32>
    %88 = tpu.matmul %81, %87, %cst_18 {dimension_numbers = #tpu.dot_dimension_numbers<[1], [0], [0], [1], [0, 0, 1, 1], [], []>} : vector<120x16xbf16>, vector<16x640xbf16>, vector<120x640xf32> -> vector<120x640xf32>
    %c0_19 = arith.constant 0 : index
    %c0_20 = arith.constant 0 : index
    %c0_21 = arith.constant 0 : index
    %c0_22 = arith.constant 0 : index
    %89 = vector.load %arg9[%c0_19, %c0_20, %c0_21, %c0_22] : memref<1x3x120x640xf32, #tpu.memory_space<vmem>>, vector<1x1x120x640xf32>
    %90 = vector.shape_cast %89 : vector<1x1x120x640xf32> to vector<120x640xf32>
    %91 = vector.shape_cast %88 : vector<120x640xf32> to vector<1x1x120x640xf32>
    tpu.vector_store %arg9[%c0_19, %c0_20, %c0_21, %c0_22], %91 {strides = array<i32>} : memref<1x3x120x640xf32, #tpu.memory_space<vmem>>, vector<1x1x120x640xf32>,
    %92 = vector.extract_strided_slice %77 {offsets = [1, 0], sizes = [1, 256], strides = [1, 1]} : vector<3x256xf32> to vector<1x256xf32>
    %93 = vector.broadcast %92 : vector<1x256xf32> to vector<16x256xf32>
    %94 = arith.mulf %78, %93 : vector<16x256xf32>
    %95 = arith.truncf %94 : vector<16x256xf32> to vector<16x256xbf16>
    %cst_23 = arith.constant dense<0.000000e+00> : vector<16x640xf32>
    %96 = tpu.matmul %95, %79, %cst_23 {dimension_numbers = #tpu.dot_dimension_numbers<[1], [0], [0], [1], [0, 0, 1, 1], [], []>} : vector<16x256xbf16>, vector<256x640xbf16>, vector<16x640xf32> -> vector<16x640xf32>
    %97 = arith.truncf %96 : vector<16x640xf32> to vector<16x640xbf16>
    %cst_24 = arith.constant dense<0.000000e+00> : vector<120x640xf32>
    %98 = tpu.matmul %81, %97, %cst_24 {dimension_numbers = #tpu.dot_dimension_numbers<[1], [0], [0], [1], [0, 0, 1, 1], [], []>} : vector<120x16xbf16>, vector<16x640xbf16>, vector<120x640xf32> -> vector<120x640xf32>
    %c0_25 = arith.constant 0 : index
    %c1 = arith.constant 1 : index
    %c0_26 = arith.constant 0 : index
    %c0_27 = arith.constant 0 : index
    %99 = vector.load %arg9[%c0_25, %c1, %c0_26, %c0_27] : memref<1x3x120x640xf32, #tpu.memory_space<vmem>>, vector<1x1x120x640xf32>
    %100 = vector.shape_cast %99 : vector<1x1x120x640xf32> to vector<120x640xf32>
    %101 = vector.shape_cast %98 : vector<120x640xf32> to vector<1x1x120x640xf32>
    tpu.vector_store %arg9[%c0_25, %c1, %c0_26, %c0_27], %101 {strides = array<i32>} : memref<1x3x120x640xf32, #tpu.memory_space<vmem>>, vector<1x1x120x640xf32>,
    %102 = vector.extract_strided_slice %77 {offsets = [2, 0], sizes = [1, 256], strides = [1, 1]} : vector<3x256xf32> to vector<1x256xf32>
    %103 = vector.broadcast %102 : vector<1x256xf32> to vector<16x256xf32>
    %104 = arith.mulf %78, %103 : vector<16x256xf32>
    %105 = arith.truncf %104 : vector<16x256xf32> to vector<16x256xbf16>
    %cst_28 = arith.constant dense<0.000000e+00> : vector<16x640xf32>
    %106 = tpu.matmul %105, %79, %cst_28 {dimension_numbers = #tpu.dot_dimension_numbers<[1], [0], [0], [1], [0, 0, 1, 1], [], []>} : vector<16x256xbf16>, vector<256x640xbf16>, vector<16x640xf32> -> vector<16x640xf32>
    %107 = arith.truncf %106 : vector<16x640xf32> to vector<16x640xbf16>
    %cst_29 = arith.constant dense<0.000000e+00> : vector<120x640xf32>
    %108 = tpu.matmul %81, %107, %cst_29 {dimension_numbers = #tpu.dot_dimension_numbers<[1], [0], [0], [1], [0, 0, 1, 1], [], []>} : vector<120x16xbf16>, vector<16x640xbf16>, vector<120x640xf32> -> vector<120x640xf32>
    %c0_30 = arith.constant 0 : index
    %c2 = arith.constant 2 : index
    %c0_31 = arith.constant 0 : index
    %c0_32 = arith.constant 0 : index
    %109 = vector.load %arg9[%c0_30, %c2, %c0_31, %c0_32] : memref<1x3x120x640xf32, #tpu.memory_space<vmem>>, vector<1x1x120x640xf32>
    %110 = vector.shape_cast %109 : vector<1x1x120x640xf32> to vector<120x640xf32>
    %111 = vector.shape_cast %108 : vector<120x640xf32> to vector<1x1x120x640xf32>
    tpu.vector_store %arg9[%c0_30, %c2, %c0_31, %c0_32], %111 {strides = array<i32>} : memref<1x3x120x640xf32, #tpu.memory_space<vmem>>, vector<1x1x120x640xf32>,
    return
  }
  func.func @transform_0(%arg0: i32, %arg1: i32) -> (i32, i32, i32) {
    %c0_i32 = arith.constant 0 : i32
    %c0_i32_0 = arith.constant 0 : i32
    %c0_i32_1 = arith.constant 0 : i32
    return %arg0, %c0_i32, %c0_i32_0 : i32, i32, i32
  }
  func.func @transform_1(%arg0: i32, %arg1: i32) -> (i32, i32) {
    %c0_i32 = arith.constant 0 : i32
    %c0_i32_0 = arith.constant 0 : i32
    %c0_i32_1 = arith.constant 0 : i32
    return %c0_i32, %c0_i32_0 : i32, i32
  }
  func.func @transform_2(%arg0: i32, %arg1: i32) -> (i32, i32) {
    %c0_i32 = arith.constant 0 : i32
    %c0_i32_0 = arith.constant 0 : i32
    %c0_i32_1 = arith.constant 0 : i32
    return %c0_i32, %c0_i32_0 : i32, i32
  }
  func.func @transform_3(%arg0: i32, %arg1: i32) -> (i32, i32) {
    %c0_i32 = arith.constant 0 : i32
    %c0_i32_0 = arith.constant 0 : i32
    %c0_i32_1 = arith.constant 0 : i32
    return %c0_i32, %c0_i32_0 : i32, i32
  }
  func.func @transform_4(%arg0: i32, %arg1: i32) -> (i32, i32) {
    %c0_i32 = arith.constant 0 : i32
    %c0_i32_0 = arith.constant 0 : i32
    %c0_i32_1 = arith.constant 0 : i32
    return %c0_i32, %c0_i32_0 : i32, i32
  }
  func.func @transform_5(%arg0: i32, %arg1: i32) -> (i32, i32) {
    %c0_i32 = arith.constant 0 : i32
    %c0_i32_0 = arith.constant 0 : i32
    %c0_i32_1 = arith.constant 0 : i32
    return %c0_i32, %c0_i32_0 : i32, i32
  }
  func.func @transform_6(%arg0: i32, %arg1: i32) -> (i32, i32) {
    %c0_i32 = arith.constant 0 : i32
    %c0_i32_0 = arith.constant 0 : i32
    return %arg1, %c0_i32 : i32, i32
  }
  func.func @transform_7(%arg0: i32, %arg1: i32) -> (i32, i32, i32, i32) {
    %c0_i32 = arith.constant 0 : i32
    %c0_i32_0 = arith.constant 0 : i32
    %c0_i32_1 = arith.constant 0 : i32
    return %arg0, %c0_i32, %arg1, %c0_i32_0 : i32, i32, i32, i32
  }
}

</mosaic_0001>

<llo_original>
// kernel: representation_adapter.1
$region0: #{representation_adapter.1}
  #allocation0 [shape = 'u32[]', space=smem, size = 0x4, offset = 0x4, fixed_abs, tag = 'smem constant byte address 0x4 - core index']
  #allocation1 [shape = 'u32[144,128]{1,0:T(1,128)}', space=vmem, size = 0x12000, scoped, tag = 'internal scratch']
  #allocation4 [shape = 's32[]', space=sflag, size = 0x4, offset = 0, fixed_abs, tag = 'sflag constant byte address 0x0 - dummy sync flag']
  %s0 = inlined_call_operand.vmem [shape: f32[2,8,256], index: 0, kind: input, shape index: {}]
  %s1 = inlined_call_operand.vmem [shape: f32[9,256], index: 1, kind: input, shape index: {}]
  %s2 = inlined_call_operand.vmem [shape: f32[32,73], index: 2, kind: input, shape index: {}]
  %s3 = inlined_call_operand.vmem [shape: f32[3,289], index: 3, kind: input, shape index: {}]
  %s4 = inlined_call_operand.vmem [shape: f32[16,256], index: 4, kind: input, shape index: {}]
  %s5 = inlined_call_operand.vmem [shape: bf16[256,640], index: 5, kind: input, shape index: {}]
  %s6 = inlined_call_operand.vmem [shape: f32[480,16], index: 6, kind: input, shape index: {}]
  %s7 = inlined_call_operand.hbm [shape: f32[2,3,480,640], index: 7, kind: output, shape index: {}]
  %s8 = sld [smem:[#allocation0]]
  $region61: #{representation_adapter.1} parent=0
    _
  %s10 = ssub.s32 1, %s8
  %s11 = scalar_select 0, %s10, %s8
  $region1: #{representation_adapter.1} parent=0
    #allocation2 [shape = 'u8[1843200]{0}', space=vmem, size = 0x1c2000, scoped, tag = 'output window, operand 0']
    #allocation3 [shape = 's32[2]{0}', space=sflag, size = 0x8, scoped, tag = 'scoped memory for representation_adapter.1']
    %12 = vsyncpa [#allocation3], 0
    %s13 = scalar_lea.sflag [#allocation3], 1
    %14 = vsyncpa %s13, 0
    loop: start=0, step=1, limit=10
    $region2: #{representation_adapter.1} parent=1 // loop_pre_header
      _
    $region3: #{representation_adapter.1} parent=1 // loop_header
      %s16 = sphi 0, %s20
      %p17 = scmp.ge.s32.totalorder %s16, 10
      %s23 = sphi 0, %s35
      %s24 = sphi 0, %s31
      %s25 = sphi 0, %s23
      %s26 = sphi 0, %s24
      %s27 = sphi 0, %s25
      %s28 = sphi 0, %s26
      %s38 = sphi 0, %s40
      %s41 = sphi 0, %s38
      %s42 = sphi 0, %s41
      %s58 = sphi 0, %s42
      %s62 = sphi 0, %s62
      %s64 = sphi 0, %s62
      %s65 = sphi 0, %s64
      %s79 = sphi 0, %s65
      %s83 = sphi 0, %s83
      %s85 = sphi 0, %s83
      %s86 = sphi 0, %s85
      %s100 = sphi 0, %s86
      %s104 = sphi 0, %s104
      %s106 = sphi 0, %s104
      %s107 = sphi 0, %s106
      %s121 = sphi 0, %s107
      %s125 = sphi 0, %s125
      %s127 = sphi 0, %s125
      %s128 = sphi 0, %s127
      %s142 = sphi 0, %s128
      %s146 = sphi 0, %s146
      %s148 = sphi 0, %s146
      %s149 = sphi 0, %s148
      %s163 = sphi 0, %s149
      %s169 = sphi 0, %s171
      %s172 = sphi 0, %s169
      %s173 = sphi 0, %s172
      %s189 = sphi 0, %s173
      %s197 = sphi 0, %s199
      %s200 = sphi 0, %s197
      %s201 = sphi 0, %s200
      %s217 = sphi 0, %s201
    $region4: #{representation_adapter.1} parent=1 // loop_header_branch
      %19 = sbr.rel (%p17) target = $region8
    $region5: #{representation_adapter.1} parent=1 // loop_body
      %s21 = ssub.s32 %s16, 1
      %s22 = ssub.s32 %s16, 2
      %s29 = sadd.s32 1, %s24
      %p30 = scmp.ge.s32.totalorder %s29, 4
      %s31 = scalar_select %p30, 0, %s29
      %s32 = sadd.s32 1, %s23
      %s33 = scalar_select %p30, %s32, %s23
      %p34 = scmp.ge.s32.totalorder %s33, 2
      %s35 = scalar_select %p34, 0, %s33
      %s36 = ssub.s32 %s23, %s35
      %p37 = scmp.eq.s32.totalorder %s36, 0
      %s39 = sadd.s32 %s38, 1
      %s40 = scalar_select %p37, %s38, %s39
      %p43 = pneg %p37
      %p44 = scmp.eq.s32.totalorder %s16, 7
      %p45 = por %p43, %p44
      %p46 = scmp.ne.s32.totalorder %s38, %s41
      %p47 = scmp.eq.s32.totalorder %s16, 0
      %p48 = por %p46, %p47
      %p49 = scmp.ne.s32.totalorder %s38, %s41
      %p50 = scmp.eq.s32.totalorder %s21, 7
      %p51 = por %p49, %p50
      %p52 = scmp.ne.s32.totalorder %s41, %s42
      %p53 = scmp.eq.s32.totalorder %s21, 0
      %p54 = por %p52, %p53
      %p55 = scmp.ne.s32.totalorder %s41, %s42
      %p56 = scmp.eq.s32.totalorder %s22, 7
      %p57 = por %p55, %p56
      %p59 = scmp.ne.s32.totalorder %s42, %s58
      %p60 = scmp.eq.s32.totalorder %s22, 0
      %p61 = por %p59, %p60
      %s63 = sadd.s32 %s62, 1
      %p66 = scmp.eq.s32.totalorder %s16, 7
      %p67 = scmp.ne.s32.totalorder %s62, %s64
      %p68 = scmp.eq.s32.totalorder %s16, 0
      %p69 = por %p67, %p68
      %p70 = scmp.ne.s32.totalorder %s62, %s64
      %p71 = scmp.eq.s32.totalorder %s21, 7
      %p72 = por %p70, %p71
      %p73 = scmp.ne.s32.totalorder %s64, %s65
      %p74 = scmp.eq.s32.totalorder %s21, 0
      %p75 = por %p73, %p74
      %p76 = scmp.ne.s32.totalorder %s64, %s65
      %p77 = scmp.eq.s32.totalorder %s22, 7
      %p78 = por %p76, %p77
      %p80 = scmp.ne.s32.totalorder %s65, %s79
      %p81 = scmp.eq.s32.totalorder %s22, 0
      %p82 = por %p80, %p81
      %s84 = sadd.s32 %s83, 1
      %p87 = scmp.eq.s32.totalorder %s16, 7
      %p88 = scmp.ne.s32.totalorder %s83, %s85
      %p89 = scmp.eq.s32.totalorder %s16, 0
      %p90 = por %p88, %p89
      %p91 = scmp.ne.s32.totalorder %s83, %s85
      %p92 = scmp.eq.s32.totalorder %s21, 7
      %p93 = por %p91, %p92
      %p94 = scmp.ne.s32.totalorder %s85, %s86
      %p95 = scmp.eq.s32.totalorder %s21, 0
      %p96 = por %p94, %p95
      %p97 = scmp.ne.s32.totalorder %s85, %s86
      %p98 = scmp.eq.s32.totalorder %s22, 7
      %p99 = por %p97, %p98
      %p101 = scmp.ne.s32.totalorder %s86, %s100
      %p102 = scmp.eq.s32.totalorder %s22, 0
      %p103 = por %p101, %p102
      %s105 = sadd.s32 %s104, 1
      %p108 = scmp.eq.s32.totalorder %s16, 7
      %p109 = scmp.ne.s32.totalorder %s104, %s106
      %p110 = scmp.eq.s32.totalorder %s16, 0
      %p111 = por %p109, %p110
      %p112 = scmp.ne.s32.totalorder %s104, %s106
      %p113 = scmp.eq.s32.totalorder %s21, 7
      %p114 = por %p112, %p113
      %p115 = scmp.ne.s32.totalorder %s106, %s107
      %p116 = scmp.eq.s32.totalorder %s21, 0
      %p117 = por %p115, %p116
      %p118 = scmp.ne.s32.totalorder %s106, %s107
      %p119 = scmp.eq.s32.totalorder %s22, 7
      %p120 = por %p118, %p119
      %p122 = scmp.ne.s32.totalorder %s107, %s121
      %p123 = scmp.eq.s32.totalorder %s22, 0
      %p124 = por %p122, %p123
      %s126 = sadd.s32 %s125, 1
      %p129 = scmp.eq.s32.totalorder %s16, 7
      %p130 = scmp.ne.s32.totalorder %s125, %s127
      %p131 = scmp.eq.s32.totalorder %s16, 0
      %p132 = por %p130, %p131
      %p133 = scmp.ne.s32.totalorder %s125, %s127
      %p134 = scmp.eq.s32.totalorder %s21, 7
      %p135 = por %p133, %p134
      %p136 = scmp.ne.s32.totalorder %s127, %s128
      %p137 = scmp.eq.s32.totalorder %s21, 0
      %p138 = por %p136, %p137
      %p139 = scmp.ne.s32.totalorder %s127, %s128
      %p140 = scmp.eq.s32.totalorder %s22, 7
      %p141 = por %p139, %p140
      %p143 = scmp.ne.s32.totalorder %s128, %s142
      %p144 = scmp.eq.s32.totalorder %s22, 0
      %p145 = por %p143, %p144
      %s147 = sadd.s32 %s146, 1
      %p150 = scmp.eq.s32.totalorder %s16, 7
      %p151 = scmp.ne.s32.totalorder %s146, %s148
      %p152 = scmp.eq.s32.totalorder %s16, 0
      %p153 = por %p151, %p152
      %p154 = scmp.ne.s32.totalorder %s146, %s148
      %p155 = scmp.eq.s32.totalorder %s21, 7
      %p156 = por %p154, %p155
      %p157 = scmp.ne.s32.totalorder %s148, %s149
      %p158 = scmp.eq.s32.totalorder %s21, 0
      %p159 = por %p157, %p158
      %p160 = scmp.ne.s32.totalorder %s148, %s149
      %p161 = scmp.eq.s32.totalorder %s22, 7
      %p162 = por %p160, %p161
      %p164 = scmp.ne.s32.totalorder %s149, %s163
      %p165 = scmp.eq.s32.totalorder %s22, 0
      %p166 = por %p164, %p165
      %s167 = ssub.s32 %s24, %s31
      %p168 = scmp.eq.s32.totalorder %s167, 0
      %s170 = sadd.s32 %s169, 1
      %s171 = scalar_select %p168, %s169, %s170
      %p174 = pneg %p168
      %p175 = scmp.eq.s32.totalorder %s16, 7
      %p176 = por %p174, %p175
      %p177 = scmp.ne.s32.totalorder %s169, %s172
      %p178 = scmp.eq.s32.totalorder %s16, 0
      %p179 = por %p177, %p178
      %p180 = scmp.ne.s32.totalorder %s169, %s172
      %p181 = scmp.eq.s32.totalorder %s21, 7
      %p182 = por %p180, %p181
      %p183 = scmp.ne.s32.totalorder %s172, %s173
      %p184 = scmp.eq.s32.totalorder %s21, 0
      %p185 = por %p183, %p184
      %p186 = scmp.ne.s32.totalorder %s172, %s173
      %p187 = scmp.eq.s32.totalorder %s22, 7
      %p188 = por %p186, %p187
      %p190 = scmp.ne.s32.totalorder %s173, %s189
      %p191 = scmp.eq.s32.totalorder %s22, 0
      %p192 = por %p190, %p191
      %s193 = ssub.s32 %s23, %s35
      %s194 = ssub.s32 %s24, %s31
      %s195 = sor.u32 %s193, %s194
      %p196 = scmp.eq.s32.totalorder %s195, 0
      %s198 = sadd.s32 %s197, 1
      %s199 = scalar_select %p196, %s197, %s198
      %p202 = pneg %p196
      %p203 = scmp.eq.s32.totalorder %s16, 7
      %p204 = por %p202, %p203
      %p205 = scmp.ne.s32.totalorder %s197, %s200
      %p206 = scmp.eq.s32.totalorder %s16, 0
      %p207 = por %p205, %p206
      %p208 = scmp.ne.s32.totalorder %s197, %s200
      %p209 = scmp.eq.s32.totalorder %s21, 7
      %p210 = por %p208, %p209
      %p211 = scmp.ne.s32.totalorder %s200, %s201
      %p212 = scmp.eq.s32.totalorder %s21, 0
      %p213 = por %p211, %p212
      %p214 = scmp.ne.s32.totalorder %s200, %s201
      %p215 = scmp.eq.s32.totalorder %s22, 7
      %p216 = por %p214, %p215
      %p218 = scmp.ne.s32.totalorder %s201, %s217
      %p219 = scmp.eq.s32.totalorder %s22, 0
      %p220 = por %p218, %p219
      %p221 = scmp.le.s32.totalorder 1, %s16
      %p222 = scmp.lt.s32.totalorder %s16, 9
      %p223 = pnand %p221, %p222
      %p224 = pneg %p223
      // Predicated region
      $region9: #{representation_adapter.1} parent=5 // pred_check
        _
      $region10: #{representation_adapter.1} parent=5 // pred_check_branch
        %226 = sbr.rel (%p223) target = $region12
      $region11: #{representation_adapter.1} parent=5 // pred_region
        %s227 = ssub.s32 %s16, 1
        // Predicated region
        $region13: #{representation_adapter.1} parent=11 // pred_check
          %p228 = pneg %p75
        $region14: #{representation_adapter.1} parent=11 // pred_check_branch
          %230 = sbr.rel (%p228) target = $region16
        $region15: #{representation_adapter.1} parent=11 // pred_region
          _
        $region16: #{representation_adapter.1} parent=11 // pred_fallthru
          _
        // Predicated region
        $region17: #{representation_adapter.1} parent=11 // pred_check
          %p231 = pneg %p96
        $region18: #{representation_adapter.1} parent=11 // pred_check_branch
          %233 = sbr.rel (%p231) target = $region20
        $region19: #{representation_adapter.1} parent=11 // pred_region
          _
        $region20: #{representation_adapter.1} parent=11 // pred_fallthru
          _
        // Predicated region
        $region21: #{representation_adapter.1} parent=11 // pred_check
          %p234 = pneg %p117
        $region22: #{representation_adapter.1} parent=11 // pred_check_branch
          %236 = sbr.rel (%p234) target = $region24
        $region23: #{representation_adapter.1} parent=11 // pred_region
          _
        $region24: #{representation_adapter.1} parent=11 // pred_fallthru
          _
        // Predicated region
        $region25: #{representation_adapter.1} parent=11 // pred_check
          %p237 = pneg %p138
        $region26: #{representation_adapter.1} parent=11 // pred_check_branch
          %239 = sbr.rel (%p237) target = $region28
        $region27: #{representation_adapter.1} parent=11 // pred_region
          _
        $region28: #{representation_adapter.1} parent=11 // pred_fallthru
          _
        // Predicated region
        $region29: #{representation_adapter.1} parent=11 // pred_check
          %p240 = pneg %p159
        $region30: #{representation_adapter.1} parent=11 // pred_check_branch
          %242 = sbr.rel (%p240) target = $region32
        $region31: #{representation_adapter.1} parent=11 // pred_region
          _
        $region32: #{representation_adapter.1} parent=11 // pred_fallthru
          _
      $region12: #{representation_adapter.1} parent=5 // pred_fallthru
        _
      %p243 = scmp.lt.s32.totalorder %s16, 8
      // Predicated region
      $region33: #{representation_adapter.1} parent=5 // pred_check
        %p244 = pneg %p243
      $region34: #{representation_adapter.1} parent=5 // pred_check_branch
        %246 = sbr.rel (%p244) target = $region36
      $region35: #{representation_adapter.1} parent=5 // pred_region
        // Predicated region
        $region37: #{representation_adapter.1} parent=35 // pred_check
          %p247 = pneg %p48
        $region38: #{representation_adapter.1} parent=35 // pred_check_branch
          %249 = sbr.rel (%p247) target = $region40
        $region39: #{representation_adapter.1} parent=35 // pred_region
          %p250 = scmp.lt.s32.totalorder %s23, 1
          %s251 = scalar_select %p250, %s23, 1
          %s252 = smul.addr %s251, 2
          %s253 = smul.addr %s252, 8
          %s254 = scalar_lea.vmem %s0, %s253
        $region40: #{representation_adapter.1} parent=35 // pred_fallthru
          _
        // Predicated region
        $region41: #{representation_adapter.1} parent=35 // pred_check
          %p255 = pneg %p179
        $region42: #{representation_adapter.1} parent=35 // pred_check_branch
          %257 = sbr.rel (%p255) target = $region44
        $region43: #{representation_adapter.1} parent=35 // pred_region
          %s258 = smul.u32 15, %s24
          %p259 = scmp.lt.s32.totalorder %s258, 59
          %s260 = scalar_select %p259, %s258, 59
          %s261 = smul.addr %s260, 8
          %s262 = scalar_lea.vmem %s6, %s261
          %s263 = smul.u32 15, %s24
        $region44: #{representation_adapter.1} parent=35 // pred_fallthru
          _
      $region36: #{representation_adapter.1} parent=5 // pred_fallthru
        _
      %p264 = scmp.le.s32.totalorder 1, %s16
      %p265 = scmp.lt.s32.totalorder %s16, 9
      %p266 = pnand %p264, %p265
      %p267 = pneg %p266
      // Predicated region
      $region45: #{representation_adapter.1} parent=5 // pred_check
        _
      $region46: #{representation_adapter.1} parent=5 // pred_check_branch
        %269 = sbr.rel (%p266) target = $region48
      $region47: #{representation_adapter.1} parent=5 // pred_region
        %s270 = ssub.s32 %s16, 1
        %p271 = scmp.lt.s32.totalorder %s25, 1
        %s272 = scalar_select %p271, %s25, 1
        %s273 = smul.addr %s272, 2
        %s274 = smul.addr %s273, 8
        %s275 = scalar_lea.vmem %s0, %s274
        %p276 = pneg %p54
        %p277 = pneg %p51
        %p278 = pneg %p75
        %p279 = pneg %p72
        %p280 = pneg %p96
        %p281 = pneg %p93
        %p282 = pneg %p117
        %p283 = pneg %p114
        %p284 = pneg %p138
        %p285 = pneg %p135
        %p286 = pneg %p159
        %p287 = pneg %p156
        %s288 = smul.u32 15, %s26
        %p289 = scmp.lt.s32.totalorder %s288, 59
        %s290 = scalar_select %p289, %s288, 59
        %s291 = smul.addr %s290, 8
        %s292 = scalar_lea.vmem %s6, %s291
        %p293 = pneg %p185
        %p294 = pneg %p182
        %p295 = pneg %p213
        %p296 = pneg %p210
        %s297 = sand.u32 %s200, 1
        %s298 = scalar_lea.sflag [#allocation3], %s297
        %s299 = sand.u32 %s200, 1
        %s300 = smul.addr %s299, 1800
        %s301 = scalar_lea.vmem [#allocation2], %s300
        %p302 = scmp.lt.s32.totalorder %s25, 1
        %s303 = scalar_select %p302, %s25, 1
        %s304 = smul.addr %s303, 2
        %s305 = smul.addr %s304, 8
        %s306 = scalar_lea.vmem %s0, %s305
        %s307 = smul.u32 15, %s26
        %p308 = scmp.lt.s32.totalorder %s307, 59
        %s309 = scalar_select %p308, %s307, 59
        %s310 = smul.addr %s309, 8
        %s311 = scalar_lea.vmem %s6, %s310
        %s312 = smul.u32 15, %s26
        %s313 = smul.u32 15, %s26
        %v315 = vld [vmem:[%s1] sm:$0xff]
        %v316 = vld [vmem:[%s1 + $0x8] sm:$0xff]
        %v317 = vld [vmem:[%s1 + $0x10] sm:$0x1]
        %v318 = vld [vmem:[%s1 + $0x18] sm:$0x1]
        %v319 = vld [vmem:[%s2] sm:$0xff]
        %v320 = vld [vmem:[%s2 + $0x8] sm:$0xff]
        %v321 = vld [vmem:[%s2 + $0x10] sm:$0xff]
        %v322 = vld [vmem:[%s2 + $0x18] sm:$0xff]
        %v323 = vld [vmem:[%s306] sm:$0xff]
        %v324 = vld [vmem:[%s306 + $0x8] sm:$0xff]
        %v325 = vlaneseq
        %v326 = vshrl.u32 %v325, 7
        %v327 = vsub.s32 0, %v326
        %v328 = vrot.slane %v315, %v327
        %v329 = vlaneseq
        %v330 = vshrl.u32 %v329, 7
        %v331 = vsub.s32 0, %v330
        %v332 = vrot.slane %v316, %v331
        %335 = vrot.lane.b32.xlu0 %v328, 111
        %v336 = vpop.permute.xlu0 %335
        %337 = vrot.lane.b32.xlu0 %v332, 111
        %v338 = vpop.permute.xlu0 %337
        %vm339 = vcmask 908288
        %v340 = vsel %vm339, %v336, %v338
        %v344 = vmul.f32 %v324, %v336
        %v345 = vmul.f32 %v323, %v340
        %v346 = vmul.f32 %v324, %v338
        %v347 = vlaneseq
        %v348 = vshrl.u32 %v347, 7
        %v349 = vsub.s32 1, %v348
        %v350 = vrot.slane %v315, %v349
        %v351 = vlaneseq
        %v352 = vshrl.u32 %v351, 7
        %v353 = vsub.s32 1, %v352
        %v354 = vrot.slane %v316, %v353
        %357 = vrot.lane.b32.xlu0 %v350, 112
        %v358 = vpop.permute.xlu0 %357
        %359 = vrot.lane.b32.xlu0 %v354, 112
        %v360 = vpop.permute.xlu0 %359
        %vm361 = vcmask 916480
        %v362 = vsel %vm361, %v358, %v360
        %v366 = vmul.f32 %v324, %v358
        %v367 = vmul.f32 %v323, %v362
        %v368 = vmul.f32 %v324, %v360
        %v369 = vlaneseq
        %v370 = vshrl.u32 %v369, 7
        %v371 = vsub.s32 2, %v370
        %v372 = vrot.slane %v315, %v371
        %v373 = vlaneseq
        %v374 = vshrl.u32 %v373, 7
        %v375 = vsub.s32 2, %v374
        %v376 = vrot.slane %v316, %v375
        %379 = vrot.lane.b32.xlu0 %v372, 113
        %v380 = vpop.permute.xlu0 %379
        %381 = vrot.lane.b32.xlu0 %v376, 113
        %v382 = vpop.permute.xlu0 %381
        %vm383 = vcmask 924672
        %v384 = vsel %vm383, %v380, %v382
        %v388 = vmul.f32 %v324, %v380
        %v389 = vmul.f32 %v323, %v384
        %v390 = vmul.f32 %v324, %v382
        %v391 = vlaneseq
        %v392 = vshrl.u32 %v391, 7
        %v393 = vsub.s32 3, %v392
        %v394 = vrot.slane %v315, %v393
        %v395 = vlaneseq
        %v396 = vshrl.u32 %v395, 7
        %v397 = vsub.s32 3, %v396
        %v398 = vrot.slane %v316, %v397
        %401 = vrot.lane.b32.xlu0 %v394, 127
        %v402 = vpop.permute.xlu0 %401
        %403 = vrot.lane.b32.xlu0 %v398, 127
        %v404 = vpop.permute.xlu0 %403
        %vm405 = vcmask 1039360
        %v406 = vsel %vm405, %v402, %v404
        %v410 = vmul.f32 %v324, %v402
        %v411 = vmul.f32 %v323, %v406
        %v412 = vmul.f32 %v324, %v404
        %v413 = vlaneseq
        %v414 = vshrl.u32 %v413, 7
        %v415 = vsub.s32 5, %v414
        %v416 = vrot.slane %v315, %v415
        %v417 = vlaneseq
        %v418 = vshrl.u32 %v417, 7
        %v419 = vsub.s32 5, %v418
        %v420 = vrot.slane %v316, %v419
        %423 = vrot.lane.b32.xlu0 %v416, 1
        %v424 = vpop.permute.xlu0 %423
        %425 = vrot.lane.b32.xlu0 %v420, 1
        %v426 = vpop.permute.xlu0 %425
        %vm427 = vcmask 7168
        %v428 = vsel %vm427, %v424, %v426
        %v432 = vmul.f32 %v323, %v424
        %v433 = vmul.f32 %v324, %v428
        %v434 = vmul.f32 %v323, %v426
        %v435 = vlaneseq
        %v436 = vshrl.u32 %v435, 7
        %v437 = vsub.s32 6, %v436
        %v438 = vrot.slane %v315, %v437
        %v439 = vlaneseq
        %v440 = vshrl.u32 %v439, 7
        %v441 = vsub.s32 6, %v440
        %v442 = vrot.slane %v316, %v441
        %445 = vrot.lane.b32.xlu0 %v438, 15
        %v446 = vpop.permute.xlu0 %445
        %447 = vrot.lane.b32.xlu0 %v442, 15
        %v448 = vpop.permute.xlu0 %447
        %vm449 = vcmask 121856
        %v450 = vsel %vm449, %v446, %v448
        %v454 = vmul.f32 %v323, %v446
        %v455 = vmul.f32 %v324, %v450
        %v456 = vmul.f32 %v323, %v448
        %v457 = vlaneseq
        %v458 = vshrl.u32 %v457, 7
        %v459 = vsub.s32 7, %v458
        %v460 = vrot.slane %v315, %v459
        %v461 = vlaneseq
        %v462 = vshrl.u32 %v461, 7
        %v463 = vsub.s32 7, %v462
        %v464 = vrot.slane %v316, %v463
        %467 = vrot.lane.b32.xlu0 %v460, 16
        %v468 = vpop.permute.xlu0 %467
        %469 = vrot.lane.b32.xlu0 %v464, 16
        %v470 = vpop.permute.xlu0 %469
        %vm471 = vcmask 130048
        %v472 = vsel %vm471, %v468, %v470
        %v476 = vmul.f32 %v323, %v468
        %v477 = vmul.f32 %v324, %v472
        %v478 = vmul.f32 %v323, %v470
        %v479 = vlaneseq
        %v480 = vshrl.u32 %v479, 7
        %v481 = vsub.s32 0, %v480
        %v482 = vrot.slane %v317, %v481
        %v483 = vlaneseq
        %v484 = vshrl.u32 %v483, 7
        %v485 = vsub.s32 0, %v484
        %v486 = vrot.slane %v318, %v485
        %489 = vrot.lane.b32.xlu0 %v482, 17
        %v490 = vpop.permute.xlu0 %489
        %491 = vrot.lane.b32.xlu0 %v486, 17
        %v492 = vpop.permute.xlu0 %491
        %vm493 = vcmask 138240
        %v494 = vsel %vm493, %v490, %v492
        %v498 = vmul.f32 %v323, %v490
        %v499 = vmul.f32 %v324, %v494
        %v500 = vmul.f32 %v323, %v492
        %504 = vrot.lane.b32.xlu0 %v366, 127
        %v505 = vpop.permute.xlu0 %504
        %506 = vrot.lane.b32.xlu0 %v367, 127
        %v507 = vpop.permute.xlu0 %506
        %508 = vrot.lane.b32.xlu0 %v368, 127
        %v509 = vpop.permute.xlu0 %508
        %v510 = vsel %vm405, %v505, %v507
        %v511 = vsel %vm405, %v507, %v509
        %515 = vrot.lane.b32.xlu0 %v388, 126
        %v516 = vpop.permute.xlu0 %515
        %517 = vrot.lane.b32.xlu0 %v389, 126
        %v518 = vpop.permute.xlu0 %517
        %519 = vrot.lane.b32.xlu0 %v390, 126
        %v520 = vpop.permute.xlu0 %519
        %vm521 = vcmask 1031168
        %v522 = vsel %vm521, %v516, %v518
        %v523 = vsel %vm521, %v518, %v520
        %527 = vrot.lane.b32.xlu0 %v410, 112
        %v528 = vpop.permute.xlu0 %527
        %529 = vrot.lane.b32.xlu0 %v411, 112
        %v530 = vpop.permute.xlu0 %529
        %531 = vrot.lane.b32.xlu0 %v412, 112
        %v532 = vpop.permute.xlu0 %531
        %v533 = vsel %vm361, %v528, %v530
        %v534 = vsel %vm361, %v530, %v532
        %537 = vrot.lane.b32.xlu0 %v323, 111
        %v538 = vpop.permute.xlu0 %537
        %539 = vrot.lane.b32.xlu0 %v324, 111
        %v540 = vpop.permute.xlu0 %539
        %v541 = vsel %vm339, %v538, %v540
        %545 = vrot.lane.b32.xlu0 %v432, 110
        %v546 = vpop.permute.xlu0 %545
        %547 = vrot.lane.b32.xlu0 %v433, 110
        %v548 = vpop.permute.xlu0 %547
        %549 = vrot.lane.b32.xlu0 %v434, 110
        %v550 = vpop.permute.xlu0 %549
        %vm551 = vcmask 900096
        %v552 = vsel %vm551, %v546, %v548
        %v553 = vsel %vm551, %v548, %v550
        %557 = vrot.lane.b32.xlu0 %v454, 96
        %v558 = vpop.permute.xlu0 %557
        %559 = vrot.lane.b32.xlu0 %v455, 96
        %v560 = vpop.permute.xlu0 %559
        %561 = vrot.lane.b32.xlu0 %v456, 96
        %v562 = vpop.permute.xlu0 %561
        %vm563 = vcmask 785408
        %v564 = vsel %vm563, %v558, %v560
        %v565 = vsel %vm563, %v560, %v562
        %569 = vrot.lane.b32.xlu0 %v476, 95
        %v570 = vpop.permute.xlu0 %569
        %571 = vrot.lane.b32.xlu0 %v477, 95
        %v572 = vpop.permute.xlu0 %571
        %573 = vrot.lane.b32.xlu0 %v478, 95
        %v574 = vpop.permute.xlu0 %573
        %vm575 = vcmask 777216
        %v576 = vsel %vm575, %v570, %v572
        %v577 = vsel %vm575, %v572, %v574
        %581 = vrot.lane.b32.xlu0 %v498, 94
        %v582 = vpop.permute.xlu0 %581
        %583 = vrot.lane.b32.xlu0 %v499, 94
        %v584 = vpop.permute.xlu0 %583
        %585 = vrot.lane.b32.xlu0 %v500, 94
        %v586 = vpop.permute.xlu0 %585
        %vm587 = vcmask 769024
        %v588 = vsel %vm587, %v582, %v584
        %v589 = vsel %vm587, %v584, %v586
        %594 = vrot.lane.b32.xlu0 %v344, 17
        %v595 = vpop.permute.xlu0 %594
        %596 = vrot.lane.b32.xlu0 %v345, 17
        %v597 = vpop.permute.xlu0 %596
        %598 = vrot.lane.b32.xlu0 %v346, 17
        %v599 = vpop.permute.xlu0 %598
        %600 = vrot.lane.b32.xlu0 %v510, 17
        %v601 = vpop.permute.xlu0 %600
        %602 = vrot.lane.b32.xlu0 %v511, 17
        %v603 = vpop.permute.xlu0 %602
        %604 = vrot.lane.b32.xlu0 %v509, 17
        %v605 = vpop.permute.xlu0 %604
        %606 = vrot.lane.b32.xlu0 %v522, 17
        %v607 = vpop.permute.xlu0 %606
        %608 = vrot.lane.b32.xlu0 %v523, 17
        %v609 = vpop.permute.xlu0 %608
        %610 = vrot.lane.b32.xlu0 %v520, 17
        %v611 = vpop.permute.xlu0 %610
        %612 = vrot.lane.b32.xlu0 %v533, 17
        %v613 = vpop.permute.xlu0 %612
        %614 = vrot.lane.b32.xlu0 %v534, 17
        %v615 = vpop.permute.xlu0 %614
        %616 = vrot.lane.b32.xlu0 %v532, 17
        %v617 = vpop.permute.xlu0 %616
        %618 = vrot.lane.b32.xlu0 %v538, 17
        %v619 = vpop.permute.xlu0 %618
        %620 = vrot.lane.b32.xlu0 %v541, 17
        %v621 = vpop.permute.xlu0 %620
        %622 = vrot.lane.b32.xlu0 %v540, 17
        %v623 = vpop.permute.xlu0 %622
        %624 = vrot.lane.b32.xlu0 %v546, 17
        %v625 = vpop.permute.xlu0 %624
        %626 = vrot.lane.b32.xlu0 %v552, 17
        %v627 = vpop.permute.xlu0 %626
        %628 = vrot.lane.b32.xlu0 %v553, 17
        %v629 = vpop.permute.xlu0 %628
        %630 = vrot.lane.b32.xlu0 %v558, 17
        %v631 = vpop.permute.xlu0 %630
        %632 = vrot.lane.b32.xlu0 %v564, 17
        %v633 = vpop.permute.xlu0 %632
        %634 = vrot.lane.b32.xlu0 %v565, 17
        %v635 = vpop.permute.xlu0 %634
        %636 = vrot.lane.b32.xlu0 %v570, 17
        %v637 = vpop.permute.xlu0 %636
        %638 = vrot.lane.b32.xlu0 %v576, 17
        %v639 = vpop.permute.xlu0 %638
        %640 = vrot.lane.b32.xlu0 %v577, 17
        %v641 = vpop.permute.xlu0 %640
        %642 = vrot.lane.b32.xlu0 %v582, 17
        %v643 = vpop.permute.xlu0 %642
        %644 = vrot.lane.b32.xlu0 %v588, 17
        %v645 = vpop.permute.xlu0 %644
        %646 = vrot.lane.b32.xlu0 %v589, 17
        %v647 = vpop.permute.xlu0 %646
        %648 = vrot.lane.b32.xlu0 1.0, 17
        %v649 = vpop.permute.xlu0 %648
        %v650 = vsel %vm493, %v595, %v597
        %v651 = vsel %vm493, %v597, %v599
        %v652 = vsel %vm493, %v601, %v603
        %v653 = vsel %vm493, %v603, %v605
        %v654 = vsel %vm493, %v607, %v609
        %v655 = vsel %vm493, %v609, %v611
        %v656 = vsel %vm493, %v613, %v615
        %v657 = vsel %vm493, %v615, %v617
        %v658 = vsel %vm493, %v619, %v621
        %v659 = vsel %vm493, %v621, %v623
        %v660 = vsel %vm493, %v625, %v627
        %v661 = vsel %vm493, %v627, %v629
        %v662 = vsel %vm493, %v631, %v633
        %v663 = vsel %vm493, %v633, %v635
        %v664 = vsel %vm493, %v637, %v639
        %v665 = vsel %vm493, %v639, %v641
        %v666 = vsel %vm493, %v643, %v645
        %v667 = vsel %vm493, %v645, %v647
        %vm686 = vcmask 596992
        %v688 = vsel %vm686, %v319, 0
        %v691 = vsel %vm686, %v320, 0
        %v694 = vsel %vm686, %v321, 0
        %v697 = vsel %vm686, %v322, 0
        %vm699 = vcmask 1040384
        %v700 = vsel %vm699, %v649, 0
        %702 = vmatprep.subr.mxu0 0.0
        %703 = vmatpush1.msra.mxu0 0.0
        %704 = vmatprep.subr.mxu0 0.0
        %705 = vmatpush1.msra.mxu0 0.0
        %706 = vmatprep.subr.mxu0 0.0
        %707 = vmatpush1.msra.mxu0 0.0
        %708 = vmatprep.subr.mxu0 0.0
        %709 = vmatpush1.msra.mxu0 0.0
        %710 = vmatprep.subr.mxu0 0.0
        %711 = vmatpush1.msra.mxu0 0.0
        %712 = vmatprep.subr.mxu0 0.0
        %713 = vmatpush1.msra.mxu0 0.0
        %714 = vmatprep.subr.mxu0 %v700
        %715 = vmatpush1.msra.mxu0 %v700
        %716 = vmatprep.subr.mxu0 %v667
        %717 = vmatpush1.msra.mxu0 %v666
        %718 = vmatprep.subr.mxu0 %v665
        %719 = vmatpush1.msra.mxu0 %v664
        %720 = vmatprep.subr.mxu0 %v663
        %721 = vmatpush1.msra.mxu0 %v662
        %722 = vmatprep.subr.mxu0 %v661
        %723 = vmatpush1.msra.mxu0 %v660
        %724 = vmatprep.subr.mxu0 %v659
        %725 = vmatpush1.msra.mxu0 %v658
        %726 = vmatprep.subr.mxu0 %v657
        %727 = vmatpush1.msra.mxu0 %v656
        %728 = vmatprep.subr.mxu0 %v655
        %729 = vmatpush1.msra.mxu0 %v654
        %730 = vmatprep.subr.mxu0 %v653
        %731 = vmatpush1.msra.mxu0 %v652
        %732 = vmatprep.subr.mxu0 %v651
        %733 = vmatpush1.msra.mxu0 %v650
        %734 = vmatprep.subr.mxu0 0.0
        %735 = vmatpush2.msra.mxu0 0.0
        %736 = vmatprep.subr.mxu0 0.0
        %737 = vmatpush2.msra.mxu0 0.0
        %738 = vmatprep.subr.mxu0 0.0
        %739 = vmatpush2.msra.mxu0 0.0
        %740 = vmatprep.subr.mxu0 0.0
        %741 = vmatpush2.msra.mxu0 0.0
        %742 = vmatprep.subr.mxu0 0.0
        %743 = vmatpush2.msra.mxu0 0.0
        %744 = vmatprep.subr.mxu0 0.0
        %745 = vmatpush2.msra.mxu0 0.0
        %746 = vmatprep.subr.mxu0 0.0
        %747 = vmatpush2.msra.mxu0 0.0
        %748 = vmatprep.subr.mxu0 0.0
        %749 = vmatpush2.msra.mxu0 0.0
        %750 = vmatprep.subr.mxu0 0.0
        %751 = vmatpush2.msra.mxu0 0.0
        %752 = vmatprep.subr.mxu0 0.0
        %753 = vmatpush2.msra.mxu0 0.0
        %754 = vmatprep.subr.mxu0 0.0
        %755 = vmatpush2.msra.mxu0 0.0
        %756 = vmatprep.subr.mxu0 0.0
        %757 = vmatpush2.msra.mxu0 0.0
        %758 = vmatprep.subr.mxu0 0.0
        %759 = vmatpush2.msra.mxu0 0.0
        %760 = vmatprep.subr.mxu0 0.0
        %761 = vmatpush2.msra.mxu0 0.0
        %762 = vmatprep.subr.mxu0 0.0
        %763 = vmatpush2.msra.mxu0 0.0
        %764 = vmatprep.subr.mxu0 0.0
        %765 = vmatpush2.msra.mxu0 0.0
        %766 = vmatprep.mubr.f32.mxu0 0.0
        %767 = vmatmul.mubr.f32.gmra.mxu0 %v688
        %v768 = vpop.f32.mrf.mxu0
        %v769 = vadd.f32 0.0, %v768
        %v770 = vpop.f32.mrf.mxu0
        %v771 = vadd.f32 0.0, %v770
        %772 = vmatprep.mubr.f32.mxu0 0.0
        %773 = vmatmul.mubr.f32.gmra.mxu0 %v691
        %v774 = vpop.f32.mrf.mxu0
        %v775 = vadd.f32 0.0, %v774
        %v776 = vpop.f32.mrf.mxu0
        %v777 = vadd.f32 0.0, %v776
        %778 = vmatprep.mubr.f32.mxu0 0.0
        %779 = vmatmul.mubr.f32.gmra.mxu0 %v694
        %v780 = vpop.f32.mrf.mxu0
        %v781 = vadd.f32 0.0, %v780
        %v782 = vpop.f32.mrf.mxu0
        %v783 = vadd.f32 0.0, %v782
        %784 = vmatprep.mubr.f32.mxu0 0.0
        %785 = vmatmul.mubr.f32.gmra.mxu0 %v697
        %v786 = vpop.f32.mrf.mxu0
        %v787 = vadd.f32 0.0, %v786
        %v788 = vpop.f32.mrf.mxu0
        %v789 = vadd.f32 0.0, %v788
        %790 = vdwg.mxu0
        %v791 = vmax.f32 %v769, 0.0
        %v792 = vmax.f32 %v771, 0.0
        %v793 = vmax.f32 %v775, 0.0
        %v794 = vmax.f32 %v777, 0.0
        %v795 = vmax.f32 %v781, 0.0
        %v796 = vmax.f32 %v783, 0.0
        %v797 = vmax.f32 %v787, 0.0
        %v798 = vmax.f32 %v789, 0.0
        %v799 = vld [vmem:[%s3] sm:$0x77]
        %v800 = vld [vmem:[%s3 + $0x8] sm:$0x7]
        %v801 = vmul.f32 %v792, %v336
        %v802 = vmul.f32 %v791, %v340
        %v803 = vmul.f32 %v792, %v338
        %v804 = vmul.f32 %v794, %v336
        %v805 = vmul.f32 %v793, %v340
        %v806 = vmul.f32 %v794, %v338
        %v807 = vmul.f32 %v796, %v336
        %v808 = vmul.f32 %v795, %v340
        %v809 = vmul.f32 %v796, %v338
        %v810 = vmul.f32 %v798, %v336
        %v811 = vmul.f32 %v797, %v340
        %v812 = vmul.f32 %v798, %v338
        %v813 = vmul.f32 %v792, %v358
        %v814 = vmul.f32 %v791, %v362
        %v815 = vmul.f32 %v792, %v360
        %v816 = vmul.f32 %v794, %v358
        %v817 = vmul.f32 %v793, %v362
        %v818 = vmul.f32 %v794, %v360
        %v819 = vmul.f32 %v796, %v358
        %v820 = vmul.f32 %v795, %v362
        %v821 = vmul.f32 %v796, %v360
        %v822 = vmul.f32 %v798, %v358
        %v823 = vmul.f32 %v797, %v362
        %v824 = vmul.f32 %v798, %v360
        %v825 = vmul.f32 %v792, %v380
        %v826 = vmul.f32 %v791, %v384
        %v827 = vmul.f32 %v792, %v382
        %v828 = vmul.f32 %v794, %v380
        %v829 = vmul.f32 %v793, %v384
        %v830 = vmul.f32 %v794, %v382
        %v831 = vmul.f32 %v796, %v380
        %v832 = vmul.f32 %v795, %v384
        %v833 = vmul.f32 %v796, %v382
        %v834 = vmul.f32 %v798, %v380
        %v835 = vmul.f32 %v797, %v384
        %v836 = vmul.f32 %v798, %v382
        %v837 = vmul.f32 %v792, %v402
        %v838 = vmul.f32 %v791, %v406
        %v839 = vmul.f32 %v792, %v404
        %v840 = vmul.f32 %v794, %v402
        %v841 = vmul.f32 %v793, %v406
        %v842 = vmul.f32 %v794, %v404
        %v843 = vmul.f32 %v796, %v402
        %v844 = vmul.f32 %v795, %v406
        %v845 = vmul.f32 %v796, %v404
        %v846 = vmul.f32 %v798, %v402
        %v847 = vmul.f32 %v797, %v406
        %v848 = vmul.f32 %v798, %v404
        %v849 = vmul.f32 %v791, %v424
        %v850 = vmul.f32 %v792, %v428
        %v851 = vmul.f32 %v791, %v426
        %v852 = vmul.f32 %v793, %v424
        %v853 = vmul.f32 %v794, %v428
        %v854 = vmul.f32 %v793, %v426
        %v855 = vmul.f32 %v795, %v424
        %v856 = vmul.f32 %v796, %v428
        %v857 = vmul.f32 %v795, %v426
        %v858 = vmul.f32 %v797, %v424
        %v859 = vmul.f32 %v798, %v428
        %v860 = vmul.f32 %v797, %v426
        %v861 = vmul.f32 %v791, %v446
        %v862 = vmul.f32 %v792, %v450
        %v863 = vmul.f32 %v791, %v448
        %v864 = vmul.f32 %v793, %v446
        %v865 = vmul.f32 %v794, %v450
        %v866 = vmul.f32 %v793, %v448
        %v867 = vmul.f32 %v795, %v446
        %v868 = vmul.f32 %v796, %v450
        %v869 = vmul.f32 %v795, %v448
        %v870 = vmul.f32 %v797, %v446
        %v871 = vmul.f32 %v798, %v450
        %v872 = vmul.f32 %v797, %v448
        %v873 = vmul.f32 %v791, %v468
        %v874 = vmul.f32 %v792, %v472
        %v875 = vmul.f32 %v791, %v470
        %v876 = vmul.f32 %v793, %v468
        %v877 = vmul.f32 %v794, %v472
        %v878 = vmul.f32 %v793, %v470
        %v879 = vmul.f32 %v795, %v468
        %v880 = vmul.f32 %v796, %v472
        %v881 = vmul.f32 %v795, %v470
        %v882 = vmul.f32 %v797, %v468
        %v883 = vmul.f32 %v798, %v472
        %v884 = vmul.f32 %v797, %v470
        %v885 = vmul.f32 %v791, %v490
        %v886 = vmul.f32 %v792, %v494
        %v887 = vmul.f32 %v791, %v492
        %v888 = vmul.f32 %v793, %v490
        %v889 = vmul.f32 %v794, %v494
        %v890 = vmul.f32 %v793, %v492
        %v891 = vmul.f32 %v795, %v490
        %v892 = vmul.f32 %v796, %v494
        %v893 = vmul.f32 %v795, %v492
        %v894 = vmul.f32 %v797, %v490
        %v895 = vmul.f32 %v798, %v494
        %v896 = vmul.f32 %v797, %v492
        %909 = vrot.lane.b32.xlu0 %v813, 127
        %v910 = vpop.permute.xlu0 %909
        %911 = vrot.lane.b32.xlu0 %v814, 127
        %v912 = vpop.permute.xlu0 %911
        %913 = vrot.lane.b32.xlu0 %v815, 127
        %v914 = vpop.permute.xlu0 %913
        %915 = vrot.lane.b32.xlu0 %v816, 127
        %v916 = vpop.permute.xlu0 %915
        %917 = vrot.lane.b32.xlu0 %v817, 127
        %v918 = vpop.permute.xlu0 %917
        %919 = vrot.lane.b32.xlu0 %v818, 127
        %v920 = vpop.permute.xlu0 %919
        %921 = vrot.lane.b32.xlu0 %v819, 127
        %v922 = vpop.permute.xlu0 %921
        %923 = vrot.lane.b32.xlu0 %v820, 127
        %v924 = vpop.permute.xlu0 %923
        %925 = vrot.lane.b32.xlu0 %v821, 127
        %v926 = vpop.permute.xlu0 %925
        %927 = vrot.lane.b32.xlu0 %v822, 127
        %v928 = vpop.permute.xlu0 %927
        %929 = vrot.lane.b32.xlu0 %v823, 127
        %v930 = vpop.permute.xlu0 %929
        %931 = vrot.lane.b32.xlu0 %v824, 127
        %v932 = vpop.permute.xlu0 %931
        %v933 = vsel %vm405, %v910, %v912
        %v934 = vsel %vm405, %v912, %v914
        %v935 = vsel %vm405, %v916, %v918
        %v936 = vsel %vm405, %v918, %v920
        %v937 = vsel %vm405, %v922, %v924
        %v938 = vsel %vm405, %v924, %v926
        %v939 = vsel %vm405, %v928, %v930
        %v940 = vsel %vm405, %v930, %v932
        %953 = vrot.lane.b32.xlu0 %v825, 126
        %v954 = vpop.permute.xlu0 %953
        %955 = vrot.lane.b32.xlu0 %v826, 126
        %v956 = vpop.permute.xlu0 %955
        %957 = vrot.lane.b32.xlu0 %v827, 126
        %v958 = vpop.permute.xlu0 %957
        %959 = vrot.lane.b32.xlu0 %v828, 126
        %v960 = vpop.permute.xlu0 %959
        %961 = vrot.lane.b32.xlu0 %v829, 126
        %v962 = vpop.permute.xlu0 %961
        %963 = vrot.lane.b32.xlu0 %v830, 126
        %v964 = vpop.permute.xlu0 %963
        %965 = vrot.lane.b32.xlu0 %v831, 126
        %v966 = vpop.permute.xlu0 %965
        %967 = vrot.lane.b32.xlu0 %v832, 126
        %v968 = vpop.permute.xlu0 %967
        %969 = vrot.lane.b32.xlu0 %v833, 126
        %v970 = vpop.permute.xlu0 %969
        %971 = vrot.lane.b32.xlu0 %v834, 126
        %v972 = vpop.permute.xlu0 %971
        %973 = vrot.lane.b32.xlu0 %v835, 126
        %v974 = vpop.permute.xlu0 %973
        %975 = vrot.lane.b32.xlu0 %v836, 126
        %v976 = vpop.permute.xlu0 %975
        %v977 = vsel %vm521, %v954, %v956
        %v978 = vsel %vm521, %v956, %v958
        %v979 = vsel %vm521, %v960, %v962
        %v980 = vsel %vm521, %v962, %v964
        %v981 = vsel %vm521, %v966, %v968
        %v982 = vsel %vm521, %v968, %v970
        %v983 = vsel %vm521, %v972, %v974
        %v984 = vsel %vm521, %v974, %v976
        %997 = vrot.lane.b32.xlu0 %v837, 112
        %v998 = vpop.permute.xlu0 %997
        %999 = vrot.lane.b32.xlu0 %v838, 112
        %v1000 = vpop.permute.xlu0 %999
        %1001 = vrot.lane.b32.xlu0 %v839, 112
        %v1002 = vpop.permute.xlu0 %1001
        %1003 = vrot.lane.b32.xlu0 %v840, 112
        %v1004 = vpop.permute.xlu0 %1003
        %1005 = vrot.lane.b32.xlu0 %v841, 112
        %v1006 = vpop.permute.xlu0 %1005
        %1007 = vrot.lane.b32.xlu0 %v842, 112
        %v1008 = vpop.permute.xlu0 %1007
        %1009 = vrot.lane.b32.xlu0 %v843, 112
        %v1010 = vpop.permute.xlu0 %1009
        %1011 = vrot.lane.b32.xlu0 %v844, 112
        %v1012 = vpop.permute.xlu0 %1011
        %1013 = vrot.lane.b32.xlu0 %v845, 112
        %v1014 = vpop.permute.xlu0 %1013
        %1015 = vrot.lane.b32.xlu0 %v846, 112
        %v1016 = vpop.permute.xlu0 %1015
        %1017 = vrot.lane.b32.xlu0 %v847, 112
        %v1018 = vpop.permute.xlu0 %1017
        %1019 = vrot.lane.b32.xlu0 %v848, 112
        %v1020 = vpop.permute.xlu0 %1019
        %v1021 = vsel %vm361, %v998, %v1000
        %v1022 = vsel %vm361, %v1000, %v1002
        %v1023 = vsel %vm361, %v1004, %v1006
        %v1024 = vsel %vm361, %v1006, %v1008
        %v1025 = vsel %vm361, %v1010, %v1012
        %v1026 = vsel %vm361, %v1012, %v1014
        %v1027 = vsel %vm361, %v1016, %v1018
        %v1028 = vsel %vm361, %v1018, %v1020
        %1037 = vrot.lane.b32.xlu0 %v791, 111
        %v1038 = vpop.permute.xlu0 %1037
        %1039 = vrot.lane.b32.xlu0 %v792, 111
        %v1040 = vpop.permute.xlu0 %1039
        %1041 = vrot.lane.b32.xlu0 %v793, 111
        %v1042 = vpop.permute.xlu0 %1041
        %1043 = vrot.lane.b32.xlu0 %v794, 111
        %v1044 = vpop.permute.xlu0 %1043
        %1045 = vrot.lane.b32.xlu0 %v795, 111
        %v1046 = vpop.permute.xlu0 %1045
        %1047 = vrot.lane.b32.xlu0 %v796, 111
        %v1048 = vpop.permute.xlu0 %1047
        %1049 = vrot.lane.b32.xlu0 %v797, 111
        %v1050 = vpop.permute.xlu0 %1049
        %1051 = vrot.lane.b32.xlu0 %v798, 111
        %v1052 = vpop.permute.xlu0 %1051
        %v1053 = vsel %vm339, %v1038, %v1040
        %v1054 = vsel %vm339, %v1042, %v1044
        %v1055 = vsel %vm339, %v1046, %v1048
        %v1056 = vsel %vm339, %v1050, %v1052
        %1069 = vrot.lane.b32.xlu0 %v849, 110
        %v1070 = vpop.permute.xlu0 %1069
        %1071 = vrot.lane.b32.xlu0 %v850, 110
        %v1072 = vpop.permute.xlu0 %1071
        %1073 = vrot.lane.b32.xlu0 %v851, 110
        %v1074 = vpop.permute.xlu0 %1073
        %1075 = vrot.lane.b32.xlu0 %v852, 110
        %v1076 = vpop.permute.xlu0 %1075
        %1077 = vrot.lane.b32.xlu0 %v853, 110
        %v1078 = vpop.permute.xlu0 %1077
        %1079 = vrot.lane.b32.xlu0 %v854, 110
        %v1080 = vpop.permute.xlu0 %1079
        %1081 = vrot.lane.b32.xlu0 %v855, 110
        %v1082 = vpop.permute.xlu0 %1081
        %1083 = vrot.lane.b32.xlu0 %v856, 110
        %v1084 = vpop.permute.xlu0 %1083
        %1085 = vrot.lane.b32.xlu0 %v857, 110
        %v1086 = vpop.permute.xlu0 %1085
        %1087 = vrot.lane.b32.xlu0 %v858, 110
        %v1088 = vpop.permute.xlu0 %1087
        %1089 = vrot.lane.b32.xlu0 %v859, 110
        %v1090 = vpop.permute.xlu0 %1089
        %1091 = vrot.lane.b32.xlu0 %v860, 110
        %v1092 = vpop.permute.xlu0 %1091
        %v1093 = vsel %vm551, %v1070, %v1072
        %v1094 = vsel %vm551, %v1072, %v1074
        %v1095 = vsel %vm551, %v1076, %v1078
        %v1096 = vsel %vm551, %v1078, %v1080
        %v1097 = vsel %vm551, %v1082, %v1084
        %v1098 = vsel %vm551, %v1084, %v1086
        %v1099 = vsel %vm551, %v1088, %v1090
        %v1100 = vsel %vm551, %v1090, %v1092
        %1113 = vrot.lane.b32.xlu0 %v861, 96
        %v1114 = vpop.permute.xlu0 %1113
        %1115 = vrot.lane.b32.xlu0 %v862, 96
        %v1116 = vpop.permute.xlu0 %1115
        %1117 = vrot.lane.b32.xlu0 %v863, 96
        %v1118 = vpop.permute.xlu0 %1117
        %1119 = vrot.lane.b32.xlu0 %v864, 96
        %v1120 = vpop.permute.xlu0 %1119
        %1121 = vrot.lane.b32.xlu0 %v865, 96
        %v1122 = vpop.permute.xlu0 %1121
        %1123 = vrot.lane.b32.xlu0 %v866, 96
        %v1124 = vpop.permute.xlu0 %1123
        %1125 = vrot.lane.b32.xlu0 %v867, 96
        %v1126 = vpop.permute.xlu0 %1125
        %1127 = vrot.lane.b32.xlu0 %v868, 96
        %v1128 = vpop.permute.xlu0 %1127
        %1129 = vrot.lane.b32.xlu0 %v869, 96
        %v1130 = vpop.permute.xlu0 %1129
        %1131 = vrot.lane.b32.xlu0 %v870, 96
        %v1132 = vpop.permute.xlu0 %1131
        %1133 = vrot.lane.b32.xlu0 %v871, 96
        %v1134 = vpop.permute.xlu0 %1133
        %1135 = vrot.lane.b32.xlu0 %v872, 96
        %v1136 = vpop.permute.xlu0 %1135
        %v1137 = vsel %vm563, %v1114, %v1116
        %v1138 = vsel %vm563, %v1116, %v1118
        %v1139 = vsel %vm563, %v1120, %v1122
        %v1140 = vsel %vm563, %v1122, %v1124
        %v1141 = vsel %vm563, %v1126, %v1128
        %v1142 = vsel %vm563, %v1128, %v1130
        %v1143 = vsel %vm563, %v1132, %v1134
        %v1144 = vsel %vm563, %v1134, %v1136
        %1157 = vrot.lane.b32.xlu0 %v873, 95
        %v1158 = vpop.permute.xlu0 %1157
        %1159 = vrot.lane.b32.xlu0 %v874, 95
        %v1160 = vpop.permute.xlu0 %1159
        %1161 = vrot.lane.b32.xlu0 %v875, 95
        %v1162 = vpop.permute.xlu0 %1161
        %1163 = vrot.lane.b32.xlu0 %v876, 95
        %v1164 = vpop.permute.xlu0 %1163
        %1165 = vrot.lane.b32.xlu0 %v877, 95
        %v1166 = vpop.permute.xlu0 %1165
        %1167 = vrot.lane.b32.xlu0 %v878, 95
        %v1168 = vpop.permute.xlu0 %1167
        %1169 = vrot.lane.b32.xlu0 %v879, 95
        %v1170 = vpop.permute.xlu0 %1169
        %1171 = vrot.lane.b32.xlu0 %v880, 95
        %v1172 = vpop.permute.xlu0 %1171
        %1173 = vrot.lane.b32.xlu0 %v881, 95
        %v1174 = vpop.permute.xlu0 %1173
        %1175 = vrot.lane.b32.xlu0 %v882, 95
        %v1176 = vpop.permute.xlu0 %1175
        %1177 = vrot.lane.b32.xlu0 %v883, 95
        %v1178 = vpop.permute.xlu0 %1177
        %1179 = vrot.lane.b32.xlu0 %v884, 95
        %v1180 = vpop.permute.xlu0 %1179
        %v1181 = vsel %vm575, %v1158, %v1160
        %v1182 = vsel %vm575, %v1160, %v1162
        %v1183 = vsel %vm575, %v1164, %v1166
        %v1184 = vsel %vm575, %v1166, %v1168
        %v1185 = vsel %vm575, %v1170, %v1172
        %v1186 = vsel %vm575, %v1172, %v1174
        %v1187 = vsel %vm575, %v1176, %v1178
        %v1188 = vsel %vm575, %v1178, %v1180
        %1201 = vrot.lane.b32.xlu0 %v885, 94
        %v1202 = vpop.permute.xlu0 %1201
        %1203 = vrot.lane.b32.xlu0 %v886, 94
        %v1204 = vpop.permute.xlu0 %1203
        %1205 = vrot.lane.b32.xlu0 %v887, 94
        %v1206 = vpop.permute.xlu0 %1205
        %1207 = vrot.lane.b32.xlu0 %v888, 94
        %v1208 = vpop.permute.xlu0 %1207
        %1209 = vrot.lane.b32.xlu0 %v889, 94
        %v1210 = vpop.permute.xlu0 %1209
        %1211 = vrot.lane.b32.xlu0 %v890, 94
        %v1212 = vpop.permute.xlu0 %1211
        %1213 = vrot.lane.b32.xlu0 %v891, 94
        %v1214 = vpop.permute.xlu0 %1213
        %1215 = vrot.lane.b32.xlu0 %v892, 94
        %v1216 = vpop.permute.xlu0 %1215
        %1217 = vrot.lane.b32.xlu0 %v893, 94
        %v1218 = vpop.permute.xlu0 %1217
        %1219 = vrot.lane.b32.xlu0 %v894, 94
        %v1220 = vpop.permute.xlu0 %1219
        %1221 = vrot.lane.b32.xlu0 %v895, 94
        %v1222 = vpop.permute.xlu0 %1221
        %1223 = vrot.lane.b32.xlu0 %v896, 94
        %v1224 = vpop.permute.xlu0 %1223
        %v1225 = vsel %vm587, %v1202, %v1204
        %v1226 = vsel %vm587, %v1204, %v1206
        %v1227 = vsel %vm587, %v1208, %v1210
        %v1228 = vsel %vm587, %v1210, %v1212
        %v1229 = vsel %vm587, %v1214, %v1216
        %v1230 = vsel %vm587, %v1216, %v1218
        %v1231 = vsel %vm587, %v1220, %v1222
        %v1232 = vsel %vm587, %v1222, %v1224
        %v1235 = vcombine.high %v799, %v799
        %1249 = vrot.lane.b32.xlu0 %v801, 17
        %v1250 = vpop.permute.xlu0 %1249
        %1251 = vrot.lane.b32.xlu0 %v802, 17
        %v1252 = vpop.permute.xlu0 %1251
        %1253 = vrot.lane.b32.xlu0 %v803, 17
        %v1254 = vpop.permute.xlu0 %1253
        %1255 = vrot.lane.b32.xlu0 %v804, 17
        %v1256 = vpop.permute.xlu0 %1255
        %1257 = vrot.lane.b32.xlu0 %v805, 17
        %v1258 = vpop.permute.xlu0 %1257
        %1259 = vrot.lane.b32.xlu0 %v806, 17
        %v1260 = vpop.permute.xlu0 %1259
        %1261 = vrot.lane.b32.xlu0 %v807, 17
        %v1262 = vpop.permute.xlu0 %1261
        %1263 = vrot.lane.b32.xlu0 %v808, 17
        %v1264 = vpop.permute.xlu0 %1263
        %1265 = vrot.lane.b32.xlu0 %v809, 17
        %v1266 = vpop.permute.xlu0 %1265
        %1267 = vrot.lane.b32.xlu0 %v810, 17
        %v1268 = vpop.permute.xlu0 %1267
        %1269 = vrot.lane.b32.xlu0 %v811, 17
        %v1270 = vpop.permute.xlu0 %1269
        %1271 = vrot.lane.b32.xlu0 %v812, 17
        %v1272 = vpop.permute.xlu0 %1271
        %1273 = vrot.lane.b32.xlu0 %v933, 17
        %v1274 = vpop.permute.xlu0 %1273
        %1275 = vrot.lane.b32.xlu0 %v934, 17
        %v1276 = vpop.permute.xlu0 %1275
        %1277 = vrot.lane.b32.xlu0 %v914, 17
        %v1278 = vpop.permute.xlu0 %1277
        %1279 = vrot.lane.b32.xlu0 %v935, 17
        %v1280 = vpop.permute.xlu0 %1279
        %1281 = vrot.lane.b32.xlu0 %v936, 17
        %v1282 = vpop.permute.xlu0 %1281
        %1283 = vrot.lane.b32.xlu0 %v920, 17
        %v1284 = vpop.permute.xlu0 %1283
        %1285 = vrot.lane.b32.xlu0 %v937, 17
        %v1286 = vpop.permute.xlu0 %1285
        %1287 = vrot.lane.b32.xlu0 %v938, 17
        %v1288 = vpop.permute.xlu0 %1287
        %1289 = vrot.lane.b32.xlu0 %v926, 17
        %v1290 = vpop.permute.xlu0 %1289
        %1291 = vrot.lane.b32.xlu0 %v939, 17
        %v1292 = vpop.permute.xlu0 %1291
        %1293 = vrot.lane.b32.xlu0 %v940, 17
        %v1294 = vpop.permute.xlu0 %1293
        %1295 = vrot.lane.b32.xlu0 %v932, 17
        %v1296 = vpop.permute.xlu0 %1295
        %1297 = vrot.lane.b32.xlu0 %v977, 17
        %v1298 = vpop.permute.xlu0 %1297
        %1299 = vrot.lane.b32.xlu0 %v978, 17
        %v1300 = vpop.permute.xlu0 %1299
        %1301 = vrot.lane.b32.xlu0 %v958, 17
        %v1302 = vpop.permute.xlu0 %1301
        %1303 = vrot.lane.b32.xlu0 %v979, 17
        %v1304 = vpop.permute.xlu0 %1303
        %1305 = vrot.lane.b32.xlu0 %v980, 17
        %v1306 = vpop.permute.xlu0 %1305
        %1307 = vrot.lane.b32.xlu0 %v964, 17
        %v1308 = vpop.permute.xlu0 %1307
        %1309 = vrot.lane.b32.xlu0 %v981, 17
        %v1310 = vpop.permute.xlu0 %1309
        %1311 = vrot.lane.b32.xlu0 %v982, 17
        %v1312 = vpop.permute.xlu0 %1311
        %1313 = vrot.lane.b32.xlu0 %v970, 17
        %v1314 = vpop.permute.xlu0 %1313
        %1315 = vrot.lane.b32.xlu0 %v983, 17
        %v1316 = vpop.permute.xlu0 %1315
        %1317 = vrot.lane.b32.xlu0 %v984, 17
        %v1318 = vpop.permute.xlu0 %1317
        %1319 = vrot.lane.b32.xlu0 %v976, 17
        %v1320 = vpop.permute.xlu0 %1319
        %1321 = vrot.lane.b32.xlu0 %v1021, 17
        %v1322 = vpop.permute.xlu0 %1321
        %1323 = vrot.lane.b32.xlu0 %v1022, 17
        %v1324 = vpop.permute.xlu0 %1323
        %1325 = vrot.lane.b32.xlu0 %v1002, 17
        %v1326 = vpop.permute.xlu0 %1325
        %1327 = vrot.lane.b32.xlu0 %v1023, 17
        %v1328 = vpop.permute.xlu0 %1327
        %1329 = vrot.lane.b32.xlu0 %v1024, 17
        %v1330 = vpop.permute.xlu0 %1329
        %1331 = vrot.lane.b32.xlu0 %v1008, 17
        %v1332 = vpop.permute.xlu0 %1331
        %1333 = vrot.lane.b32.xlu0 %v1025, 17
        %v1334 = vpop.permute.xlu0 %1333
        %1335 = vrot.lane.b32.xlu0 %v1026, 17
        %v1336 = vpop.permute.xlu0 %1335
        %1337 = vrot.lane.b32.xlu0 %v1014, 17
        %v1338 = vpop.permute.xlu0 %1337
        %1339 = vrot.lane.b32.xlu0 %v1027, 17
        %v1340 = vpop.permute.xlu0 %1339
        %1341 = vrot.lane.b32.xlu0 %v1028, 17
        %v1342 = vpop.permute.xlu0 %1341
        %1343 = vrot.lane.b32.xlu0 %v1020, 17
        %v1344 = vpop.permute.xlu0 %1343
        %1345 = vrot.lane.b32.xlu0 %v1038, 17
        %v1346 = vpop.permute.xlu0 %1345
        %1347 = vrot.lane.b32.xlu0 %v1053, 17
        %v1348 = vpop.permute.xlu0 %1347
        %1349 = vrot.lane.b32.xlu0 %v1040, 17
        %v1350 = vpop.permute.xlu0 %1349
        %1351 = vrot.lane.b32.xlu0 %v1042, 17
        %v1352 = vpop.permute.xlu0 %1351
        %1353 = vrot.lane.b32.xlu0 %v1054, 17
        %v1354 = vpop.permute.xlu0 %1353
        %1355 = vrot.lane.b32.xlu0 %v1044, 17
        %v1356 = vpop.permute.xlu0 %1355
        %1357 = vrot.lane.b32.xlu0 %v1046, 17
        %v1358 = vpop.permute.xlu0 %1357
        %1359 = vrot.lane.b32.xlu0 %v1055, 17
        %v1360 = vpop.permute.xlu0 %1359
        %1361 = vrot.lane.b32.xlu0 %v1048, 17
        %v1362 = vpop.permute.xlu0 %1361
        %1363 = vrot.lane.b32.xlu0 %v1050, 17
        %v1364 = vpop.permute.xlu0 %1363
        %1365 = vrot.lane.b32.xlu0 %v1056, 17
        %v1366 = vpop.permute.xlu0 %1365
        %1367 = vrot.lane.b32.xlu0 %v1052, 17
        %v1368 = vpop.permute.xlu0 %1367
        %1369 = vrot.lane.b32.xlu0 %v1070, 17
        %v1370 = vpop.permute.xlu0 %1369
        %1371 = vrot.lane.b32.xlu0 %v1093, 17
        %v1372 = vpop.permute.xlu0 %1371
        %1373 = vrot.lane.b32.xlu0 %v1094, 17
        %v1374 = vpop.permute.xlu0 %1373
        %1375 = vrot.lane.b32.xlu0 %v1076, 17
        %v1376 = vpop.permute.xlu0 %1375
        %1377 = vrot.lane.b32.xlu0 %v1095, 17
        %v1378 = vpop.permute.xlu0 %1377
        %1379 = vrot.lane.b32.xlu0 %v1096, 17
        %v1380 = vpop.permute.xlu0 %1379
        %1381 = vrot.lane.b32.xlu0 %v1082, 17
        %v1382 = vpop.permute.xlu0 %1381
        %1383 = vrot.lane.b32.xlu0 %v1097, 17
        %v1384 = vpop.permute.xlu0 %1383
        %1385 = vrot.lane.b32.xlu0 %v1098, 17
        %v1386 = vpop.permute.xlu0 %1385
        %1387 = vrot.lane.b32.xlu0 %v1088, 17
        %v1388 = vpop.permute.xlu0 %1387
        %1389 = vrot.lane.b32.xlu0 %v1099, 17
        %v1390 = vpop.permute.xlu0 %1389
        %1391 = vrot.lane.b32.xlu0 %v1100, 17
        %v1392 = vpop.permute.xlu0 %1391
        %1393 = vrot.lane.b32.xlu0 %v1114, 17
        %v1394 = vpop.permute.xlu0 %1393
        %1395 = vrot.lane.b32.xlu0 %v1137, 17
        %v1396 = vpop.permute.xlu0 %1395
        %1397 = vrot.lane.b32.xlu0 %v1138, 17
        %v1398 = vpop.permute.xlu0 %1397
        %1399 = vrot.lane.b32.xlu0 %v1120, 17
        %v1400 = vpop.permute.xlu0 %1399
        %1401 = vrot.lane.b32.xlu0 %v1139, 17
        %v1402 = vpop.permute.xlu0 %1401
        %1403 = vrot.lane.b32.xlu0 %v1140, 17
        %v1404 = vpop.permute.xlu0 %1403
        %1405 = vrot.lane.b32.xlu0 %v1126, 17
        %v1406 = vpop.permute.xlu0 %1405
        %1407 = vrot.lane.b32.xlu0 %v1141, 17
        %v1408 = vpop.permute.xlu0 %1407
        %1409 = vrot.lane.b32.xlu0 %v1142, 17
        %v1410 = vpop.permute.xlu0 %1409
        %1411 = vrot.lane.b32.xlu0 %v1132, 17
        %v1412 = vpop.permute.xlu0 %1411
        %1413 = vrot.lane.b32.xlu0 %v1143, 17
        %v1414 = vpop.permute.xlu0 %1413
        %1415 = vrot.lane.b32.xlu0 %v1144, 17
        %v1416 = vpop.permute.xlu0 %1415
        %1417 = vrot.lane.b32.xlu0 %v1158, 17
        %v1418 = vpop.permute.xlu0 %1417
        %1419 = vrot.lane.b32.xlu0 %v1181, 17
        %v1420 = vpop.permute.xlu0 %1419
        %1421 = vrot.lane.b32.xlu0 %v1182, 17
        %v1422 = vpop.permute.xlu0 %1421
        %1423 = vrot.lane.b32.xlu0 %v1164, 17
        %v1424 = vpop.permute.xlu0 %1423
        %1425 = vrot.lane.b32.xlu0 %v1183, 17
        %v1426 = vpop.permute.xlu0 %1425
        %1427 = vrot.lane.b32.xlu0 %v1184, 17
        %v1428 = vpop.permute.xlu0 %1427
        %1429 = vrot.lane.b32.xlu0 %v1170, 17
        %v1430 = vpop.permute.xlu0 %1429
        %1431 = vrot.lane.b32.xlu0 %v1185, 17
        %v1432 = vpop.permute.xlu0 %1431
        %1433 = vrot.lane.b32.xlu0 %v1186, 17
        %v1434 = vpop.permute.xlu0 %1433
        %1435 = vrot.lane.b32.xlu0 %v1176, 17
        %v1436 = vpop.permute.xlu0 %1435
        %1437 = vrot.lane.b32.xlu0 %v1187, 17
        %v1438 = vpop.permute.xlu0 %1437
        %1439 = vrot.lane.b32.xlu0 %v1188, 17
        %v1440 = vpop.permute.xlu0 %1439
        %1441 = vrot.lane.b32.xlu0 %v1202, 17
        %v1442 = vpop.permute.xlu0 %1441
        %1443 = vrot.lane.b32.xlu0 %v1225, 17
        %v1444 = vpop.permute.xlu0 %1443
        %1445 = vrot.lane.b32.xlu0 %v1226, 17
        %v1446 = vpop.permute.xlu0 %1445
        %1447 = vrot.lane.b32.xlu0 %v1208, 17
        %v1448 = vpop.permute.xlu0 %1447
        %1449 = vrot.lane.b32.xlu0 %v1227, 17
        %v1450 = vpop.permute.xlu0 %1449
        %1451 = vrot.lane.b32.xlu0 %v1228, 17
        %v1452 = vpop.permute.xlu0 %1451
        %1453 = vrot.lane.b32.xlu0 %v1214, 17
        %v1454 = vpop.permute.xlu0 %1453
        %1455 = vrot.lane.b32.xlu0 %v1229, 17
        %v1456 = vpop.permute.xlu0 %1455
        %1457 = vrot.lane.b32.xlu0 %v1230, 17
        %v1458 = vpop.permute.xlu0 %1457
        %1459 = vrot.lane.b32.xlu0 %v1220, 17
        %v1460 = vpop.permute.xlu0 %1459
        %1461 = vrot.lane.b32.xlu0 %v1231, 17
        %v1462 = vpop.permute.xlu0 %1461
        %1463 = vrot.lane.b32.xlu0 %v1232, 17
        %v1464 = vpop.permute.xlu0 %1463
        %v1465 = vsel %vm493, %v1250, %v1252
        %v1466 = vsel %vm493, %v1252, %v1254
        %v1467 = vsel %vm493, %v1256, %v1258
        %v1468 = vsel %vm493, %v1258, %v1260
        %v1469 = vsel %vm493, %v1262, %v1264
        %v1470 = vsel %vm493, %v1264, %v1266
        %v1471 = vsel %vm493, %v1268, %v1270
        %v1472 = vsel %vm493, %v1270, %v1272
        %v1473 = vsel %vm493, %v1274, %v1276
        %v1474 = vsel %vm493, %v1276, %v1278
        %v1475 = vsel %vm493, %v1280, %v1282
        %v1476 = vsel %vm493, %v1282, %v1284
        %v1477 = vsel %vm493, %v1286, %v1288
        %v1478 = vsel %vm493, %v1288, %v1290
        %v1479 = vsel %vm493, %v1292, %v1294
        %v1480 = vsel %vm493, %v1294, %v1296
        %v1481 = vsel %vm493, %v1298, %v1300
        %v1482 = vsel %vm493, %v1300, %v1302
        %v1483 = vsel %vm493, %v1304, %v1306
        %v1484 = vsel %vm493, %v1306, %v1308
        %v1485 = vsel %vm493, %v1310, %v1312
        %v1486 = vsel %vm493, %v1312, %v1314
        %v1487 = vsel %vm493, %v1316, %v1318
        %v1488 = vsel %vm493, %v1318, %v1320
        %v1489 = vsel %vm493, %v1322, %v1324
        %v1490 = vsel %vm493, %v1324, %v1326
        %v1491 = vsel %vm493, %v1328, %v1330
        %v1492 = vsel %vm493, %v1330, %v1332
        %v1493 = vsel %vm493, %v1334, %v1336
        %v1494 = vsel %vm493, %v1336, %v1338
        %v1495 = vsel %vm493, %v1340, %v1342
        %v1496 = vsel %vm493, %v1342, %v1344
        %v1497 = vsel %vm493, %v1346, %v1348
        %v1498 = vsel %vm493, %v1348, %v1350
        %v1499 = vsel %vm493, %v1352, %v1354
        %v1500 = vsel %vm493, %v1354, %v1356
        %v1501 = vsel %vm493, %v1358, %v1360
        %v1502 = vsel %vm493, %v1360, %v1362
        %v1503 = vsel %vm493, %v1364, %v1366
        %v1504 = vsel %vm493, %v1366, %v1368
        %v1505 = vsel %vm493, %v1370, %v1372
        %v1506 = vsel %vm493, %v1372, %v1374
        %v1507 = vsel %vm493, %v1376, %v1378
        %v1508 = vsel %vm493, %v1378, %v1380
        %v1509 = vsel %vm493, %v1382, %v1384
        %v1510 = vsel %vm493, %v1384, %v1386
        %v1511 = vsel %vm493, %v1388, %v1390
        %v1512 = vsel %vm493, %v1390, %v1392
        %v1513 = vsel %vm493, %v1394, %v1396
        %v1514 = vsel %vm493, %v1396, %v1398
        %v1515 = vsel %vm493, %v1400, %v1402
        %v1516 = vsel %vm493, %v1402, %v1404
        %v1517 = vsel %vm493, %v1406, %v1408
        %v1518 = vsel %vm493, %v1408, %v1410
        %v1519 = vsel %vm493, %v1412, %v1414
        %v1520 = vsel %vm493, %v1414, %v1416
        %v1521 = vsel %vm493, %v1418, %v1420
        %v1522 = vsel %vm493, %v1420, %v1422
        %v1523 = vsel %vm493, %v1424, %v1426
        %v1524 = vsel %vm493, %v1426, %v1428
        %v1525 = vsel %vm493, %v1430, %v1432
        %v1526 = vsel %vm493, %v1432, %v1434
        %v1527 = vsel %vm493, %v1436, %v1438
        %v1528 = vsel %vm493, %v1438, %v1440
        %v1529 = vsel %vm493, %v1442, %v1444
        %v1530 = vsel %vm493, %v1444, %v1446
        %v1531 = vsel %vm493, %v1448, %v1450
        %v1532 = vsel %vm493, %v1450, %v1452
        %v1533 = vsel %vm493, %v1454, %v1456
        %v1534 = vsel %vm493, %v1456, %v1458
        %v1535 = vsel %vm493, %v1460, %v1462
        %v1536 = vsel %vm493, %v1462, %v1464
        %vm1609 = vcmask 269312
        %v1610 = vsel %vm1609, %v800, 0
        %1612 = vmatprep.subr.mxu0 %v1496
        %1613 = vmatpush1.msra.mxu0 %v1495
        %1614 = vmatprep.subr.mxu0 %v1494
        %1615 = vmatpush1.msra.mxu0 %v1493
        %1616 = vmatprep.subr.mxu0 %v1492
        %1617 = vmatpush1.msra.mxu0 %v1491
        %1618 = vmatprep.subr.mxu0 %v1490
        %1619 = vmatpush1.msra.mxu0 %v1489
        %1620 = vmatprep.subr.mxu0 %v1488
        %1621 = vmatpush1.msra.mxu0 %v1487
        %1622 = vmatprep.subr.mxu0 %v1486
        %1623 = vmatpush1.msra.mxu0 %v1485
        %1624 = vmatprep.subr.mxu0 %v1484
        %1625 = vmatpush1.msra.mxu0 %v1483
        %1626 = vmatprep.subr.mxu0 %v1482
        %1627 = vmatpush1.msra.mxu0 %v1481
        %1628 = vmatprep.subr.mxu0 %v1480
        %1629 = vmatpush1.msra.mxu0 %v1479
        %1630 = vmatprep.subr.mxu0 %v1478
        %1631 = vmatpush1.msra.mxu0 %v1477
        %1632 = vmatprep.subr.mxu0 %v1476
        %1633 = vmatpush1.msra.mxu0 %v1475
        %1634 = vmatprep.subr.mxu0 %v1474
        %1635 = vmatpush1.msra.mxu0 %v1473
        %1636 = vmatprep.subr.mxu0 %v1472
        %1637 = vmatpush1.msra.mxu0 %v1471
        %1638 = vmatprep.subr.mxu0 %v1470
        %1639 = vmatpush1.msra.mxu0 %v1469
        %1640 = vmatprep.subr.mxu0 %v1468
        %1641 = vmatpush1.msra.mxu0 %v1467
        %1642 = vmatprep.subr.mxu0 %v1466
        %1643 = vmatpush1.msra.mxu0 %v1465
        %1644 = vmatprep.subr.mxu0 %v1528
        %1645 = vmatpush2.msra.mxu0 %v1527
        %1646 = vmatprep.subr.mxu0 %v1526
        %1647 = vmatpush2.msra.mxu0 %v1525
        %1648 = vmatprep.subr.mxu0 %v1524
        %1649 = vmatpush2.msra.mxu0 %v1523
        %1650 = vmatprep.subr.mxu0 %v1522
        %1651 = vmatpush2.msra.mxu0 %v1521
        %1652 = vmatprep.subr.mxu0 %v1520
        %1653 = vmatpush2.msra.mxu0 %v1519
        %1654 = vmatprep.subr.mxu0 %v1518
        %1655 = vmatpush2.msra.mxu0 %v1517
        %1656 = vmatprep.subr.mxu0 %v1516
        %1657 = vmatpush2.msra.mxu0 %v1515
        %1658 = vmatprep.subr.mxu0 %v1514
        %1659 = vmatpush2.msra.mxu0 %v1513
        %1660 = vmatprep.subr.mxu0 %v1512
        %1661 = vmatpush2.msra.mxu0 %v1511
        %1662 = vmatprep.subr.mxu0 %v1510
        %1663 = vmatpush2.msra.mxu0 %v1509
        %1664 = vmatprep.subr.mxu0 %v1508
        %1665 = vmatpush2.msra.mxu0 %v1507
        %1666 = vmatprep.subr.mxu0 %v1506
        %1667 = vmatpush2.msra.mxu0 %v1505
        %1668 = vmatprep.subr.mxu0 %v1504
        %1669 = vmatpush2.msra.mxu0 %v1503
        %1670 = vmatprep.subr.mxu0 %v1502
        %1671 = vmatpush2.msra.mxu0 %v1501
        %1672 = vmatprep.subr.mxu0 %v1500
        %1673 = vmatpush2.msra.mxu0 %v1499
        %1674 = vmatprep.subr.mxu0 %v1498
        %1675 = vmatpush2.msra.mxu0 %v1497
        %1676 = vmatprep.mubr.f32.mxu0 %v1235
        %1677 = vmatmul.mubr.f32.gmra.mxu0 %v799
        %v1678 = vpop.f32.mrf.mxu0
        %v1679 = vadd.f32 0.0, %v1678
        %v1680 = vpop.f32.mrf.mxu0
        %v1681 = vadd.f32 0.0, %v1680
        %1682 = vdwg.mxu0
        %1683 = vmatprep.subr.mxu0 0.0
        %1684 = vmatpush1.msra.mxu0 0.0
        %1685 = vmatprep.subr.mxu0 0.0
        %1686 = vmatpush1.msra.mxu0 0.0
        %1687 = vmatprep.subr.mxu0 0.0
        %1688 = vmatpush1.msra.mxu0 0.0
        %1689 = vmatprep.subr.mxu0 0.0
        %1690 = vmatpush1.msra.mxu0 0.0
        %1691 = vmatprep.subr.mxu0 0.0
        %1692 = vmatpush1.msra.mxu0 0.0
        %1693 = vmatprep.subr.mxu0 0.0
        %1694 = vmatpush1.msra.mxu0 0.0
        %1695 = vmatprep.subr.mxu0 0.0
        %1696 = vmatpush1.msra.mxu0 0.0
        %1697 = vmatprep.subr.mxu0 0.0
        %1698 = vmatpush1.msra.mxu0 0.0
        %1699 = vmatprep.subr.mxu0 0.0
        %1700 = vmatpush1.msra.mxu0 0.0
        %1701 = vmatprep.subr.mxu0 0.0
        %1702 = vmatpush1.msra.mxu0 0.0
        %1703 = vmatprep.subr.mxu0 0.0
        %1704 = vmatpush1.msra.mxu0 0.0
        %1705 = vmatprep.subr.mxu0 %v700
        %1706 = vmatpush1.msra.mxu0 %v700
        %1707 = vmatprep.subr.mxu0 %v1536
        %1708 = vmatpush1.msra.mxu0 %v1535
        %1709 = vmatprep.subr.mxu0 %v1534
        %1710 = vmatpush1.msra.mxu0 %v1533
        %1711 = vmatprep.subr.mxu0 %v1532
        %1712 = vmatpush1.msra.mxu0 %v1531
        %1713 = vmatprep.subr.mxu0 %v1530
        %1714 = vmatpush1.msra.mxu0 %v1529
        %1715 = vmatprep.subr.mxu0 0.0
        %1716 = vmatpush2.msra.mxu0 0.0
        %1717 = vmatprep.subr.mxu0 0.0
        %1718 = vmatpush2.msra.mxu0 0.0
        %1719 = vmatprep.subr.mxu0 0.0
        %1720 = vmatpush2.msra.mxu0 0.0
        %1721 = vmatprep.subr.mxu0 0.0
        %1722 = vmatpush2.msra.mxu0 0.0
        %1723 = vmatprep.subr.mxu0 0.0
        %1724 = vmatpush2.msra.mxu0 0.0
        %1725 = vmatprep.subr.mxu0 0.0
        %1726 = vmatpush2.msra.mxu0 0.0
        %1727 = vmatprep.subr.mxu0 0.0
        %1728 = vmatpush2.msra.mxu0 0.0
        %1729 = vmatprep.subr.mxu0 0.0
        %1730 = vmatpush2.msra.mxu0 0.0
        %1731 = vmatprep.subr.mxu0 0.0
        %1732 = vmatpush2.msra.mxu0 0.0
        %1733 = vmatprep.subr.mxu0 0.0
        %1734 = vmatpush2.msra.mxu0 0.0
        %1735 = vmatprep.subr.mxu0 0.0
        %1736 = vmatpush2.msra.mxu0 0.0
        %1737 = vmatprep.subr.mxu0 0.0
        %1738 = vmatpush2.msra.mxu0 0.0
        %1739 = vmatprep.subr.mxu0 0.0
        %1740 = vmatpush2.msra.mxu0 0.0
        %1741 = vmatprep.subr.mxu0 0.0
        %1742 = vmatpush2.msra.mxu0 0.0
        %1743 = vmatprep.subr.mxu0 0.0
        %1744 = vmatpush2.msra.mxu0 0.0
        %1745 = vmatprep.subr.mxu0 0.0
        %1746 = vmatpush2.msra.mxu0 0.0
        %1747 = vmatprep.mubr.f32.mxu0 0.0
        %1748 = vmatmul.mubr.f32.gmra.mxu0 %v1610
        %v1749 = vpop.f32.mrf.mxu0
        %v1750 = vadd.f32 %v1679, %v1749
        %v1751 = vpop.f32.mrf.mxu0
        %v1752 = vadd.f32 %v1681, %v1751
        %1753 = vdwg.mxu0
        %v1754 = vld [vmem:[%s4] sm:$0xff]
        %v1755 = vld [vmem:[%s4 + $0x8] sm:$0xff]
        %v1756 = vld [vmem:[%s4 + $0x10] sm:$0xff]
        %v1757 = vld [vmem:[%s4 + $0x18] sm:$0xff]
        %v1758 = vld [vmem:[%s5] sm:$0xff]
        %v1759 = vld [vmem:[%s5 + $0x8] sm:$0xff]
        %v1760 = vld [vmem:[%s5 + $0x10] sm:$0xf]
        %v1761 = vld [vmem:[%s5 + $0x14] sm:$0xff]
        %v1762 = vld [vmem:[%s5 + $0x1c] sm:$0xff]
        %v1763 = vld [vmem:[%s5 + $0x24] sm:$0xf]
        %v1764 = vld [vmem:[%s5 + $0x28] sm:$0xff]
        %v1765 = vld [vmem:[%s5 + $0x30] sm:$0xff]
        %v1766 = vld [vmem:[%s5 + $0x38] sm:$0xf]
        %v1767 = vld [vmem:[%s5 + $0x3c] sm:$0xff]
        %v1768 = vld [vmem:[%s5 + $0x44] sm:$0xff]
        %v1769 = vld [vmem:[%s5 + $0x4c] sm:$0xf]
        %v1770 = vld [vmem:[%s5 + $0x50] sm:$0xff]
        %v1771 = vld [vmem:[%s5 + $0x58] sm:$0xff]
        %v1772 = vld [vmem:[%s5 + $0x60] sm:$0xf]
        %v1773 = vld [vmem:[%s5 + $0x64] sm:$0xff]
        %v1774 = vld [vmem:[%s5 + $0x6c] sm:$0xff]
        %v1775 = vld [vmem:[%s5 + $0x74] sm:$0xf]
        %v1776 = vld [vmem:[%s5 + $0x78] sm:$0xff]
        %v1777 = vld [vmem:[%s5 + $0x80] sm:$0xff]
        %v1778 = vld [vmem:[%s5 + $0x88] sm:$0xf]
        %v1779 = vld [vmem:[%s5 + $0x8c] sm:$0xff]
        %v1780 = vld [vmem:[%s5 + $0x94] sm:$0xff]
        %v1781 = vld [vmem:[%s5 + $0x9c] sm:$0xf]
        %v1782 = vld [vmem:[%s5 + $0xa0] sm:$0xff]
        %v1783 = vld [vmem:[%s5 + $0xa8] sm:$0xff]
        %v1784 = vld [vmem:[%s5 + $0xb0] sm:$0xf]
        %v1785 = vld [vmem:[%s5 + $0xb4] sm:$0xff]
        %v1786 = vld [vmem:[%s5 + $0xbc] sm:$0xff]
        %v1787 = vld [vmem:[%s5 + $0xc4] sm:$0xf]
        %v1788 = vld [vmem:[%s5 + $0xc8] sm:$0xff]
        %v1789 = vld [vmem:[%s5 + $0xd0] sm:$0xff]
        %v1790 = vld [vmem:[%s5 + $0xd8] sm:$0xf]
        %v1791 = vld [vmem:[%s5 + $0xdc] sm:$0xff]
        %v1792 = vld [vmem:[%s5 + $0xe4] sm:$0xff]
        %v1793 = vld [vmem:[%s5 + $0xec] sm:$0xf]
        %v1794 = vld [vmem:[%s5 + $0xf0] sm:$0xff]
        %v1795 = vld [vmem:[%s5 + $0xf8] sm:$0xff]
        %v1796 = vld [vmem:[%s5 + $0x100] sm:$0xf]
        %v1797 = vld [vmem:[%s5 + $0x104] sm:$0xff]
        %v1798 = vld [vmem:[%s5 + $0x10c] sm:$0xff]
        %v1799 = vld [vmem:[%s5 + $0x114] sm:$0xf]
        %v1800 = vld [vmem:[%s5 + $0x118] sm:$0xff]
        %v1801 = vld [vmem:[%s5 + $0x120] sm:$0xff]
        %v1802 = vld [vmem:[%s5 + $0x128] sm:$0xf]
        %v1803 = vld [vmem:[%s5 + $0x12c] sm:$0xff]
        %v1804 = vld [vmem:[%s5 + $0x134] sm:$0xff]
        %v1805 = vld [vmem:[%s5 + $0x13c] sm:$0xf]
        %v1806 = vld [vmem:[%s5 + $0x140] sm:$0xff]
        %v1807 = vld [vmem:[%s5 + $0x148] sm:$0xff]
        %v1808 = vld [vmem:[%s5 + $0x150] sm:$0xf]
        %v1809 = vld [vmem:[%s5 + $0x154] sm:$0xff]
        %v1810 = vld [vmem:[%s5 + $0x15c] sm:$0xff]
        %v1811 = vld [vmem:[%s5 + $0x164] sm:$0xf]
        %v1812 = vld [vmem:[%s5 + $0x168] sm:$0xff]
        %v1813 = vld [vmem:[%s5 + $0x170] sm:$0xff]
        %v1814 = vld [vmem:[%s5 + $0x178] sm:$0xf]
        %v1815 = vld [vmem:[%s5 + $0x17c] sm:$0xff]
        %v1816 = vld [vmem:[%s5 + $0x184] sm:$0xff]
        %v1817 = vld [vmem:[%s5 + $0x18c] sm:$0xf]
        %v1818 = vld [vmem:[%s5 + $0x190] sm:$0xff]
        %v1819 = vld [vmem:[%s5 + $0x198] sm:$0xff]
        %v1820 = vld [vmem:[%s5 + $0x1a0] sm:$0xf]
        %v1821 = vld [vmem:[%s5 + $0x1a4] sm:$0xff]
        %v1822 = vld [vmem:[%s5 + $0x1ac] sm:$0xff]
        %v1823 = vld [vmem:[%s5 + $0x1b4] sm:$0xf]
        %v1824 = vld [vmem:[%s5 + $0x1b8] sm:$0xff]
        %v1825 = vld [vmem:[%s5 + $0x1c0] sm:$0xff]
        %v1826 = vld [vmem:[%s5 + $0x1c8] sm:$0xf]
        %v1827 = vld [vmem:[%s5 + $0x1cc] sm:$0xff]
        %v1828 = vld [vmem:[%s5 + $0x1d4] sm:$0xff]
        %v1829 = vld [vmem:[%s5 + $0x1dc] sm:$0xf]
        %v1830 = vld [vmem:[%s5 + $0x1e0] sm:$0xff]
        %v1831 = vld [vmem:[%s5 + $0x1e8] sm:$0xff]
        %v1832 = vld [vmem:[%s5 + $0x1f0] sm:$0xf]
        %v1833 = vld [vmem:[%s5 + $0x1f4] sm:$0xff]
        %v1834 = vld [vmem:[%s5 + $0x1fc] sm:$0xff]
        %v1835 = vld [vmem:[%s5 + $0x204] sm:$0xf]
        %v1836 = vld [vmem:[%s5 + $0x208] sm:$0xff]
        %v1837 = vld [vmem:[%s5 + $0x210] sm:$0xff]
        %v1838 = vld [vmem:[%s5 + $0x218] sm:$0xf]
        %v1839 = vld [vmem:[%s5 + $0x21c] sm:$0xff]
        %v1840 = vld [vmem:[%s5 + $0x224] sm:$0xff]
        %v1841 = vld [vmem:[%s5 + $0x22c] sm:$0xf]
        %v1842 = vld [vmem:[%s5 + $0x230] sm:$0xff]
        %v1843 = vld [vmem:[%s5 + $0x238] sm:$0xff]
        %v1844 = vld [vmem:[%s5 + $0x240] sm:$0xf]
        %v1845 = vld [vmem:[%s5 + $0x244] sm:$0xff]
        %v1846 = vld [vmem:[%s5 + $0x24c] sm:$0xff]
        %v1847 = vld [vmem:[%s5 + $0x254] sm:$0xf]
        %v1848 = vld [vmem:[%s5 + $0x258] sm:$0xff]
        %v1849 = vld [vmem:[%s5 + $0x260] sm:$0xff]
        %v1850 = vld [vmem:[%s5 + $0x268] sm:$0xf]
        %v1851 = vld [vmem:[%s5 + $0x26c] sm:$0xff]
        %v1852 = vld [vmem:[%s5 + $0x274] sm:$0xff]
        %v1853 = vld [vmem:[%s5 + $0x27c] sm:$0xf]
        %v1854 = vld [vmem:[%s311] sm:$0xff]
        %v1855 = vld [vmem:[%s311 + $0x8] sm:$0xff]
        %v1856 = vld [vmem:[%s311 + $0x10] sm:$0xff]
        %v1857 = vld [vmem:[%s311 + $0x18] sm:$0xff]
        %v1858 = vld [vmem:[%s311 + $0x20] sm:$0xff]
        %v1859 = vld [vmem:[%s311 + $0x28] sm:$0xff]
        %v1860 = vld [vmem:[%s311 + $0x30] sm:$0xff]
        %v1861 = vld [vmem:[%s311 + $0x38] sm:$0xff]
        %v1862 = vld [vmem:[%s311 + $0x40] sm:$0xff]
        %v1863 = vld [vmem:[%s311 + $0x48] sm:$0xff]
        %v1864 = vld [vmem:[%s311 + $0x50] sm:$0xff]
        %v1865 = vld [vmem:[%s311 + $0x58] sm:$0xff]
        %v1866 = vld [vmem:[%s311 + $0x60] sm:$0xff]
        %v1867 = vld [vmem:[%s311 + $0x68] sm:$0xff]
        %v1868 = vld [vmem:[%s311 + $0x70] sm:$0xff]
        %v1869 = vpack.c.bf16 %v1855, %v1854
        %v1870 = vpack.c.bf16 %v1857, %v1856
        %v1871 = vpack.c.bf16 %v1859, %v1858
        %v1872 = vpack.c.bf16 %v1861, %v1860
        %v1873 = vpack.c.bf16 %v1863, %v1862
        %v1874 = vpack.c.bf16 %v1865, %v1864
        %v1875 = vpack.c.bf16 %v1867, %v1866
        %v1876 = vpack.c.bf16 %v1868, %v1868
        %v1877 = vlaneseq
        %v1878 = vshrl.u32 %v1877, 7
        %v1879 = vsub.s32 0, %v1878
        %v1880 = vrot.slane %v1750, %v1879
        %v1881 = vlaneseq
        %v1882 = vshrl.u32 %v1881, 7
        %v1883 = vsub.s32 0, %v1882
        %v1884 = vrot.slane %v1752, %v1883
        %v1885 = vmul.f32 %v1754, %v1880
        %v1886 = vmul.f32 %v1755, %v1884
        %v1887 = vmul.f32 %v1756, %v1880
        %v1888 = vmul.f32 %v1757, %v1884
        %v1889 = vpack.c.bf16 %v1887, %v1885
        %v1890 = vpack.c.bf16 %v1888, %v1886
        %v1987 = vunpack.c.l.b16 %v1758
        %v1988 = vunpack.c.h.b16 %v1758
        %v1989 = vunpack.c.l.b16 %v1759
        %v1990 = vunpack.c.h.b16 %v1759
        %v1991 = vunpack.c.l.b16 %v1760
        %v1992 = vunpack.c.l.b16 %v1761
        %v1993 = vunpack.c.h.b16 %v1761
        %v1994 = vunpack.c.l.b16 %v1762
        %v1995 = vunpack.c.h.b16 %v1762
        %v1996 = vunpack.c.l.b16 %v1763
        %v1997 = vunpack.c.l.b16 %v1764
        %v1998 = vunpack.c.h.b16 %v1764
        %v1999 = vunpack.c.l.b16 %v1765
        %v2000 = vunpack.c.h.b16 %v1765
        %v2001 = vunpack.c.l.b16 %v1766
        %v2002 = vunpack.c.l.b16 %v1767
        %v2003 = vunpack.c.h.b16 %v1767
        %v2004 = vunpack.c.l.b16 %v1768
        %v2005 = vunpack.c.h.b16 %v1768
        %v2006 = vunpack.c.l.b16 %v1769
        %v2007 = vunpack.c.l.b16 %v1770
        %v2008 = vunpack.c.h.b16 %v1770
        %v2009 = vunpack.c.l.b16 %v1771
        %v2010 = vunpack.c.h.b16 %v1771
        %v2011 = vunpack.c.l.b16 %v1772
        %v2012 = vunpack.c.l.b16 %v1773
        %v2013 = vunpack.c.h.b16 %v1773
        %v2014 = vunpack.c.l.b16 %v1774
        %v2015 = vunpack.c.h.b16 %v1774
        %v2016 = vunpack.c.l.b16 %v1775
        %v2017 = vunpack.c.l.b16 %v1776
        %v2018 = vunpack.c.h.b16 %v1776
        %v2019 = vunpack.c.l.b16 %v1777
        %v2020 = vunpack.c.h.b16 %v1777
        %v2021 = vunpack.c.l.b16 %v1778
        %v2022 = vunpack.c.l.b16 %v1779
        %v2023 = vunpack.c.h.b16 %v1779
        %v2024 = vunpack.c.l.b16 %v1780
        %v2025 = vunpack.c.h.b16 %v1780
        %v2026 = vunpack.c.l.b16 %v1781
        %v2027 = vunpack.c.l.b16 %v1782
        %v2028 = vunpack.c.h.b16 %v1782
        %v2029 = vunpack.c.l.b16 %v1783
        %v2030 = vunpack.c.h.b16 %v1783
        %v2031 = vunpack.c.l.b16 %v1784
        %v2032 = vunpack.c.l.b16 %v1785
        %v2033 = vunpack.c.h.b16 %v1785
        %v2034 = vunpack.c.l.b16 %v1786
        %v2035 = vunpack.c.h.b16 %v1786
        %v2036 = vunpack.c.l.b16 %v1787
        %v2037 = vunpack.c.l.b16 %v1788
        %v2038 = vunpack.c.h.b16 %v1788
        %v2039 = vunpack.c.l.b16 %v1789
        %v2040 = vunpack.c.h.b16 %v1789
        %v2041 = vunpack.c.l.b16 %v1790
        %v2042 = vunpack.c.l.b16 %v1791
        %v2043 = vunpack.c.h.b16 %v1791
        %v2044 = vunpack.c.l.b16 %v1792
        %v2045 = vunpack.c.h.b16 %v1792
        %v2046 = vunpack.c.l.b16 %v1793
        %v2047 = vunpack.c.l.b16 %v1794
        %v2048 = vunpack.c.h.b16 %v1794
        %v2049 = vunpack.c.l.b16 %v1795
        %v2050 = vunpack.c.h.b16 %v1795
        %v2051 = vunpack.c.l.b16 %v1796
        %v2052 = vunpack.c.l.b16 %v1797
        %v2053 = vunpack.c.h.b16 %v1797
        %v2054 = vunpack.c.l.b16 %v1798
        %v2055 = vunpack.c.h.b16 %v1798
        %v2056 = vunpack.c.l.b16 %v1799
        %v2057 = vunpack.c.l.b16 %v1800
        %v2058 = vunpack.c.h.b16 %v1800
        %v2059 = vunpack.c.l.b16 %v1801
        %v2060 = vunpack.c.h.b16 %v1801
        %v2061 = vunpack.c.l.b16 %v1802
        %v2062 = vunpack.c.l.b16 %v1803
        %v2063 = vunpack.c.h.b16 %v1803
        %v2064 = vunpack.c.l.b16 %v1804
        %v2065 = vunpack.c.h.b16 %v1804
        %v2066 = vunpack.c.l.b16 %v1805
        %v2067 = vunpack.c.l.b16 %v1806
        %v2068 = vunpack.c.h.b16 %v1806
        %v2069 = vunpack.c.l.b16 %v1807
        %v2070 = vunpack.c.h.b16 %v1807
        %v2071 = vunpack.c.l.b16 %v1808
        %v2072 = vunpack.c.l.b16 %v1809
        %v2073 = vunpack.c.h.b16 %v1809
        %v2074 = vunpack.c.l.b16 %v1810
        %v2075 = vunpack.c.h.b16 %v1810
        %v2076 = vunpack.c.l.b16 %v1811
        %v2077 = vunpack.c.l.b16 %v1812
        %v2078 = vunpack.c.h.b16 %v1812
        %v2079 = vunpack.c.l.b16 %v1813
        %v2080 = vunpack.c.h.b16 %v1813
        %v2081 = vunpack.c.l.b16 %v1814
        %v2082 = vunpack.c.l.b16 %v1815
        %v2083 = vunpack.c.h.b16 %v1815
        %v2084 = vunpack.c.l.b16 %v1816
        %v2085 = vunpack.c.h.b16 %v1816
        %v2086 = vunpack.c.l.b16 %v1817
        %v2087 = vunpack.c.l.b16 %v1818
        %v2088 = vunpack.c.h.b16 %v1818
        %v2089 = vunpack.c.l.b16 %v1819
        %v2090 = vunpack.c.h.b16 %v1819
        %v2091 = vunpack.c.l.b16 %v1820
        %v2092 = vunpack.c.l.b16 %v1821
        %v2093 = vunpack.c.h.b16 %v1821
        %v2094 = vunpack.c.l.b16 %v1822
        %v2095 = vunpack.c.h.b16 %v1822
        %v2096 = vunpack.c.l.b16 %v1823
        %v2097 = vunpack.c.l.b16 %v1824
        %v2098 = vunpack.c.h.b16 %v1824
        %v2099 = vunpack.c.l.b16 %v1825
        %v2100 = vunpack.c.h.b16 %v1825
        %v2101 = vunpack.c.l.b16 %v1826
        %v2102 = vunpack.c.l.b16 %v1827
        %v2103 = vunpack.c.h.b16 %v1827
        %v2104 = vunpack.c.l.b16 %v1828
        %v2105 = vunpack.c.h.b16 %v1828
        %v2106 = vunpack.c.l.b16 %v1829
        %v2107 = vunpack.c.l.b16 %v1830
        %v2108 = vunpack.c.h.b16 %v1830
        %v2109 = vunpack.c.l.b16 %v1831
        %v2110 = vunpack.c.h.b16 %v1831
        %v2111 = vunpack.c.l.b16 %v1832
        %v2112 = vunpack.c.l.b16 %v1833
        %v2113 = vunpack.c.h.b16 %v1833
        %v2114 = vunpack.c.l.b16 %v1834
        %v2115 = vunpack.c.h.b16 %v1834
        %v2116 = vunpack.c.l.b16 %v1835
        %v2117 = vunpack.c.l.b16 %v1836
        %v2118 = vunpack.c.h.b16 %v1836
        %v2119 = vunpack.c.l.b16 %v1837
        %v2120 = vunpack.c.h.b16 %v1837
        %v2121 = vunpack.c.l.b16 %v1838
        %v2122 = vunpack.c.l.b16 %v1839
        %v2123 = vunpack.c.h.b16 %v1839
        %v2124 = vunpack.c.l.b16 %v1840
        %v2125 = vunpack.c.h.b16 %v1840
        %v2126 = vunpack.c.l.b16 %v1841
        %v2127 = vunpack.c.l.b16 %v1842
        %v2128 = vunpack.c.h.b16 %v1842
        %v2129 = vunpack.c.l.b16 %v1843
        %v2130 = vunpack.c.h.b16 %v1843
        %v2131 = vunpack.c.l.b16 %v1844
        %v2132 = vunpack.c.l.b16 %v1845
        %v2133 = vunpack.c.h.b16 %v1845
        %v2134 = vunpack.c.l.b16 %v1846
        %v2135 = vunpack.c.h.b16 %v1846
        %v2136 = vunpack.c.l.b16 %v1847
        %v2137 = vunpack.c.l.b16 %v1848
        %v2138 = vunpack.c.h.b16 %v1848
        %v2139 = vunpack.c.l.b16 %v1849
        %v2140 = vunpack.c.h.b16 %v1849
        %v2141 = vunpack.c.l.b16 %v1850
        %v2142 = vunpack.c.l.b16 %v1851
        %v2143 = vunpack.c.h.b16 %v1851
        %v2144 = vunpack.c.l.b16 %v1852
        %v2145 = vunpack.c.h.b16 %v1852
        %v2146 = vunpack.c.l.b16 %v1853
        %v2147 = vpack.c.b16 %v1992, %v1987
        %v2148 = vpack.c.b16 %v1993, %v1988
        %v2149 = vpack.c.b16 %v1994, %v1989
        %v2150 = vpack.c.b16 %v1995, %v1990
        %v2151 = vpack.c.b16 %v1996, %v1991
        %v2152 = vpack.c.b16 %v2002, %v1997
        %v2153 = vpack.c.b16 %v2003, %v1998
        %v2154 = vpack.c.b16 %v2004, %v1999
        %v2155 = vpack.c.b16 %v2005, %v2000
        %v2156 = vpack.c.b16 %v2006, %v2001
        %v2157 = vpack.c.b16 %v2012, %v2007
        %v2158 = vpack.c.b16 %v2013, %v2008
        %v2159 = vpack.c.b16 %v2014, %v2009
        %v2160 = vpack.c.b16 %v2015, %v2010
        %v2161 = vpack.c.b16 %v2016, %v2011
        %v2162 = vpack.c.b16 %v2022, %v2017
        %v2163 = vpack.c.b16 %v2023, %v2018
        %v2164 = vpack.c.b16 %v2024, %v2019
        %v2165 = vpack.c.b16 %v2025, %v2020
        %v2166 = vpack.c.b16 %v2026, %v2021
        %v2167 = vpack.c.b16 %v2032, %v2027
        %v2168 = vpack.c.b16 %v2033, %v2028
        %v2169 = vpack.c.b16 %v2034, %v2029
        %v2170 = vpack.c.b16 %v2035, %v2030
        %v2171 = vpack.c.b16 %v2036, %v2031
        %v2172 = vpack.c.b16 %v2042, %v2037
        %v2173 = vpack.c.b16 %v2043, %v2038
        %v2174 = vpack.c.b16 %v2044, %v2039
        %v2175 = vpack.c.b16 %v2045, %v2040
        %v2176 = vpack.c.b16 %v2046, %v2041
        %v2177 = vpack.c.b16 %v2052, %v2047
        %v2178 = vpack.c.b16 %v2053, %v2048
        %v2179 = vpack.c.b16 %v2054, %v2049
        %v2180 = vpack.c.b16 %v2055, %v2050
        %v2181 = vpack.c.b16 %v2056, %v2051
        %v2182 = vpack.c.b16 %v2062, %v2057
        %v2183 = vpack.c.b16 %v2063, %v2058
        %v2184 = vpack.c.b16 %v2064, %v2059
        %v2185 = vpack.c.b16 %v2065, %v2060
        %v2186 = vpack.c.b16 %v2066, %v2061
        %v2187 = vpack.c.b16 %v2072, %v2067
        %v2188 = vpack.c.b16 %v2073, %v2068
        %v2189 = vpack.c.b16 %v2074, %v2069
        %v2190 = vpack.c.b16 %v2075, %v2070
        %v2191 = vpack.c.b16 %v2076, %v2071
        %v2192 = vpack.c.b16 %v2082, %v2077
        %v2193 = vpack.c.b16 %v2083, %v2078
        %v2194 = vpack.c.b16 %v2084, %v2079
        %v2195 = vpack.c.b16 %v2085, %v2080
        %v2196 = vpack.c.b16 %v2086, %v2081
        %v2197 = vpack.c.b16 %v2092, %v2087
        %v2198 = vpack.c.b16 %v2093, %v2088
        %v2199 = vpack.c.b16 %v2094, %v2089
        %v2200 = vpack.c.b16 %v2095, %v2090
        %v2201 = vpack.c.b16 %v2096, %v2091
        %v2202 = vpack.c.b16 %v2102, %v2097
        %v2203 = vpack.c.b16 %v2103, %v2098
        %v2204 = vpack.c.b16 %v2104, %v2099
        %v2205 = vpack.c.b16 %v2105, %v2100
        %v2206 = vpack.c.b16 %v2106, %v2101
        %v2207 = vpack.c.b16 %v2112, %v2107
        %v2208 = vpack.c.b16 %v2113, %v2108
        %v2209 = vpack.c.b16 %v2114, %v2109
        %v2210 = vpack.c.b16 %v2115, %v2110
        %v2211 = vpack.c.b16 %v2116, %v2111
        %v2212 = vpack.c.b16 %v2122, %v2117
        %v2213 = vpack.c.b16 %v2123, %v2118
        %v2214 = vpack.c.b16 %v2124, %v2119
        %v2215 = vpack.c.b16 %v2125, %v2120
        %v2216 = vpack.c.b16 %v2126, %v2121
        %v2217 = vpack.c.b16 %v2132, %v2127
        %v2218 = vpack.c.b16 %v2133, %v2128
        %v2219 = vpack.c.b16 %v2134, %v2129
        %v2220 = vpack.c.b16 %v2135, %v2130
        %v2221 = vpack.c.b16 %v2136, %v2131
        %v2222 = vpack.c.b16 %v2142, %v2137
        %v2223 = vpack.c.b16 %v2143, %v2138
        %v2224 = vpack.c.b16 %v2144, %v2139
        %v2225 = vpack.c.b16 %v2145, %v2140
        %v2226 = vpack.c.b16 %v2146, %v2141
        %2307 = vmatprep.subr.bf16.mxu0 %v2183
        %2308 = vmatpush1.bf16.msra.mxu0 %v2182
        %2309 = vmatprep.subr.bf16.mxu0 %v2178
        %2310 = vmatpush1.bf16.msra.mxu0 %v2177
        %2311 = vmatprep.subr.bf16.mxu0 %v2173
        %2312 = vmatpush1.bf16.msra.mxu0 %v2172
        %2313 = vmatprep.subr.bf16.mxu0 %v2168
        %2314 = vmatpush1.bf16.msra.mxu0 %v2167
        %2315 = vmatprep.subr.bf16.mxu0 %v2163
        %2316 = vmatpush1.bf16.msra.mxu0 %v2162
        %2317 = vmatprep.subr.bf16.mxu0 %v2158
        %2318 = vmatpush1.bf16.msra.mxu0 %v2157
        %2319 = vmatprep.subr.bf16.mxu0 %v2153
        %2320 = vmatpush1.bf16.msra.mxu0 %v2152
        %2321 = vmatprep.subr.bf16.mxu0 %v2148
        %2322 = vmatpush1.bf16.msra.mxu0 %v2147
        %2323 = vmatprep.subr.bf16.mxu0 %v2223
        %2324 = vmatpush2.bf16.msra.mxu0 %v2222
        %2325 = vmatprep.subr.bf16.mxu0 %v2218
        %2326 = vmatpush2.bf16.msra.mxu0 %v2217
        %2327 = vmatprep.subr.bf16.mxu0 %v2213
        %2328 = vmatpush2.bf16.msra.mxu0 %v2212
        %2329 = vmatprep.subr.bf16.mxu0 %v2208
        %2330 = vmatpush2.bf16.msra.mxu0 %v2207
        %2331 = vmatprep.subr.bf16.mxu0 %v2203
        %2332 = vmatpush2.bf16.msra.mxu0 %v2202
        %2333 = vmatprep.subr.bf16.mxu0 %v2198
        %2334 = vmatpush2.bf16.msra.mxu0 %v2197
        %2335 = vmatprep.subr.bf16.mxu0 %v2193
        %2336 = vmatpush2.bf16.msra.mxu0 %v2192
        %2337 = vmatprep.subr.bf16.mxu0 %v2188
        %2338 = vmatpush2.bf16.msra.mxu0 %v2187
        %2339 = vmatprep.mubr.bf16.mxu0 %v1890
        %2340 = vmatmul.mubr.bf16.gmra.mxu0 %v1889
        %v2341 = vpop.f32.mrf.mxu0
        %v2342 = vadd.f32 0.0, %v2341
        %v2343 = vpop.f32.mrf.mxu0
        %v2344 = vadd.f32 0.0, %v2343
        %v2345 = vpop.f32.mrf.mxu0
        %v2346 = vadd.f32 0.0, %v2345
        %v2347 = vpop.f32.mrf.mxu0
        %v2348 = vadd.f32 0.0, %v2347
        %2349 = vdwg.mxu0
        %2350 = vmatprep.subr.bf16.mxu0 %v2185
        %2351 = vmatpush1.bf16.msra.mxu0 %v2184
        %2352 = vmatprep.subr.bf16.mxu0 %v2180
        %2353 = vmatpush1.bf16.msra.mxu0 %v2179
        %2354 = vmatprep.subr.bf16.mxu0 %v2175
        %2355 = vmatpush1.bf16.msra.mxu0 %v2174
        %2356 = vmatprep.subr.bf16.mxu0 %v2170
        %2357 = vmatpush1.bf16.msra.mxu0 %v2169
        %2358 = vmatprep.subr.bf16.mxu0 %v2165
        %2359 = vmatpush1.bf16.msra.mxu0 %v2164
        %2360 = vmatprep.subr.bf16.mxu0 %v2160
        %2361 = vmatpush1.bf16.msra.mxu0 %v2159
        %2362 = vmatprep.subr.bf16.mxu0 %v2155
        %2363 = vmatpush1.bf16.msra.mxu0 %v2154
        %2364 = vmatprep.subr.bf16.mxu0 %v2150
        %2365 = vmatpush1.bf16.msra.mxu0 %v2149
        %2366 = vmatprep.subr.bf16.mxu0 %v2225
        %2367 = vmatpush2.bf16.msra.mxu0 %v2224
        %2368 = vmatprep.subr.bf16.mxu0 %v2220
        %2369 = vmatpush2.bf16.msra.mxu0 %v2219
        %2370 = vmatprep.subr.bf16.mxu0 %v2215
        %2371 = vmatpush2.bf16.msra.mxu0 %v2214
        %2372 = vmatprep.subr.bf16.mxu0 %v2210
        %2373 = vmatpush2.bf16.msra.mxu0 %v2209
        %2374 = vmatprep.subr.bf16.mxu0 %v2205
        %2375 = vmatpush2.bf16.msra.mxu0 %v2204
        %2376 = vmatprep.subr.bf16.mxu0 %v2200
        %2377 = vmatpush2.bf16.msra.mxu0 %v2199
        %2378 = vmatprep.subr.bf16.mxu0 %v2195
        %2379 = vmatpush2.bf16.msra.mxu0 %v2194
        %2380 = vmatprep.subr.bf16.mxu0 %v2190
        %2381 = vmatpush2.bf16.msra.mxu0 %v2189
        %2382 = vmatprep.mubr.bf16.mxu0 %v1890
        %2383 = vmatmul.mubr.bf16.gmra.mxu0 %v1889
        %v2384 = vpop.f32.mrf.mxu0
        %v2385 = vadd.f32 0.0, %v2384
        %v2386 = vpop.f32.mrf.mxu0
        %v2387 = vadd.f32 0.0, %v2386
        %v2388 = vpop.f32.mrf.mxu0
        %v2389 = vadd.f32 0.0, %v2388
        %v2390 = vpop.f32.mrf.mxu0
        %v2391 = vadd.f32 0.0, %v2390
        %2392 = vdwg.mxu0
        %2393 = vmatprep.subr.bf16.mxu0 0
        %2394 = vmatpush1.bf16.msra.mxu0 %v2186
        %2395 = vmatprep.subr.bf16.mxu0 0
        %2396 = vmatpush1.bf16.msra.mxu0 %v2181
        %2397 = vmatprep.subr.bf16.mxu0 0
        %2398 = vmatpush1.bf16.msra.mxu0 %v2176
        %2399 = vmatprep.subr.bf16.mxu0 0
        %2400 = vmatpush1.bf16.msra.mxu0 %v2171
        %2401 = vmatprep.subr.bf16.mxu0 0
        %2402 = vmatpush1.bf16.msra.mxu0 %v2166
        %2403 = vmatprep.subr.bf16.mxu0 0
        %2404 = vmatpush1.bf16.msra.mxu0 %v2161
        %2405 = vmatprep.subr.bf16.mxu0 0
        %2406 = vmatpush1.bf16.msra.mxu0 %v2156
        %2407 = vmatprep.subr.bf16.mxu0 0
        %2408 = vmatpush1.bf16.msra.mxu0 %v2151
        %2409 = vmatprep.subr.bf16.mxu0 0
        %2410 = vmatpush2.bf16.msra.mxu0 %v2226
        %2411 = vmatprep.subr.bf16.mxu0 0
        %2412 = vmatpush2.bf16.msra.mxu0 %v2221
        %2413 = vmatprep.subr.bf16.mxu0 0
        %2414 = vmatpush2.bf16.msra.mxu0 %v2216
        %2415 = vmatprep.subr.bf16.mxu0 0
        %2416 = vmatpush2.bf16.msra.mxu0 %v2211
        %2417 = vmatprep.subr.bf16.mxu0 0
        %2418 = vmatpush2.bf16.msra.mxu0 %v2206
        %2419 = vmatprep.subr.bf16.mxu0 0
        %2420 = vmatpush2.bf16.msra.mxu0 %v2201
        %2421 = vmatprep.subr.bf16.mxu0 0
        %2422 = vmatpush2.bf16.msra.mxu0 %v2196
        %2423 = vmatprep.subr.bf16.mxu0 0
        %2424 = vmatpush2.bf16.msra.mxu0 %v2191
        %2425 = vmatprep.mubr.bf16.mxu0 %v1890
        %2426 = vmatmul.mubr.bf16.gmra.mxu0 %v1889
        %v2427 = vpop.f32.mrf.mxu0
        %v2428 = vadd.f32 0.0, %v2427
        %v2429 = vpop.f32.mrf.mxu0
        %v2430 = vpop.f32.mrf.mxu0
        %v2431 = vadd.f32 0.0, %v2430
        %v2432 = vpop.f32.mrf.mxu0
        %2433 = vdwg.mxu0
        %v2434 = vpack.c.bf16 %v2346, %v2342
        %v2435 = vpack.c.bf16 %v2348, %v2344
        %v2436 = vpack.c.bf16 %v2389, %v2385
        %v2437 = vpack.c.bf16 %v2391, %v2387
        %v2438 = vpack.c.bf16 %v2431, %v2428
        %v2440 = vsel %vm471, %v1869, 0
        %v2443 = vsel %vm471, %v1870, 0
        %v2446 = vsel %vm471, %v1871, 0
        %v2449 = vsel %vm471, %v1872, 0
        %v2452 = vsel %vm471, %v1873, 0
        %v2455 = vsel %vm471, %v1874, 0
        %v2458 = vsel %vm471, %v1875, 0
        %v2461 = vsel %vm471, %v1876, 0
        %2463 = vmatprep.subr.bf16.mxu0 0
        %2464 = vmatpush1.bf16.msra.mxu0 0
        %2465 = vmatprep.subr.bf16.mxu0 0
        %2466 = vmatpush1.bf16.msra.mxu0 0
        %2467 = vmatprep.subr.bf16.mxu0 0
        %2468 = vmatpush1.bf16.msra.mxu0 0
        %2469 = vmatprep.subr.bf16.mxu0 0
        %2470 = vmatpush1.bf16.msra.mxu0 0
        %2471 = vmatprep.subr.bf16.mxu0 0
        %2472 = vmatpush1.bf16.msra.mxu0 0
        %2473 = vmatprep.subr.bf16.mxu0 0
        %2474 = vmatpush1.bf16.msra.mxu0 0
        %2475 = vmatprep.subr.bf16.mxu0 0
        %2476 = vmatpush1.bf16.msra.mxu0 0
        %2477 = vmatprep.subr.bf16.mxu0 %v2435
        %2478 = vmatpush1.bf16.msra.mxu0 %v2434
        %2479 = vmatprep.subr.bf16.mxu0 0
        %2480 = vmatpush2.bf16.msra.mxu0 0
        %2481 = vmatprep.subr.bf16.mxu0 0
        %2482 = vmatpush2.bf16.msra.mxu0 0
        %2483 = vmatprep.subr.bf16.mxu0 0
        %2484 = vmatpush2.bf16.msra.mxu0 0
        %2485 = vmatprep.subr.bf16.mxu0 0
        %2486 = vmatpush2.bf16.msra.mxu0 0
        %2487 = vmatprep.subr.bf16.mxu0 0
        %2488 = vmatpush2.bf16.msra.mxu0 0
        %2489 = vmatprep.subr.bf16.mxu0 0
        %2490 = vmatpush2.bf16.msra.mxu0 0
        %2491 = vmatprep.subr.bf16.mxu0 0
        %2492 = vmatpush2.bf16.msra.mxu0 0
        %2493 = vmatprep.subr.bf16.mxu0 0
        %2494 = vmatpush2.bf16.msra.mxu0 0
        %2495 = vmatprep.mubr.bf16.mxu0 0
        %2496 = vmatmul.mubr.bf16.gmra.mxu0 %v2440
        %v2497 = vpop.f32.mrf.mxu0
        %v2498 = vadd.f32 0.0, %v2497
        %v2499 = vpop.f32.mrf.mxu0
        %v2500 = vadd.f32 0.0, %v2499
        %v2501 = vpop.f32.mrf.mxu0
        %v2502 = vadd.f32 0.0, %v2501
        %v2503 = vpop.f32.mrf.mxu0
        %v2504 = vadd.f32 0.0, %v2503
        %2505 = vmatprep.mubr.bf16.mxu0 0
        %2506 = vmatmul.mubr.bf16.gmra.mxu0 %v2443
        %v2507 = vpop.f32.mrf.mxu0
        %v2508 = vadd.f32 0.0, %v2507
        %v2509 = vpop.f32.mrf.mxu0
        %v2510 = vadd.f32 0.0, %v2509
        %v2511 = vpop.f32.mrf.mxu0
        %v2512 = vadd.f32 0.0, %v2511
        %v2513 = vpop.f32.mrf.mxu0
        %v2514 = vadd.f32 0.0, %v2513
        %2515 = vmatprep.mubr.bf16.mxu0 0
        %2516 = vmatmul.mubr.bf16.gmra.mxu0 %v2446
        %v2517 = vpop.f32.mrf.mxu0
        %v2518 = vadd.f32 0.0, %v2517
        %v2519 = vpop.f32.mrf.mxu0
        %v2520 = vadd.f32 0.0, %v2519
        %v2521 = vpop.f32.mrf.mxu0
        %v2522 = vadd.f32 0.0, %v2521
        %v2523 = vpop.f32.mrf.mxu0
        %v2524 = vadd.f32 0.0, %v2523
        %2525 = vmatprep.mubr.bf16.mxu0 0
        %2526 = vmatmul.mubr.bf16.gmra.mxu0 %v2449
        %v2527 = vpop.f32.mrf.mxu0
        %v2528 = vadd.f32 0.0, %v2527
        %v2529 = vpop.f32.mrf.mxu0
        %v2530 = vadd.f32 0.0, %v2529
        %v2531 = vpop.f32.mrf.mxu0
        %v2532 = vadd.f32 0.0, %v2531
        %v2533 = vpop.f32.mrf.mxu0
        %v2534 = vadd.f32 0.0, %v2533
        %2535 = vmatprep.mubr.bf16.mxu0 0
        %2536 = vmatmul.mubr.bf16.gmra.mxu0 %v2452
        %v2537 = vpop.f32.mrf.mxu0
        %v2538 = vadd.f32 0.0, %v2537
        %v2539 = vpop.f32.mrf.mxu0
        %v2540 = vadd.f32 0.0, %v2539
        %v2541 = vpop.f32.mrf.mxu0
        %v2542 = vadd.f32 0.0, %v2541
        %v2543 = vpop.f32.mrf.mxu0
        %v2544 = vadd.f32 0.0, %v2543
        %2545 = vmatprep.mubr.bf16.mxu0 0
        %2546 = vmatmul.mubr.bf16.gmra.mxu0 %v2455
        %v2547 = vpop.f32.mrf.mxu0
        %v2548 = vadd.f32 0.0, %v2547
        %v2549 = vpop.f32.mrf.mxu0
        %v2550 = vadd.f32 0.0, %v2549
        %v2551 = vpop.f32.mrf.mxu0
        %v2552 = vadd.f32 0.0, %v2551
        %v2553 = vpop.f32.mrf.mxu0
        %v2554 = vadd.f32 0.0, %v2553
        %2555 = vmatprep.mubr.bf16.mxu0 0
        %2556 = vmatmul.mubr.bf16.gmra.mxu0 %v2458
        %v2557 = vpop.f32.mrf.mxu0
        %v2558 = vadd.f32 0.0, %v2557
        %v2559 = vpop.f32.mrf.mxu0
        %v2560 = vadd.f32 0.0, %v2559
        %v2561 = vpop.f32.mrf.mxu0
        %v2562 = vadd.f32 0.0, %v2561
        %v2563 = vpop.f32.mrf.mxu0
        %v2564 = vadd.f32 0.0, %v2563
        %2565 = vmatprep.mubr.bf16.mxu0 0
        %2566 = vmatmul.mubr.bf16.gmra.mxu0 %v2461
        %v2567 = vpop.f32.mrf.mxu0
        %v2568 = vadd.f32 0.0, %v2567
        %v2569 = vpop.f32.mrf.mxu0
        %v2570 = vadd.f32 0.0, %v2569
        %v2571 = vpop.f32.mrf.mxu0
        %v2572 = vpop.f32.mrf.mxu0
        %2573 = vdwg.mxu0
        %2574 = vmatprep.subr.bf16.mxu0 0
        %2575 = vmatpush1.bf16.msra.mxu0 0
        %2576 = vmatprep.subr.bf16.mxu0 0
        %2577 = vmatpush1.bf16.msra.mxu0 0
        %2578 = vmatprep.subr.bf16.mxu0 0
        %2579 = vmatpush1.bf16.msra.mxu0 0
        %2580 = vmatprep.subr.bf16.mxu0 0
        %2581 = vmatpush1.bf16.msra.mxu0 0
        %2582 = vmatprep.subr.bf16.mxu0 0
        %2583 = vmatpush1.bf16.msra.mxu0 0
        %2584 = vmatprep.subr.bf16.mxu0 0
        %2585 = vmatpush1.bf16.msra.mxu0 0
        %2586 = vmatprep.subr.bf16.mxu0 0
        %2587 = vmatpush1.bf16.msra.mxu0 0
        %2588 = vmatprep.subr.bf16.mxu0 %v2437
        %2589 = vmatpush1.bf16.msra.mxu0 %v2436
        %2590 = vmatprep.subr.bf16.mxu0 0
        %2591 = vmatpush2.bf16.msra.mxu0 0
        %2592 = vmatprep.subr.bf16.mxu0 0
        %2593 = vmatpush2.bf16.msra.mxu0 0
        %2594 = vmatprep.subr.bf16.mxu0 0
        %2595 = vmatpush2.bf16.msra.mxu0 0
        %2596 = vmatprep.subr.bf16.mxu0 0
        %2597 = vmatpush2.bf16.msra.mxu0 0
        %2598 = vmatprep.subr.bf16.mxu0 0
        %2599 = vmatpush2.bf16.msra.mxu0 0
        %2600 = vmatprep.subr.bf16.mxu0 0
        %2601 = vmatpush2.bf16.msra.mxu0 0
        %2602 = vmatprep.subr.bf16.mxu0 0
        %2603 = vmatpush2.bf16.msra.mxu0 0
        %2604 = vmatprep.subr.bf16.mxu0 0
        %2605 = vmatpush2.bf16.msra.mxu0 0
        %2606 = vmatprep.mubr.bf16.mxu0 0
        %2607 = vmatmul.mubr.bf16.gmra.mxu0 %v2440
        %v2608 = vpop.f32.mrf.mxu0
        %v2609 = vadd.f32 0.0, %v2608
        %v2610 = vpop.f32.mrf.mxu0
        %v2611 = vadd.f32 0.0, %v2610
        %v2612 = vpop.f32.mrf.mxu0
        %v2613 = vadd.f32 0.0, %v2612
        %v2614 = vpop.f32.mrf.mxu0
        %v2615 = vadd.f32 0.0, %v2614
        %2616 = vmatprep.mubr.bf16.mxu0 0
        %2617 = vmatmul.mubr.bf16.gmra.mxu0 %v2443
        %v2618 = vpop.f32.mrf.mxu0
        %v2619 = vadd.f32 0.0, %v2618
        %v2620 = vpop.f32.mrf.mxu0
        %v2621 = vadd.f32 0.0, %v2620
        %v2622 = vpop.f32.mrf.mxu0
        %v2623 = vadd.f32 0.0, %v2622
        %v2624 = vpop.f32.mrf.mxu0
        %v2625 = vadd.f32 0.0, %v2624
        %2626 = vmatprep.mubr.bf16.mxu0 0
        %2627 = vmatmul.mubr.bf16.gmra.mxu0 %v2446
        %v2628 = vpop.f32.mrf.mxu0
        %v2629 = vadd.f32 0.0, %v2628
        %v2630 = vpop.f32.mrf.mxu0
        %v2631 = vadd.f32 0.0, %v2630
        %v2632 = vpop.f32.mrf.mxu0
        %v2633 = vadd.f32 0.0, %v2632
        %v2634 = vpop.f32.mrf.mxu0
        %v2635 = vadd.f32 0.0, %v2634
        %2636 = vmatprep.mubr.bf16.mxu0 0
        %2637 = vmatmul.mubr.bf16.gmra.mxu0 %v2449
        %v2638 = vpop.f32.mrf.mxu0
        %v2639 = vadd.f32 0.0, %v2638
        %v2640 = vpop.f32.mrf.mxu0
        %v2641 = vadd.f32 0.0, %v2640
        %v2642 = vpop.f32.mrf.mxu0
        %v2643 = vadd.f32 0.0, %v2642
        %v2644 = vpop.f32.mrf.mxu0
        %v2645 = vadd.f32 0.0, %v2644
        %2646 = vmatprep.mubr.bf16.mxu0 0
        %2647 = vmatmul.mubr.bf16.gmra.mxu0 %v2452
        %v2648 = vpop.f32.mrf.mxu0
        %v2649 = vadd.f32 0.0, %v2648
        %v2650 = vpop.f32.mrf.mxu0
        %v2651 = vadd.f32 0.0, %v2650
        %v2652 = vpop.f32.mrf.mxu0
        %v2653 = vadd.f32 0.0, %v2652
        %v2654 = vpop.f32.mrf.mxu0
        %v2655 = vadd.f32 0.0, %v2654
        %2656 = vmatprep.mubr.bf16.mxu0 0
        %2657 = vmatmul.mubr.bf16.gmra.mxu0 %v2455
        %v2658 = vpop.f32.mrf.mxu0
        %v2659 = vadd.f32 0.0, %v2658
        %v2660 = vpop.f32.mrf.mxu0
        %v2661 = vadd.f32 0.0, %v2660
        %v2662 = vpop.f32.mrf.mxu0
        %v2663 = vadd.f32 0.0, %v2662
        %v2664 = vpop.f32.mrf.mxu0
        %v2665 = vadd.f32 0.0, %v2664
        %2666 = vmatprep.mubr.bf16.mxu0 0
        %2667 = vmatmul.mubr.bf16.gmra.mxu0 %v2458
        %v2668 = vpop.f32.mrf.mxu0
        %v2669 = vadd.f32 0.0, %v2668
        %v2670 = vpop.f32.mrf.mxu0
        %v2671 = vadd.f32 0.0, %v2670
        %v2672 = vpop.f32.mrf.mxu0
        %v2673 = vadd.f32 0.0, %v2672
        %v2674 = vpop.f32.mrf.mxu0
        %v2675 = vadd.f32 0.0, %v2674
        %2676 = vmatprep.mubr.bf16.mxu0 0
        %2677 = vmatmul.mubr.bf16.gmra.mxu0 %v2461
        %v2678 = vpop.f32.mrf.mxu0
        %v2679 = vadd.f32 0.0, %v2678
        %v2680 = vpop.f32.mrf.mxu0
        %v2681 = vadd.f32 0.0, %v2680
        %v2682 = vpop.f32.mrf.mxu0
        %v2683 = vpop.f32.mrf.mxu0
        %2684 = vdwg.mxu0
        %2685 = vmatprep.subr.bf16.mxu0 0
        %2686 = vmatpush1.bf16.msra.mxu0 0
        %2687 = vmatprep.subr.bf16.mxu0 0
        %2688 = vmatpush1.bf16.msra.mxu0 0
        %2689 = vmatprep.subr.bf16.mxu0 0
        %2690 = vmatpush1.bf16.msra.mxu0 0
        %2691 = vmatprep.subr.bf16.mxu0 0
        %2692 = vmatpush1.bf16.msra.mxu0 0
        %2693 = vmatprep.subr.bf16.mxu0 0
        %2694 = vmatpush1.bf16.msra.mxu0 0
        %2695 = vmatprep.subr.bf16.mxu0 0
        %2696 = vmatpush1.bf16.msra.mxu0 0
        %2697 = vmatprep.subr.bf16.mxu0 0
        %2698 = vmatpush1.bf16.msra.mxu0 0
        %2699 = vmatprep.subr.bf16.mxu0 0
        %2700 = vmatpush1.bf16.msra.mxu0 %v2438
        %2701 = vmatprep.subr.bf16.mxu0 0
        %2702 = vmatpush2.bf16.msra.mxu0 0
        %2703 = vmatprep.subr.bf16.mxu0 0
        %2704 = vmatpush2.bf16.msra.mxu0 0
        %2705 = vmatprep.subr.bf16.mxu0 0
        %2706 = vmatpush2.bf16.msra.mxu0 0
        %2707 = vmatprep.subr.bf16.mxu0 0
        %2708 = vmatpush2.bf16.msra.mxu0 0
        %2709 = vmatprep.subr.bf16.mxu0 0
        %2710 = vmatpush2.bf16.msra.mxu0 0
        %2711 = vmatprep.subr.bf16.mxu0 0
        %2712 = vmatpush2.bf16.msra.mxu0 0
        %2713 = vmatprep.subr.bf16.mxu0 0
        %2714 = vmatpush2.bf16.msra.mxu0 0
        %2715 = vmatprep.subr.bf16.mxu0 0
        %2716 = vmatpush2.bf16.msra.mxu0 0
        %2717 = vmatprep.mubr.bf16.mxu0 0
        %2718 = vmatmul.mubr.bf16.gmra.mxu0 %v2440
        %v2719 = vpop.f32.mrf.mxu0
        %v2720 = vadd.f32 0.0, %v2719
        %v2721 = vpop.f32.mrf.mxu0
        %v2722 = vpop.f32.mrf.mxu0
        %v2723 = vadd.f32 0.0, %v2722
        %v2724 = vpop.f32.mrf.mxu0
        %2725 = vmatprep.mubr.bf16.mxu0 0
        %2726 = vmatmul.mubr.bf16.gmra.mxu0 %v2443
        %v2727 = vpop.f32.mrf.mxu0
        %v2728 = vadd.f32 0.0, %v2727
        %v2729 = vpop.f32.mrf.mxu0
        %v2730 = vpop.f32.mrf.mxu0
        %v2731 = vadd.f32 0.0, %v2730
        %v2732 = vpop.f32.mrf.mxu0
        %2733 = vmatprep.mubr.bf16.mxu0 0
        %2734 = vmatmul.mubr.bf16.gmra.mxu0 %v2446
        %v2735 = vpop.f32.mrf.mxu0
        %v2736 = vadd.f32 0.0, %v2735
        %v2737 = vpop.f32.mrf.mxu0
        %v2738 = vpop.f32.mrf.mxu0
        %v2739 = vadd.f32 0.0, %v2738
        %v2740 = vpop.f32.mrf.mxu0
        %2741 = vmatprep.mubr.bf16.mxu0 0
        %2742 = vmatmul.mubr.bf16.gmra.mxu0 %v2449
        %v2743 = vpop.f32.mrf.mxu0
        %v2744 = vadd.f32 0.0, %v2743
        %v2745 = vpop.f32.mrf.mxu0
        %v2746 = vpop.f32.mrf.mxu0
        %v2747 = vadd.f32 0.0, %v2746
        %v2748 = vpop.f32.mrf.mxu0
        %2749 = vmatprep.mubr.bf16.mxu0 0
        %2750 = vmatmul.mubr.bf16.gmra.mxu0 %v2452
        %v2751 = vpop.f32.mrf.mxu0
        %v2752 = vadd.f32 0.0, %v2751
        %v2753 = vpop.f32.mrf.mxu0
        %v2754 = vpop.f32.mrf.mxu0
        %v2755 = vadd.f32 0.0, %v2754
        %v2756 = vpop.f32.mrf.mxu0
        %2757 = vmatprep.mubr.bf16.mxu0 0
        %2758 = vmatmul.mubr.bf16.gmra.mxu0 %v2455
        %v2759 = vpop.f32.mrf.mxu0
        %v2760 = vadd.f32 0.0, %v2759
        %v2761 = vpop.f32.mrf.mxu0
        %v2762 = vpop.f32.mrf.mxu0
        %v2763 = vadd.f32 0.0, %v2762
        %v2764 = vpop.f32.mrf.mxu0
        %2765 = vmatprep.mubr.bf16.mxu0 0
        %2766 = vmatmul.mubr.bf16.gmra.mxu0 %v2458
        %v2767 = vpop.f32.mrf.mxu0
        %v2768 = vadd.f32 0.0, %v2767
        %v2769 = vpop.f32.mrf.mxu0
        %v2770 = vpop.f32.mrf.mxu0
        %v2771 = vadd.f32 0.0, %v2770
        %v2772 = vpop.f32.mrf.mxu0
        %2773 = vmatprep.mubr.bf16.mxu0 0
        %2774 = vmatmul.mubr.bf16.gmra.mxu0 %v2461
        %v2775 = vpop.f32.mrf.mxu0
        %v2776 = vadd.f32 0.0, %v2775
        %v2777 = vpop.f32.mrf.mxu0
        %v2778 = vpop.f32.mrf.mxu0
        %v2779 = vpop.f32.mrf.mxu0
        %2780 = vdwg.mxu0
        %2781 = vst [vmem:[%s301] sm:$0xff] %v2498
        %2782 = vst [vmem:[%s301 + $0x8] sm:$0xff] %v2500
        %2783 = vst [vmem:[%s301 + $0x10] sm:$0xff] %v2609
        %2784 = vst [vmem:[%s301 + $0x18] sm:$0xff] %v2611
        %2785 = vst [vmem:[%s301 + $0x20] sm:$0xff] %v2720
        %2786 = vst [vmem:[%s301 + $0x28] sm:$0xff] %v2502
        %2787 = vst [vmem:[%s301 + $0x30] sm:$0xff] %v2504
        %2788 = vst [vmem:[%s301 + $0x38] sm:$0xff] %v2613
        %2789 = vst [vmem:[%s301 + $0x40] sm:$0xff] %v2615
        %2790 = vst [vmem:[%s301 + $0x48] sm:$0xff] %v2723
        %2791 = vst [vmem:[%s301 + $0x50] sm:$0xff] %v2508
        %2792 = vst [vmem:[%s301 + $0x58] sm:$0xff] %v2510
        %2793 = vst [vmem:[%s301 + $0x60] sm:$0xff] %v2619
        %2794 = vst [vmem:[%s301 + $0x68] sm:$0xff] %v2621
        %2795 = vst [vmem:[%s301 + $0x70] sm:$0xff] %v2728
        %2796 = vst [vmem:[%s301 + $0x78] sm:$0xff] %v2512
        %2797 = vst [vmem:[%s301 + $0x80] sm:$0xff] %v2514
        %2798 = vst [vmem:[%s301 + $0x88] sm:$0xff] %v2623
        %2799 = vst [vmem:[%s301 + $0x90] sm:$0xff] %v2625
        %2800 = vst [vmem:[%s301 + $0x98] sm:$0xff] %v2731
        %2801 = vst [vmem:[%s301 + $0xa0] sm:$0xff] %v2518
        %2802 = vst [vmem:[%s301 + $0xa8] sm:$0xff] %v2520
        %2803 = vst [vmem:[%s301 + $0xb0] sm:$0xff] %v2629
        %2804 = vst [vmem:[%s301 + $0xb8] sm:$0xff] %v2631
        %2805 = vst [vmem:[%s301 + $0xc0] sm:$0xff] %v2736
        %2806 = vst [vmem:[%s301 + $0xc8] sm:$0xff] %v2522
        %2807 = vst [vmem:[%s301 + $0xd0] sm:$0xff] %v2524
        %2808 = vst [vmem:[%s301 + $0xd8] sm:$0xff] %v2633
        %2809 = vst [vmem:[%s301 + $0xe0] sm:$0xff] %v2635
        %2810 = vst [vmem:[%s301 + $0xe8] sm:$0xff] %v2739
        %2811 = vst [vmem:[%s301 + $0xf0] sm:$0xff] %v2528
        %2812 = vst [vmem:[%s301 + $0xf8] sm:$0xff] %v2530
        %2813 = vst [vmem:[%s301 + $0x100] sm:$0xff] %v2639
        %2814 = vst [vmem:[%s301 + $0x108] sm:$0xff] %v2641
        %2815 = vst [vmem:[%s301 + $0x110] sm:$0xff] %v2744
        %2816 = vst [vmem:[%s301 + $0x118] sm:$0xff] %v2532
        %2817 = vst [vmem:[%s301 + $0x120] sm:$0xff] %v2534
        %2818 = vst [vmem:[%s301 + $0x128] sm:$0xff] %v2643
        %2819 = vst [vmem:[%s301 + $0x130] sm:$0xff] %v2645
        %2820 = vst [vmem:[%s301 + $0x138] sm:$0xff] %v2747
        %2821 = vst [vmem:[%s301 + $0x140] sm:$0xff] %v2538
        %2822 = vst [vmem:[%s301 + $0x148] sm:$0xff] %v2540
        %2823 = vst [vmem:[%s301 + $0x150] sm:$0xff] %v2649
        %2824 = vst [vmem:[%s301 + $0x158] sm:$0xff] %v2651
        %2825 = vst [vmem:[%s301 + $0x160] sm:$0xff] %v2752
        %2826 = vst [vmem:[%s301 + $0x168] sm:$0xff] %v2542
        %2827 = vst [vmem:[%s301 + $0x170] sm:$0xff] %v2544
        %2828 = vst [vmem:[%s301 + $0x178] sm:$0xff] %v2653
        %2829 = vst [vmem:[%s301 + $0x180] sm:$0xff] %v2655
        %2830 = vst [vmem:[%s301 + $0x188] sm:$0xff] %v2755
        %2831 = vst [vmem:[%s301 + $0x190] sm:$0xff] %v2548
        %2832 = vst [vmem:[%s301 + $0x198] sm:$0xff] %v2550
        %2833 = vst [vmem:[%s301 + $0x1a0] sm:$0xff] %v2659
        %2834 = vst [vmem:[%s301 + $0x1a8] sm:$0xff] %v2661
        %2835 = vst [vmem:[%s301 + $0x1b0] sm:$0xff] %v2760
        %2836 = vst [vmem:[%s301 + $0x1b8] sm:$0xff] %v2552
        %2837 = vst [vmem:[%s301 + $0x1c0] sm:$0xff] %v2554
        %2838 = vst [vmem:[%s301 + $0x1c8] sm:$0xff] %v2663
        %2839 = vst [vmem:[%s301 + $0x1d0] sm:$0xff] %v2665
        %2840 = vst [vmem:[%s301 + $0x1d8] sm:$0xff] %v2763
        %2841 = vst [vmem:[%s301 + $0x1e0] sm:$0xff] %v2558
        %2842 = vst [vmem:[%s301 + $0x1e8] sm:$0xff] %v2560
        %2843 = vst [vmem:[%s301 + $0x1f0] sm:$0xff] %v2669
        %2844 = vst [vmem:[%s301 + $0x1f8] sm:$0xff] %v2671
        %2845 = vst [vmem:[%s301 + $0x200] sm:$0xff] %v2768
        %2846 = vst [vmem:[%s301 + $0x208] sm:$0xff] %v2562
        %2847 = vst [vmem:[%s301 + $0x210] sm:$0xff] %v2564
        %2848 = vst [vmem:[%s301 + $0x218] sm:$0xff] %v2673
        %2849 = vst [vmem:[%s301 + $0x220] sm:$0xff] %v2675
        %2850 = vst [vmem:[%s301 + $0x228] sm:$0xff] %v2771
        %2851 = vst [vmem:[%s301 + $0x230] sm:$0xff] %v2568
        %2852 = vst [vmem:[%s301 + $0x238] sm:$0xff] %v2570
        %2853 = vst [vmem:[%s301 + $0x240] sm:$0xff] %v2679
        %2854 = vst [vmem:[%s301 + $0x248] sm:$0xff] %v2681
        %2855 = vst [vmem:[%s301 + $0x250] sm:$0xff] %v2776
        %v2856 = vlaneseq
        %v2857 = vshrl.u32 %v2856, 7
        %v2858 = vsub.s32 1, %v2857
        %v2859 = vrot.slane %v1750, %v2858
        %v2860 = vlaneseq
        %v2861 = vshrl.u32 %v2860, 7
        %v2862 = vsub.s32 1, %v2861
        %v2863 = vrot.slane %v1752, %v2862
        %v2864 = vmul.f32 %v1754, %v2859
        %v2865 = vmul.f32 %v1755, %v2863
        %v2866 = vmul.f32 %v1756, %v2859
        %v2867 = vmul.f32 %v1757, %v2863
        %v2868 = vpack.c.bf16 %v2866, %v2864
        %v2869 = vpack.c.bf16 %v2867, %v2865
        %2870 = vmatprep.subr.bf16.mxu0 %v2183
        %2871 = vmatpush1.bf16.msra.mxu0 %v2182
        %2872 = vmatprep.subr.bf16.mxu0 %v2178
        %2873 = vmatpush1.bf16.msra.mxu0 %v2177
        %2874 = vmatprep.subr.bf16.mxu0 %v2173
        %2875 = vmatpush1.bf16.msra.mxu0 %v2172
        %2876 = vmatprep.subr.bf16.mxu0 %v2168
        %2877 = vmatpush1.bf16.msra.mxu0 %v2167
        %2878 = vmatprep.subr.bf16.mxu0 %v2163
        %2879 = vmatpush1.bf16.msra.mxu0 %v2162
        %2880 = vmatprep.subr.bf16.mxu0 %v2158
        %2881 = vmatpush1.bf16.msra.mxu0 %v2157
        %2882 = vmatprep.subr.bf16.mxu0 %v2153
        %2883 = vmatpush1.bf16.msra.mxu0 %v2152
        %2884 = vmatprep.subr.bf16.mxu0 %v2148
        %2885 = vmatpush1.bf16.msra.mxu0 %v2147
        %2886 = vmatprep.subr.bf16.mxu0 %v2223
        %2887 = vmatpush2.bf16.msra.mxu0 %v2222
        %2888 = vmatprep.subr.bf16.mxu0 %v2218
        %2889 = vmatpush2.bf16.msra.mxu0 %v2217
        %2890 = vmatprep.subr.bf16.mxu0 %v2213
        %2891 = vmatpush2.bf16.msra.mxu0 %v2212
        %2892 = vmatprep.subr.bf16.mxu0 %v2208
        %2893 = vmatpush2.bf16.msra.mxu0 %v2207
        %2894 = vmatprep.subr.bf16.mxu0 %v2203
        %2895 = vmatpush2.bf16.msra.mxu0 %v2202
        %2896 = vmatprep.subr.bf16.mxu0 %v2198
        %2897 = vmatpush2.bf16.msra.mxu0 %v2197
        %2898 = vmatprep.subr.bf16.mxu0 %v2193
        %2899 = vmatpush2.bf16.msra.mxu0 %v2192
        %2900 = vmatprep.subr.bf16.mxu0 %v2188
        %2901 = vmatpush2.bf16.msra.mxu0 %v2187
        %2902 = vmatprep.mubr.bf16.mxu0 %v2869
        %2903 = vmatmul.mubr.bf16.gmra.mxu0 %v2868
        %v2904 = vpop.f32.mrf.mxu0
        %v2905 = vadd.f32 0.0, %v2904
        %v2906 = vpop.f32.mrf.mxu0
        %v2907 = vadd.f32 0.0, %v2906
        %v2908 = vpop.f32.mrf.mxu0
        %v2909 = vadd.f32 0.0, %v2908
        %v2910 = vpop.f32.mrf.mxu0
        %v2911 = vadd.f32 0.0, %v2910
        %2912 = vdwg.mxu0
        %2913 = vmatprep.subr.bf16.mxu0 %v2185
        %2914 = vmatpush1.bf16.msra.mxu0 %v2184
        %2915 = vmatprep.subr.bf16.mxu0 %v2180
        %2916 = vmatpush1.bf16.msra.mxu0 %v2179
        %2917 = vmatprep.subr.bf16.mxu0 %v2175
        %2918 = vmatpush1.bf16.msra.mxu0 %v2174
        %2919 = vmatprep.subr.bf16.mxu0 %v2170
        %2920 = vmatpush1.bf16.msra.mxu0 %v2169
        %2921 = vmatprep.subr.bf16.mxu0 %v2165
        %2922 = vmatpush1.bf16.msra.mxu0 %v2164
        %2923 = vmatprep.subr.bf16.mxu0 %v2160
        %2924 = vmatpush1.bf16.msra.mxu0 %v2159
        %2925 = vmatprep.subr.bf16.mxu0 %v2155
        %2926 = vmatpush1.bf16.msra.mxu0 %v2154
        %2927 = vmatprep.subr.bf16.mxu0 %v2150
        %2928 = vmatpush1.bf16.msra.mxu0 %v2149
        %2929 = vmatprep.subr.bf16.mxu0 %v2225
        %2930 = vmatpush2.bf16.msra.mxu0 %v2224
        %2931 = vmatprep.subr.bf16.mxu0 %v2220
        %2932 = vmatpush2.bf16.msra.mxu0 %v2219
        %2933 = vmatprep.subr.bf16.mxu0 %v2215
        %2934 = vmatpush2.bf16.msra.mxu0 %v2214
        %2935 = vmatprep.subr.bf16.mxu0 %v2210
        %2936 = vmatpush2.bf16.msra.mxu0 %v2209
        %2937 = vmatprep.subr.bf16.mxu0 %v2205
        %2938 = vmatpush2.bf16.msra.mxu0 %v2204
        %2939 = vmatprep.subr.bf16.mxu0 %v2200
        %2940 = vmatpush2.bf16.msra.mxu0 %v2199
        %2941 = vmatprep.subr.bf16.mxu0 %v2195
        %2942 = vmatpush2.bf16.msra.mxu0 %v2194
        %2943 = vmatprep.subr.bf16.mxu0 %v2190
        %2944 = vmatpush2.bf16.msra.mxu0 %v2189
        %2945 = vmatprep.mubr.bf16.mxu0 %v2869
        %2946 = vmatmul.mubr.bf16.gmra.mxu0 %v2868
        %v2947 = vpop.f32.mrf.mxu0
        %v2948 = vadd.f32 0.0, %v2947
        %v2949 = vpop.f32.mrf.mxu0
        %v2950 = vadd.f32 0.0, %v2949
        %v2951 = vpop.f32.mrf.mxu0
        %v2952 = vadd.f32 0.0, %v2951
        %v2953 = vpop.f32.mrf.mxu0
        %v2954 = vadd.f32 0.0, %v2953
        %2955 = vdwg.mxu0
        %2956 = vmatprep.subr.bf16.mxu0 0
        %2957 = vmatpush1.bf16.msra.mxu0 %v2186
        %2958 = vmatprep.subr.bf16.mxu0 0
        %2959 = vmatpush1.bf16.msra.mxu0 %v2181
        %2960 = vmatprep.subr.bf16.mxu0 0
        %2961 = vmatpush1.bf16.msra.mxu0 %v2176
        %2962 = vmatprep.subr.bf16.mxu0 0
        %2963 = vmatpush1.bf16.msra.mxu0 %v2171
        %2964 = vmatprep.subr.bf16.mxu0 0
        %2965 = vmatpush1.bf16.msra.mxu0 %v2166
        %2966 = vmatprep.subr.bf16.mxu0 0
        %2967 = vmatpush1.bf16.msra.mxu0 %v2161
        %2968 = vmatprep.subr.bf16.mxu0 0
        %2969 = vmatpush1.bf16.msra.mxu0 %v2156
        %2970 = vmatprep.subr.bf16.mxu0 0
        %2971 = vmatpush1.bf16.msra.mxu0 %v2151
        %2972 = vmatprep.subr.bf16.mxu0 0
        %2973 = vmatpush2.bf16.msra.mxu0 %v2226
        %2974 = vmatprep.subr.bf16.mxu0 0
        %2975 = vmatpush2.bf16.msra.mxu0 %v2221
        %2976 = vmatprep.subr.bf16.mxu0 0
        %2977 = vmatpush2.bf16.msra.mxu0 %v2216
        %2978 = vmatprep.subr.bf16.mxu0 0
        %2979 = vmatpush2.bf16.msra.mxu0 %v2211
        %2980 = vmatprep.subr.bf16.mxu0 0
        %2981 = vmatpush2.bf16.msra.mxu0 %v2206
        %2982 = vmatprep.subr.bf16.mxu0 0
        %2983 = vmatpush2.bf16.msra.mxu0 %v2201
        %2984 = vmatprep.subr.bf16.mxu0 0
        %2985 = vmatpush2.bf16.msra.mxu0 %v2196
        %2986 = vmatprep.subr.bf16.mxu0 0
        %2987 = vmatpush2.bf16.msra.mxu0 %v2191
        %2988 = vmatprep.mubr.bf16.mxu0 %v2869
        %2989 = vmatmul.mubr.bf16.gmra.mxu0 %v2868
        %v2990 = vpop.f32.mrf.mxu0
        %v2991 = vadd.f32 0.0, %v2990
        %v2992 = vpop.f32.mrf.mxu0
        %v2993 = vpop.f32.mrf.mxu0
        %v2994 = vadd.f32 0.0, %v2993
        %v2995 = vpop.f32.mrf.mxu0
        %2996 = vdwg.mxu0
        %v2997 = vpack.c.bf16 %v2909, %v2905
        %v2998 = vpack.c.bf16 %v2911, %v2907
        %v2999 = vpack.c.bf16 %v2952, %v2948
        %v3000 = vpack.c.bf16 %v2954, %v2950
        %v3001 = vpack.c.bf16 %v2994, %v2991
        %3002 = vmatprep.subr.bf16.mxu0 0
        %3003 = vmatpush1.bf16.msra.mxu0 0
        %3004 = vmatprep.subr.bf16.mxu0 0
        %3005 = vmatpush1.bf16.msra.mxu0 0
        %3006 = vmatprep.subr.bf16.mxu0 0
        %3007 = vmatpush1.bf16.msra.mxu0 0
        %3008 = vmatprep.subr.bf16.mxu0 0
        %3009 = vmatpush1.bf16.msra.mxu0 0
        %3010 = vmatprep.subr.bf16.mxu0 0
        %3011 = vmatpush1.bf16.msra.mxu0 0
        %3012 = vmatprep.subr.bf16.mxu0 0
        %3013 = vmatpush1.bf16.msra.mxu0 0
        %3014 = vmatprep.subr.bf16.mxu0 0
        %3015 = vmatpush1.bf16.msra.mxu0 0
        %3016 = vmatprep.subr.bf16.mxu0 %v2998
        %3017 = vmatpush1.bf16.msra.mxu0 %v2997
        %3018 = vmatprep.subr.bf16.mxu0 0
        %3019 = vmatpush2.bf16.msra.mxu0 0
        %3020 = vmatprep.subr.bf16.mxu0 0
        %3021 = vmatpush2.bf16.msra.mxu0 0
        %3022 = vmatprep.subr.bf16.mxu0 0
        %3023 = vmatpush2.bf16.msra.mxu0 0
        %3024 = vmatprep.subr.bf16.mxu0 0
        %3025 = vmatpush2.bf16.msra.mxu0 0
        %3026 = vmatprep.subr.bf16.mxu0 0
        %3027 = vmatpush2.bf16.msra.mxu0 0
        %3028 = vmatprep.subr.bf16.mxu0 0
        %3029 = vmatpush2.bf16.msra.mxu0 0
        %3030 = vmatprep.subr.bf16.mxu0 0
        %3031 = vmatpush2.bf16.msra.mxu0 0
        %3032 = vmatprep.subr.bf16.mxu0 0
        %3033 = vmatpush2.bf16.msra.mxu0 0
        %3034 = vmatprep.mubr.bf16.mxu0 0
        %3035 = vmatmul.mubr.bf16.gmra.mxu0 %v2440
        %v3036 = vpop.f32.mrf.mxu0
        %v3037 = vadd.f32 0.0, %v3036
        %v3038 = vpop.f32.mrf.mxu0
        %v3039 = vadd.f32 0.0, %v3038
        %v3040 = vpop.f32.mrf.mxu0
        %v3041 = vadd.f32 0.0, %v3040
        %v3042 = vpop.f32.mrf.mxu0
        %v3043 = vadd.f32 0.0, %v3042
        %3044 = vmatprep.mubr.bf16.mxu0 0
        %3045 = vmatmul.mubr.bf16.gmra.mxu0 %v2443
        %v3046 = vpop.f32.mrf.mxu0
        %v3047 = vadd.f32 0.0, %v3046
        %v3048 = vpop.f32.mrf.mxu0
        %v3049 = vadd.f32 0.0, %v3048
        %v3050 = vpop.f32.mrf.mxu0
        %v3051 = vadd.f32 0.0, %v3050
        %v3052 = vpop.f32.mrf.mxu0
        %v3053 = vadd.f32 0.0, %v3052
        %3054 = vmatprep.mubr.bf16.mxu0 0
        %3055 = vmatmul.mubr.bf16.gmra.mxu0 %v2446
        %v3056 = vpop.f32.mrf.mxu0
        %v3057 = vadd.f32 0.0, %v3056
        %v3058 = vpop.f32.mrf.mxu0
        %v3059 = vadd.f32 0.0, %v3058
        %v3060 = vpop.f32.mrf.mxu0
        %v3061 = vadd.f32 0.0, %v3060
        %v3062 = vpop.f32.mrf.mxu0
        %v3063 = vadd.f32 0.0, %v3062
        %3064 = vmatprep.mubr.bf16.mxu0 0
        %3065 = vmatmul.mubr.bf16.gmra.mxu0 %v2449
        %v3066 = vpop.f32.mrf.mxu0
        %v3067 = vadd.f32 0.0, %v3066
        %v3068 = vpop.f32.mrf.mxu0
        %v3069 = vadd.f32 0.0, %v3068
        %v3070 = vpop.f32.mrf.mxu0
        %v3071 = vadd.f32 0.0, %v3070
        %v3072 = vpop.f32.mrf.mxu0
        %v3073 = vadd.f32 0.0, %v3072
        %3074 = vmatprep.mubr.bf16.mxu0 0
        %3075 = vmatmul.mubr.bf16.gmra.mxu0 %v2452
        %v3076 = vpop.f32.mrf.mxu0
        %v3077 = vadd.f32 0.0, %v3076
        %v3078 = vpop.f32.mrf.mxu0
        %v3079 = vadd.f32 0.0, %v3078
        %v3080 = vpop.f32.mrf.mxu0
        %v3081 = vadd.f32 0.0, %v3080
        %v3082 = vpop.f32.mrf.mxu0
        %v3083 = vadd.f32 0.0, %v3082
        %3084 = vmatprep.mubr.bf16.mxu0 0
        %3085 = vmatmul.mubr.bf16.gmra.mxu0 %v2455
        %v3086 = vpop.f32.mrf.mxu0
        %v3087 = vadd.f32 0.0, %v3086
        %v3088 = vpop.f32.mrf.mxu0
        %v3089 = vadd.f32 0.0, %v3088
        %v3090 = vpop.f32.mrf.mxu0
        %v3091 = vadd.f32 0.0, %v3090
        %v3092 = vpop.f32.mrf.mxu0
        %v3093 = vadd.f32 0.0, %v3092
        %3094 = vmatprep.mubr.bf16.mxu0 0
        %3095 = vmatmul.mubr.bf16.gmra.mxu0 %v2458
        %v3096 = vpop.f32.mrf.mxu0
        %v3097 = vadd.f32 0.0, %v3096
        %v3098 = vpop.f32.mrf.mxu0
        %v3099 = vadd.f32 0.0, %v3098
        %v3100 = vpop.f32.mrf.mxu0
        %v3101 = vadd.f32 0.0, %v3100
        %v3102 = vpop.f32.mrf.mxu0
        %v3103 = vadd.f32 0.0, %v3102
        %3104 = vmatprep.mubr.bf16.mxu0 0
        %3105 = vmatmul.mubr.bf16.gmra.mxu0 %v2461
        %v3106 = vpop.f32.mrf.mxu0
        %v3107 = vadd.f32 0.0, %v3106
        %v3108 = vpop.f32.mrf.mxu0
        %v3109 = vadd.f32 0.0, %v3108
        %v3110 = vpop.f32.mrf.mxu0
        %v3111 = vpop.f32.mrf.mxu0
        %3112 = vdwg.mxu0
        %3113 = vmatprep.subr.bf16.mxu0 0
        %3114 = vmatpush1.bf16.msra.mxu0 0
        %3115 = vmatprep.subr.bf16.mxu0 0
        %3116 = vmatpush1.bf16.msra.mxu0 0
        %3117 = vmatprep.subr.bf16.mxu0 0
        %3118 = vmatpush1.bf16.msra.mxu0 0
        %3119 = vmatprep.subr.bf16.mxu0 0
        %3120 = vmatpush1.bf16.msra.mxu0 0
        %3121 = vmatprep.subr.bf16.mxu0 0
        %3122 = vmatpush1.bf16.msra.mxu0 0
        %3123 = vmatprep.subr.bf16.mxu0 0
        %3124 = vmatpush1.bf16.msra.mxu0 0
        %3125 = vmatprep.subr.bf16.mxu0 0
        %3126 = vmatpush1.bf16.msra.mxu0 0
        %3127 = vmatprep.subr.bf16.mxu0 %v3000
        %3128 = vmatpush1.bf16.msra.mxu0 %v2999
        %3129 = vmatprep.subr.bf16.mxu0 0
        %3130 = vmatpush2.bf16.msra.mxu0 0
        %3131 = vmatprep.subr.bf16.mxu0 0
        %3132 = vmatpush2.bf16.msra.mxu0 0
        %3133 = vmatprep.subr.bf16.mxu0 0
        %3134 = vmatpush2.bf16.msra.mxu0 0
        %3135 = vmatprep.subr.bf16.mxu0 0
        %3136 = vmatpush2.bf16.msra.mxu0 0
        %3137 = vmatprep.subr.bf16.mxu0 0
        %3138 = vmatpush2.bf16.msra.mxu0 0
        %3139 = vmatprep.subr.bf16.mxu0 0
        %3140 = vmatpush2.bf16.msra.mxu0 0
        %3141 = vmatprep.subr.bf16.mxu0 0
        %3142 = vmatpush2.bf16.msra.mxu0 0
        %3143 = vmatprep.subr.bf16.mxu0 0
        %3144 = vmatpush2.bf16.msra.mxu0 0
        %3145 = vmatprep.mubr.bf16.mxu0 0
        %3146 = vmatmul.mubr.bf16.gmra.mxu0 %v2440
        %v3147 = vpop.f32.mrf.mxu0
        %v3148 = vadd.f32 0.0, %v3147
        %v3149 = vpop.f32.mrf.mxu0
        %v3150 = vadd.f32 0.0, %v3149
        %v3151 = vpop.f32.mrf.mxu0
        %v3152 = vadd.f32 0.0, %v3151
        %v3153 = vpop.f32.mrf.mxu0
        %v3154 = vadd.f32 0.0, %v3153
        %3155 = vmatprep.mubr.bf16.mxu0 0
        %3156 = vmatmul.mubr.bf16.gmra.mxu0 %v2443
        %v3157 = vpop.f32.mrf.mxu0
        %v3158 = vadd.f32 0.0, %v3157
        %v3159 = vpop.f32.mrf.mxu0
        %v3160 = vadd.f32 0.0, %v3159
        %v3161 = vpop.f32.mrf.mxu0
        %v3162 = vadd.f32 0.0, %v3161
        %v3163 = vpop.f32.mrf.mxu0
        %v3164 = vadd.f32 0.0, %v3163
        %3165 = vmatprep.mubr.bf16.mxu0 0
        %3166 = vmatmul.mubr.bf16.gmra.mxu0 %v2446
        %v3167 = vpop.f32.mrf.mxu0
        %v3168 = vadd.f32 0.0, %v3167
        %v3169 = vpop.f32.mrf.mxu0
        %v3170 = vadd.f32 0.0, %v3169
        %v3171 = vpop.f32.mrf.mxu0
        %v3172 = vadd.f32 0.0, %v3171
        %v3173 = vpop.f32.mrf.mxu0
        %v3174 = vadd.f32 0.0, %v3173
        %3175 = vmatprep.mubr.bf16.mxu0 0
        %3176 = vmatmul.mubr.bf16.gmra.mxu0 %v2449
        %v3177 = vpop.f32.mrf.mxu0
        %v3178 = vadd.f32 0.0, %v3177
        %v3179 = vpop.f32.mrf.mxu0
        %v3180 = vadd.f32 0.0, %v3179
        %v3181 = vpop.f32.mrf.mxu0
        %v3182 = vadd.f32 0.0, %v3181
        %v3183 = vpop.f32.mrf.mxu0
        %v3184 = vadd.f32 0.0, %v3183
        %3185 = vmatprep.mubr.bf16.mxu0 0
        %3186 = vmatmul.mubr.bf16.gmra.mxu0 %v2452
        %v3187 = vpop.f32.mrf.mxu0
        %v3188 = vadd.f32 0.0, %v3187
        %v3189 = vpop.f32.mrf.mxu0
        %v3190 = vadd.f32 0.0, %v3189
        %v3191 = vpop.f32.mrf.mxu0
        %v3192 = vadd.f32 0.0, %v3191
        %v3193 = vpop.f32.mrf.mxu0
        %v3194 = vadd.f32 0.0, %v3193
        %3195 = vmatprep.mubr.bf16.mxu0 0
        %3196 = vmatmul.mubr.bf16.gmra.mxu0 %v2455
        %v3197 = vpop.f32.mrf.mxu0
        %v3198 = vadd.f32 0.0, %v3197
        %v3199 = vpop.f32.mrf.mxu0
        %v3200 = vadd.f32 0.0, %v3199
        %v3201 = vpop.f32.mrf.mxu0
        %v3202 = vadd.f32 0.0, %v3201
        %v3203 = vpop.f32.mrf.mxu0
        %v3204 = vadd.f32 0.0, %v3203
        %3205 = vmatprep.mubr.bf16.mxu0 0
        %3206 = vmatmul.mubr.bf16.gmra.mxu0 %v2458
        %v3207 = vpop.f32.mrf.mxu0
        %v3208 = vadd.f32 0.0, %v3207
        %v3209 = vpop.f32.mrf.mxu0
        %v3210 = vadd.f32 0.0, %v3209
        %v3211 = vpop.f32.mrf.mxu0
        %v3212 = vadd.f32 0.0, %v3211
        %v3213 = vpop.f32.mrf.mxu0
        %v3214 = vadd.f32 0.0, %v3213
        %3215 = vmatprep.mubr.bf16.mxu0 0
        %3216 = vmatmul.mubr.bf16.gmra.mxu0 %v2461
        %v3217 = vpop.f32.mrf.mxu0
        %v3218 = vadd.f32 0.0, %v3217
        %v3219 = vpop.f32.mrf.mxu0
        %v3220 = vadd.f32 0.0, %v3219
        %v3221 = vpop.f32.mrf.mxu0
        %v3222 = vpop.f32.mrf.mxu0
        %3223 = vdwg.mxu0
        %3224 = vmatprep.subr.bf16.mxu0 0
        %3225 = vmatpush1.bf16.msra.mxu0 0
        %3226 = vmatprep.subr.bf16.mxu0 0
        %3227 = vmatpush1.bf16.msra.mxu0 0
        %3228 = vmatprep.subr.bf16.mxu0 0
        %3229 = vmatpush1.bf16.msra.mxu0 0
        %3230 = vmatprep.subr.bf16.mxu0 0
        %3231 = vmatpush1.bf16.msra.mxu0 0
        %3232 = vmatprep.subr.bf16.mxu0 0
        %3233 = vmatpush1.bf16.msra.mxu0 0
        %3234 = vmatprep.subr.bf16.mxu0 0
        %3235 = vmatpush1.bf16.msra.mxu0 0
        %3236 = vmatprep.subr.bf16.mxu0 0
        %3237 = vmatpush1.bf16.msra.mxu0 0
        %3238 = vmatprep.subr.bf16.mxu0 0
        %3239 = vmatpush1.bf16.msra.mxu0 %v3001
        %3240 = vmatprep.subr.bf16.mxu0 0
        %3241 = vmatpush2.bf16.msra.mxu0 0
        %3242 = vmatprep.subr.bf16.mxu0 0
        %3243 = vmatpush2.bf16.msra.mxu0 0
        %3244 = vmatprep.subr.bf16.mxu0 0
        %3245 = vmatpush2.bf16.msra.mxu0 0
        %3246 = vmatprep.subr.bf16.mxu0 0
        %3247 = vmatpush2.bf16.msra.mxu0 0
        %3248 = vmatprep.subr.bf16.mxu0 0
        %3249 = vmatpush2.bf16.msra.mxu0 0
        %3250 = vmatprep.subr.bf16.mxu0 0
        %3251 = vmatpush2.bf16.msra.mxu0 0
        %3252 = vmatprep.subr.bf16.mxu0 0
        %3253 = vmatpush2.bf16.msra.mxu0 0
        %3254 = vmatprep.subr.bf16.mxu0 0
        %3255 = vmatpush2.bf16.msra.mxu0 0
        %3256 = vmatprep.mubr.bf16.mxu0 0
        %3257 = vmatmul.mubr.bf16.gmra.mxu0 %v2440
        %v3258 = vpop.f32.mrf.mxu0
        %v3259 = vadd.f32 0.0, %v3258
        %v3260 = vpop.f32.mrf.mxu0
        %v3261 = vpop.f32.mrf.mxu0
        %v3262 = vadd.f32 0.0, %v3261
        %v3263 = vpop.f32.mrf.mxu0
        %3264 = vmatprep.mubr.bf16.mxu0 0
        %3265 = vmatmul.mubr.bf16.gmra.mxu0 %v2443
        %v3266 = vpop.f32.mrf.mxu0
        %v3267 = vadd.f32 0.0, %v3266
        %v3268 = vpop.f32.mrf.mxu0
        %v3269 = vpop.f32.mrf.mxu0
        %v3270 = vadd.f32 0.0, %v3269
        %v3271 = vpop.f32.mrf.mxu0
        %3272 = vmatprep.mubr.bf16.mxu0 0
        %3273 = vmatmul.mubr.bf16.gmra.mxu0 %v2446
        %v3274 = vpop.f32.mrf.mxu0
        %v3275 = vadd.f32 0.0, %v3274
        %v3276 = vpop.f32.mrf.mxu0
        %v3277 = vpop.f32.mrf.mxu0
        %v3278 = vadd.f32 0.0, %v3277
        %v3279 = vpop.f32.mrf.mxu0
        %3280 = vmatprep.mubr.bf16.mxu0 0
        %3281 = vmatmul.mubr.bf16.gmra.mxu0 %v2449
        %v3282 = vpop.f32.mrf.mxu0
        %v3283 = vadd.f32 0.0, %v3282
        %v3284 = vpop.f32.mrf.mxu0
        %v3285 = vpop.f32.mrf.mxu0
        %v3286 = vadd.f32 0.0, %v3285
        %v3287 = vpop.f32.mrf.mxu0
        %3288 = vmatprep.mubr.bf16.mxu0 0
        %3289 = vmatmul.mubr.bf16.gmra.mxu0 %v2452
        %v3290 = vpop.f32.mrf.mxu0
        %v3291 = vadd.f32 0.0, %v3290
        %v3292 = vpop.f32.mrf.mxu0
        %v3293 = vpop.f32.mrf.mxu0
        %v3294 = vadd.f32 0.0, %v3293
        %v3295 = vpop.f32.mrf.mxu0
        %3296 = vmatprep.mubr.bf16.mxu0 0
        %3297 = vmatmul.mubr.bf16.gmra.mxu0 %v2455
        %v3298 = vpop.f32.mrf.mxu0
        %v3299 = vadd.f32 0.0, %v3298
        %v3300 = vpop.f32.mrf.mxu0
        %v3301 = vpop.f32.mrf.mxu0
        %v3302 = vadd.f32 0.0, %v3301
        %v3303 = vpop.f32.mrf.mxu0
        %3304 = vmatprep.mubr.bf16.mxu0 0
        %3305 = vmatmul.mubr.bf16.gmra.mxu0 %v2458
        %v3306 = vpop.f32.mrf.mxu0
        %v3307 = vadd.f32 0.0, %v3306
        %v3308 = vpop.f32.mrf.mxu0
        %v3309 = vpop.f32.mrf.mxu0
        %v3310 = vadd.f32 0.0, %v3309
        %v3311 = vpop.f32.mrf.mxu0
        %3312 = vmatprep.mubr.bf16.mxu0 0
        %3313 = vmatmul.mubr.bf16.gmra.mxu0 %v2461
        %v3314 = vpop.f32.mrf.mxu0
        %v3315 = vadd.f32 0.0, %v3314
        %v3316 = vpop.f32.mrf.mxu0
        %v3317 = vpop.f32.mrf.mxu0
        %v3318 = vpop.f32.mrf.mxu0
        %3319 = vdwg.mxu0
        %s3320 = scalar_lea.vmem %s301, 600 [#allocation2]
        %3321 = vst [vmem:[%s3320] sm:$0xff] %v3037
        %3322 = vst [vmem:[%s3320 + $0x8] sm:$0xff] %v3039
        %3323 = vst [vmem:[%s3320 + $0x10] sm:$0xff] %v3148
        %3324 = vst [vmem:[%s3320 + $0x18] sm:$0xff] %v3150
        %3325 = vst [vmem:[%s3320 + $0x20] sm:$0xff] %v3259
        %3326 = vst [vmem:[%s3320 + $0x28] sm:$0xff] %v3041
        %3327 = vst [vmem:[%s3320 + $0x30] sm:$0xff] %v3043
        %3328 = vst [vmem:[%s3320 + $0x38] sm:$0xff] %v3152
        %3329 = vst [vmem:[%s3320 + $0x40] sm:$0xff] %v3154
        %3330 = vst [vmem:[%s3320 + $0x48] sm:$0xff] %v3262
        %3331 = vst [vmem:[%s3320 + $0x50] sm:$0xff] %v3047
        %3332 = vst [vmem:[%s3320 + $0x58] sm:$0xff] %v3049
        %3333 = vst [vmem:[%s3320 + $0x60] sm:$0xff] %v3158
        %3334 = vst [vmem:[%s3320 + $0x68] sm:$0xff] %v3160
        %3335 = vst [vmem:[%s3320 + $0x70] sm:$0xff] %v3267
        %3336 = vst [vmem:[%s3320 + $0x78] sm:$0xff] %v3051
        %3337 = vst [vmem:[%s3320 + $0x80] sm:$0xff] %v3053
        %3338 = vst [vmem:[%s3320 + $0x88] sm:$0xff] %v3162
        %3339 = vst [vmem:[%s3320 + $0x90] sm:$0xff] %v3164
        %3340 = vst [vmem:[%s3320 + $0x98] sm:$0xff] %v3270
        %3341 = vst [vmem:[%s3320 + $0xa0] sm:$0xff] %v3057
        %3342 = vst [vmem:[%s3320 + $0xa8] sm:$0xff] %v3059
        %3343 = vst [vmem:[%s3320 + $0xb0] sm:$0xff] %v3168
        %3344 = vst [vmem:[%s3320 + $0xb8] sm:$0xff] %v3170
        %3345 = vst [vmem:[%s3320 + $0xc0] sm:$0xff] %v3275
        %3346 = vst [vmem:[%s3320 + $0xc8] sm:$0xff] %v3061
        %3347 = vst [vmem:[%s3320 + $0xd0] sm:$0xff] %v3063
        %3348 = vst [vmem:[%s3320 + $0xd8] sm:$0xff] %v3172
        %3349 = vst [vmem:[%s3320 + $0xe0] sm:$0xff] %v3174
        %3350 = vst [vmem:[%s3320 + $0xe8] sm:$0xff] %v3278
        %3351 = vst [vmem:[%s3320 + $0xf0] sm:$0xff] %v3067
        %3352 = vst [vmem:[%s3320 + $0xf8] sm:$0xff] %v3069
        %3353 = vst [vmem:[%s3320 + $0x100] sm:$0xff] %v3178
        %3354 = vst [vmem:[%s3320 + $0x108] sm:$0xff] %v3180
        %3355 = vst [vmem:[%s3320 + $0x110] sm:$0xff] %v3283
        %3356 = vst [vmem:[%s3320 + $0x118] sm:$0xff] %v3071
        %3357 = vst [vmem:[%s3320 + $0x120] sm:$0xff] %v3073
        %3358 = vst [vmem:[%s3320 + $0x128] sm:$0xff] %v3182
        %3359 = vst [vmem:[%s3320 + $0x130] sm:$0xff] %v3184
        %3360 = vst [vmem:[%s3320 + $0x138] sm:$0xff] %v3286
        %3361 = vst [vmem:[%s3320 + $0x140] sm:$0xff] %v3077
        %3362 = vst [vmem:[%s3320 + $0x148] sm:$0xff] %v3079
        %3363 = vst [vmem:[%s3320 + $0x150] sm:$0xff] %v3188
        %3364 = vst [vmem:[%s3320 + $0x158] sm:$0xff] %v3190
        %3365 = vst [vmem:[%s3320 + $0x160] sm:$0xff] %v3291
        %3366 = vst [vmem:[%s3320 + $0x168] sm:$0xff] %v3081
        %3367 = vst [vmem:[%s3320 + $0x170] sm:$0xff] %v3083
        %3368 = vst [vmem:[%s3320 + $0x178] sm:$0xff] %v3192
        %3369 = vst [vmem:[%s3320 + $0x180] sm:$0xff] %v3194
        %3370 = vst [vmem:[%s3320 + $0x188] sm:$0xff] %v3294
        %3371 = vst [vmem:[%s3320 + $0x190] sm:$0xff] %v3087
        %3372 = vst [vmem:[%s3320 + $0x198] sm:$0xff] %v3089
        %3373 = vst [vmem:[%s3320 + $0x1a0] sm:$0xff] %v3198
        %3374 = vst [vmem:[%s3320 + $0x1a8] sm:$0xff] %v3200
        %3375 = vst [vmem:[%s3320 + $0x1b0] sm:$0xff] %v3299
        %3376 = vst [vmem:[%s3320 + $0x1b8] sm:$0xff] %v3091
        %3377 = vst [vmem:[%s3320 + $0x1c0] sm:$0xff] %v3093
        %3378 = vst [vmem:[%s3320 + $0x1c8] sm:$0xff] %v3202
        %3379 = vst [vmem:[%s3320 + $0x1d0] sm:$0xff] %v3204
        %3380 = vst [vmem:[%s3320 + $0x1d8] sm:$0xff] %v3302
        %3381 = vst [vmem:[%s3320 + $0x1e0] sm:$0xff] %v3097
        %3382 = vst [vmem:[%s3320 + $0x1e8] sm:$0xff] %v3099
        %3383 = vst [vmem:[%s3320 + $0x1f0] sm:$0xff] %v3208
        %3384 = vst [vmem:[%s3320 + $0x1f8] sm:$0xff] %v3210
        %3385 = vst [vmem:[%s3320 + $0x200] sm:$0xff] %v3307
        %3386 = vst [vmem:[%s3320 + $0x208] sm:$0xff] %v3101
        %3387 = vst [vmem:[%s3320 + $0x210] sm:$0xff] %v3103
        %3388 = vst [vmem:[%s3320 + $0x218] sm:$0xff] %v3212
        %3389 = vst [vmem:[%s3320 + $0x220] sm:$0xff] %v3214
        %3390 = vst [vmem:[%s3320 + $0x228] sm:$0xff] %v3310
        %3391 = vst [vmem:[%s3320 + $0x230] sm:$0xff] %v3107
        %3392 = vst [vmem:[%s3320 + $0x238] sm:$0xff] %v3109
        %3393 = vst [vmem:[%s3320 + $0x240] sm:$0xff] %v3218
        %3394 = vst [vmem:[%s3320 + $0x248] sm:$0xff] %v3220
        %3395 = vst [vmem:[%s3320 + $0x250] sm:$0xff] %v3315
        %v3396 = vlaneseq
        %v3397 = vshrl.u32 %v3396, 7
        %v3398 = vsub.s32 2, %v3397
        %v3399 = vrot.slane %v1750, %v3398
        %v3400 = vlaneseq
        %v3401 = vshrl.u32 %v3400, 7
        %v3402 = vsub.s32 2, %v3401
        %v3403 = vrot.slane %v1752, %v3402
        %v3404 = vmul.f32 %v1754, %v3399
        %v3405 = vmul.f32 %v1755, %v3403
        %v3406 = vmul.f32 %v1756, %v3399
        %v3407 = vmul.f32 %v1757, %v3403
        %v3408 = vpack.c.bf16 %v3406, %v3404
        %v3409 = vpack.c.bf16 %v3407, %v3405
        %3410 = vmatprep.subr.bf16.mxu0 %v2183
        %3411 = vmatpush1.bf16.msra.mxu0 %v2182
        %3412 = vmatprep.subr.bf16.mxu0 %v2178
        %3413 = vmatpush1.bf16.msra.mxu0 %v2177
        %3414 = vmatprep.subr.bf16.mxu0 %v2173
        %3415 = vmatpush1.bf16.msra.mxu0 %v2172
        %3416 = vmatprep.subr.bf16.mxu0 %v2168
        %3417 = vmatpush1.bf16.msra.mxu0 %v2167
        %3418 = vmatprep.subr.bf16.mxu0 %v2163
        %3419 = vmatpush1.bf16.msra.mxu0 %v2162
        %3420 = vmatprep.subr.bf16.mxu0 %v2158
        %3421 = vmatpush1.bf16.msra.mxu0 %v2157
        %3422 = vmatprep.subr.bf16.mxu0 %v2153
        %3423 = vmatpush1.bf16.msra.mxu0 %v2152
        %3424 = vmatprep.subr.bf16.mxu0 %v2148
        %3425 = vmatpush1.bf16.msra.mxu0 %v2147
        %3426 = vmatprep.subr.bf16.mxu0 %v2223
        %3427 = vmatpush2.bf16.msra.mxu0 %v2222
        %3428 = vmatprep.subr.bf16.mxu0 %v2218
        %3429 = vmatpush2.bf16.msra.mxu0 %v2217
        %3430 = vmatprep.subr.bf16.mxu0 %v2213
        %3431 = vmatpush2.bf16.msra.mxu0 %v2212
        %3432 = vmatprep.subr.bf16.mxu0 %v2208
        %3433 = vmatpush2.bf16.msra.mxu0 %v2207
        %3434 = vmatprep.subr.bf16.mxu0 %v2203
        %3435 = vmatpush2.bf16.msra.mxu0 %v2202
        %3436 = vmatprep.subr.bf16.mxu0 %v2198
        %3437 = vmatpush2.bf16.msra.mxu0 %v2197
        %3438 = vmatprep.subr.bf16.mxu0 %v2193
        %3439 = vmatpush2.bf16.msra.mxu0 %v2192
        %3440 = vmatprep.subr.bf16.mxu0 %v2188
        %3441 = vmatpush2.bf16.msra.mxu0 %v2187
        %3442 = vmatprep.mubr.bf16.mxu0 %v3409
        %3443 = vmatmul.mubr.bf16.gmra.mxu0 %v3408
        %v3444 = vpop.f32.mrf.mxu0
        %v3445 = vadd.f32 0.0, %v3444
        %v3446 = vpop.f32.mrf.mxu0
        %v3447 = vadd.f32 0.0, %v3446
        %v3448 = vpop.f32.mrf.mxu0
        %v3449 = vadd.f32 0.0, %v3448
        %v3450 = vpop.f32.mrf.mxu0
        %v3451 = vadd.f32 0.0, %v3450
        %3452 = vdwg.mxu0
        %3453 = vmatprep.subr.bf16.mxu0 %v2185
        %3454 = vmatpush1.bf16.msra.mxu0 %v2184
        %3455 = vmatprep.subr.bf16.mxu0 %v2180
        %3456 = vmatpush1.bf16.msra.mxu0 %v2179
        %3457 = vmatprep.subr.bf16.mxu0 %v2175
        %3458 = vmatpush1.bf16.msra.mxu0 %v2174
        %3459 = vmatprep.subr.bf16.mxu0 %v2170
        %3460 = vmatpush1.bf16.msra.mxu0 %v2169
        %3461 = vmatprep.subr.bf16.mxu0 %v2165
        %3462 = vmatpush1.bf16.msra.mxu0 %v2164
        %3463 = vmatprep.subr.bf16.mxu0 %v2160
        %3464 = vmatpush1.bf16.msra.mxu0 %v2159
        %3465 = vmatprep.subr.bf16.mxu0 %v2155
        %3466 = vmatpush1.bf16.msra.mxu0 %v2154
        %3467 = vmatprep.subr.bf16.mxu0 %v2150
        %3468 = vmatpush1.bf16.msra.mxu0 %v2149
        %3469 = vmatprep.subr.bf16.mxu0 %v2225
        %3470 = vmatpush2.bf16.msra.mxu0 %v2224
        %3471 = vmatprep.subr.bf16.mxu0 %v2220
        %3472 = vmatpush2.bf16.msra.mxu0 %v2219
        %3473 = vmatprep.subr.bf16.mxu0 %v2215
        %3474 = vmatpush2.bf16.msra.mxu0 %v2214
        %3475 = vmatprep.subr.bf16.mxu0 %v2210
        %3476 = vmatpush2.bf16.msra.mxu0 %v2209
        %3477 = vmatprep.subr.bf16.mxu0 %v2205
        %3478 = vmatpush2.bf16.msra.mxu0 %v2204
        %3479 = vmatprep.subr.bf16.mxu0 %v2200
        %3480 = vmatpush2.bf16.msra.mxu0 %v2199
        %3481 = vmatprep.subr.bf16.mxu0 %v2195
        %3482 = vmatpush2.bf16.msra.mxu0 %v2194
        %3483 = vmatprep.subr.bf16.mxu0 %v2190
        %3484 = vmatpush2.bf16.msra.mxu0 %v2189
        %3485 = vmatprep.mubr.bf16.mxu0 %v3409
        %3486 = vmatmul.mubr.bf16.gmra.mxu0 %v3408
        %v3487 = vpop.f32.mrf.mxu0
        %v3488 = vadd.f32 0.0, %v3487
        %v3489 = vpop.f32.mrf.mxu0
        %v3490 = vadd.f32 0.0, %v3489
        %v3491 = vpop.f32.mrf.mxu0
        %v3492 = vadd.f32 0.0, %v3491
        %v3493 = vpop.f32.mrf.mxu0
        %v3494 = vadd.f32 0.0, %v3493
        %3495 = vdwg.mxu0
        %3496 = vmatprep.subr.bf16.mxu0 0
        %3497 = vmatpush1.bf16.msra.mxu0 %v2186
        %3498 = vmatprep.subr.bf16.mxu0 0
        %3499 = vmatpush1.bf16.msra.mxu0 %v2181
        %3500 = vmatprep.subr.bf16.mxu0 0
        %3501 = vmatpush1.bf16.msra.mxu0 %v2176
        %3502 = vmatprep.subr.bf16.mxu0 0
        %3503 = vmatpush1.bf16.msra.mxu0 %v2171
        %3504 = vmatprep.subr.bf16.mxu0 0
        %3505 = vmatpush1.bf16.msra.mxu0 %v2166
        %3506 = vmatprep.subr.bf16.mxu0 0
        %3507 = vmatpush1.bf16.msra.mxu0 %v2161
        %3508 = vmatprep.subr.bf16.mxu0 0
        %3509 = vmatpush1.bf16.msra.mxu0 %v2156
        %3510 = vmatprep.subr.bf16.mxu0 0
        %3511 = vmatpush1.bf16.msra.mxu0 %v2151
        %3512 = vmatprep.subr.bf16.mxu0 0
        %3513 = vmatpush2.bf16.msra.mxu0 %v2226
        %3514 = vmatprep.subr.bf16.mxu0 0
        %3515 = vmatpush2.bf16.msra.mxu0 %v2221
        %3516 = vmatprep.subr.bf16.mxu0 0
        %3517 = vmatpush2.bf16.msra.mxu0 %v2216
        %3518 = vmatprep.subr.bf16.mxu0 0
        %3519 = vmatpush2.bf16.msra.mxu0 %v2211
        %3520 = vmatprep.subr.bf16.mxu0 0
        %3521 = vmatpush2.bf16.msra.mxu0 %v2206
        %3522 = vmatprep.subr.bf16.mxu0 0
        %3523 = vmatpush2.bf16.msra.mxu0 %v2201
        %3524 = vmatprep.subr.bf16.mxu0 0
        %3525 = vmatpush2.bf16.msra.mxu0 %v2196
        %3526 = vmatprep.subr.bf16.mxu0 0
        %3527 = vmatpush2.bf16.msra.mxu0 %v2191
        %3528 = vmatprep.mubr.bf16.mxu0 %v3409
        %3529 = vmatmul.mubr.bf16.gmra.mxu0 %v3408
        %v3530 = vpop.f32.mrf.mxu0
        %v3531 = vadd.f32 0.0, %v3530
        %v3532 = vpop.f32.mrf.mxu0
        %v3533 = vpop.f32.mrf.mxu0
        %v3534 = vadd.f32 0.0, %v3533
        %v3535 = vpop.f32.mrf.mxu0
        %3536 = vdwg.mxu0
        %v3537 = vpack.c.bf16 %v3449, %v3445
        %v3538 = vpack.c.bf16 %v3451, %v3447
        %v3539 = vpack.c.bf16 %v3492, %v3488
        %v3540 = vpack.c.bf16 %v3494, %v3490
        %v3541 = vpack.c.bf16 %v3534, %v3531
        %3542 = vmatprep.subr.bf16.mxu0 0
        %3543 = vmatpush1.bf16.msra.mxu0 0
        %3544 = vmatprep.subr.bf16.mxu0 0
        %3545 = vmatpush1.bf16.msra.mxu0 0
        %3546 = vmatprep.subr.bf16.mxu0 0
        %3547 = vmatpush1.bf16.msra.mxu0 0
        %3548 = vmatprep.subr.bf16.mxu0 0
        %3549 = vmatpush1.bf16.msra.mxu0 0
        %3550 = vmatprep.subr.bf16.mxu0 0
        %3551 = vmatpush1.bf16.msra.mxu0 0
        %3552 = vmatprep.subr.bf16.mxu0 0
        %3553 = vmatpush1.bf16.msra.mxu0 0
        %3554 = vmatprep.subr.bf16.mxu0 0
        %3555 = vmatpush1.bf16.msra.mxu0 0
        %3556 = vmatprep.subr.bf16.mxu0 %v3538
        %3557 = vmatpush1.bf16.msra.mxu0 %v3537
        %3558 = vmatprep.subr.bf16.mxu0 0
        %3559 = vmatpush2.bf16.msra.mxu0 0
        %3560 = vmatprep.subr.bf16.mxu0 0
        %3561 = vmatpush2.bf16.msra.mxu0 0
        %3562 = vmatprep.subr.bf16.mxu0 0
        %3563 = vmatpush2.bf16.msra.mxu0 0
        %3564 = vmatprep.subr.bf16.mxu0 0
        %3565 = vmatpush2.bf16.msra.mxu0 0
        %3566 = vmatprep.subr.bf16.mxu0 0
        %3567 = vmatpush2.bf16.msra.mxu0 0
        %3568 = vmatprep.subr.bf16.mxu0 0
        %3569 = vmatpush2.bf16.msra.mxu0 0
        %3570 = vmatprep.subr.bf16.mxu0 0
        %3571 = vmatpush2.bf16.msra.mxu0 0
        %3572 = vmatprep.subr.bf16.mxu0 0
        %3573 = vmatpush2.bf16.msra.mxu0 0
        %3574 = vmatprep.mubr.bf16.mxu0 0
        %3575 = vmatmul.mubr.bf16.gmra.mxu0 %v2440
        %v3576 = vpop.f32.mrf.mxu0
        %v3577 = vadd.f32 0.0, %v3576
        %v3578 = vpop.f32.mrf.mxu0
        %v3579 = vadd.f32 0.0, %v3578
        %v3580 = vpop.f32.mrf.mxu0
        %v3581 = vadd.f32 0.0, %v3580
        %v3582 = vpop.f32.mrf.mxu0
        %v3583 = vadd.f32 0.0, %v3582
        %3584 = vmatprep.mubr.bf16.mxu0 0
        %3585 = vmatmul.mubr.bf16.gmra.mxu0 %v2443
        %v3586 = vpop.f32.mrf.mxu0
        %v3587 = vadd.f32 0.0, %v3586
        %v3588 = vpop.f32.mrf.mxu0
        %v3589 = vadd.f32 0.0, %v3588
        %v3590 = vpop.f32.mrf.mxu0
        %v3591 = vadd.f32 0.0, %v3590
        %v3592 = vpop.f32.mrf.mxu0
        %v3593 = vadd.f32 0.0, %v3592
        %3594 = vmatprep.mubr.bf16.mxu0 0
        %3595 = vmatmul.mubr.bf16.gmra.mxu0 %v2446
        %v3596 = vpop.f32.mrf.mxu0
        %v3597 = vadd.f32 0.0, %v3596
        %v3598 = vpop.f32.mrf.mxu0
        %v3599 = vadd.f32 0.0, %v3598
        %v3600 = vpop.f32.mrf.mxu0
        %v3601 = vadd.f32 0.0, %v3600
        %v3602 = vpop.f32.mrf.mxu0
        %v3603 = vadd.f32 0.0, %v3602
        %3604 = vmatprep.mubr.bf16.mxu0 0
        %3605 = vmatmul.mubr.bf16.gmra.mxu0 %v2449
        %v3606 = vpop.f32.mrf.mxu0
        %v3607 = vadd.f32 0.0, %v3606
        %v3608 = vpop.f32.mrf.mxu0
        %v3609 = vadd.f32 0.0, %v3608
        %v3610 = vpop.f32.mrf.mxu0
        %v3611 = vadd.f32 0.0, %v3610
        %v3612 = vpop.f32.mrf.mxu0
        %v3613 = vadd.f32 0.0, %v3612
        %3614 = vmatprep.mubr.bf16.mxu0 0
        %3615 = vmatmul.mubr.bf16.gmra.mxu0 %v2452
        %v3616 = vpop.f32.mrf.mxu0
        %v3617 = vadd.f32 0.0, %v3616
        %v3618 = vpop.f32.mrf.mxu0
        %v3619 = vadd.f32 0.0, %v3618
        %v3620 = vpop.f32.mrf.mxu0
        %v3621 = vadd.f32 0.0, %v3620
        %v3622 = vpop.f32.mrf.mxu0
        %v3623 = vadd.f32 0.0, %v3622
        %3624 = vmatprep.mubr.bf16.mxu0 0
        %3625 = vmatmul.mubr.bf16.gmra.mxu0 %v2455
        %v3626 = vpop.f32.mrf.mxu0
        %v3627 = vadd.f32 0.0, %v3626
        %v3628 = vpop.f32.mrf.mxu0
        %v3629 = vadd.f32 0.0, %v3628
        %v3630 = vpop.f32.mrf.mxu0
        %v3631 = vadd.f32 0.0, %v3630
        %v3632 = vpop.f32.mrf.mxu0
        %v3633 = vadd.f32 0.0, %v3632
        %3634 = vmatprep.mubr.bf16.mxu0 0
        %3635 = vmatmul.mubr.bf16.gmra.mxu0 %v2458
        %v3636 = vpop.f32.mrf.mxu0
        %v3637 = vadd.f32 0.0, %v3636
        %v3638 = vpop.f32.mrf.mxu0
        %v3639 = vadd.f32 0.0, %v3638
        %v3640 = vpop.f32.mrf.mxu0
        %v3641 = vadd.f32 0.0, %v3640
        %v3642 = vpop.f32.mrf.mxu0
        %v3643 = vadd.f32 0.0, %v3642
        %3644 = vmatprep.mubr.bf16.mxu0 0
        %3645 = vmatmul.mubr.bf16.gmra.mxu0 %v2461
        %v3646 = vpop.f32.mrf.mxu0
        %v3647 = vadd.f32 0.0, %v3646
        %v3648 = vpop.f32.mrf.mxu0
        %v3649 = vadd.f32 0.0, %v3648
        %v3650 = vpop.f32.mrf.mxu0
        %v3651 = vpop.f32.mrf.mxu0
        %3652 = vdwg.mxu0
        %3653 = vmatprep.subr.bf16.mxu0 0
        %3654 = vmatpush1.bf16.msra.mxu0 0
        %3655 = vmatprep.subr.bf16.mxu0 0
        %3656 = vmatpush1.bf16.msra.mxu0 0
        %3657 = vmatprep.subr.bf16.mxu0 0
        %3658 = vmatpush1.bf16.msra.mxu0 0
        %3659 = vmatprep.subr.bf16.mxu0 0
        %3660 = vmatpush1.bf16.msra.mxu0 0
        %3661 = vmatprep.subr.bf16.mxu0 0
        %3662 = vmatpush1.bf16.msra.mxu0 0
        %3663 = vmatprep.subr.bf16.mxu0 0
        %3664 = vmatpush1.bf16.msra.mxu0 0
        %3665 = vmatprep.subr.bf16.mxu0 0
        %3666 = vmatpush1.bf16.msra.mxu0 0
        %3667 = vmatprep.subr.bf16.mxu0 %v3540
        %3668 = vmatpush1.bf16.msra.mxu0 %v3539
        %3669 = vmatprep.subr.bf16.mxu0 0
        %3670 = vmatpush2.bf16.msra.mxu0 0
        %3671 = vmatprep.subr.bf16.mxu0 0
        %3672 = vmatpush2.bf16.msra.mxu0 0
        %3673 = vmatprep.subr.bf16.mxu0 0
        %3674 = vmatpush2.bf16.msra.mxu0 0
        %3675 = vmatprep.subr.bf16.mxu0 0
        %3676 = vmatpush2.bf16.msra.mxu0 0
        %3677 = vmatprep.subr.bf16.mxu0 0
        %3678 = vmatpush2.bf16.msra.mxu0 0
        %3679 = vmatprep.subr.bf16.mxu0 0
        %3680 = vmatpush2.bf16.msra.mxu0 0
        %3681 = vmatprep.subr.bf16.mxu0 0
        %3682 = vmatpush2.bf16.msra.mxu0 0
        %3683 = vmatprep.subr.bf16.mxu0 0
        %3684 = vmatpush2.bf16.msra.mxu0 0
        %3685 = vmatprep.mubr.bf16.mxu0 0
        %3686 = vmatmul.mubr.bf16.gmra.mxu0 %v2440
        %v3687 = vpop.f32.mrf.mxu0
        %v3688 = vadd.f32 0.0, %v3687
        %v3689 = vpop.f32.mrf.mxu0
        %v3690 = vadd.f32 0.0, %v3689
        %v3691 = vpop.f32.mrf.mxu0
        %v3692 = vadd.f32 0.0, %v3691
        %v3693 = vpop.f32.mrf.mxu0
        %v3694 = vadd.f32 0.0, %v3693
        %3695 = vmatprep.mubr.bf16.mxu0 0
        %3696 = vmatmul.mubr.bf16.gmra.mxu0 %v2443
        %v3697 = vpop.f32.mrf.mxu0
        %v3698 = vadd.f32 0.0, %v3697
        %v3699 = vpop.f32.mrf.mxu0
        %v3700 = vadd.f32 0.0, %v3699
        %v3701 = vpop.f32.mrf.mxu0
        %v3702 = vadd.f32 0.0, %v3701
        %v3703 = vpop.f32.mrf.mxu0
        %v3704 = vadd.f32 0.0, %v3703
        %3705 = vmatprep.mubr.bf16.mxu0 0
        %3706 = vmatmul.mubr.bf16.gmra.mxu0 %v2446
        %v3707 = vpop.f32.mrf.mxu0
        %v3708 = vadd.f32 0.0, %v3707
        %v3709 = vpop.f32.mrf.mxu0
        %v3710 = vadd.f32 0.0, %v3709
        %v3711 = vpop.f32.mrf.mxu0
        %v3712 = vadd.f32 0.0, %v3711
        %v3713 = vpop.f32.mrf.mxu0
        %v3714 = vadd.f32 0.0, %v3713
        %3715 = vmatprep.mubr.bf16.mxu0 0
        %3716 = vmatmul.mubr.bf16.gmra.mxu0 %v2449
        %v3717 = vpop.f32.mrf.mxu0
        %v3718 = vadd.f32 0.0, %v3717
        %v3719 = vpop.f32.mrf.mxu0
        %v3720 = vadd.f32 0.0, %v3719
        %v3721 = vpop.f32.mrf.mxu0
        %v3722 = vadd.f32 0.0, %v3721
        %v3723 = vpop.f32.mrf.mxu0
        %v3724 = vadd.f32 0.0, %v3723
        %3725 = vmatprep.mubr.bf16.mxu0 0
        %3726 = vmatmul.mubr.bf16.gmra.mxu0 %v2452
        %v3727 = vpop.f32.mrf.mxu0
        %v3728 = vadd.f32 0.0, %v3727
        %v3729 = vpop.f32.mrf.mxu0
        %v3730 = vadd.f32 0.0, %v3729
        %v3731 = vpop.f32.mrf.mxu0
        %v3732 = vadd.f32 0.0, %v3731
        %v3733 = vpop.f32.mrf.mxu0
        %v3734 = vadd.f32 0.0, %v3733
        %3735 = vmatprep.mubr.bf16.mxu0 0
        %3736 = vmatmul.mubr.bf16.gmra.mxu0 %v2455
        %v3737 = vpop.f32.mrf.mxu0
        %v3738 = vadd.f32 0.0, %v3737
        %v3739 = vpop.f32.mrf.mxu0
        %v3740 = vadd.f32 0.0, %v3739
        %v3741 = vpop.f32.mrf.mxu0
        %v3742 = vadd.f32 0.0, %v3741
        %v3743 = vpop.f32.mrf.mxu0
        %v3744 = vadd.f32 0.0, %v3743
        %3745 = vmatprep.mubr.bf16.mxu0 0
        %3746 = vmatmul.mubr.bf16.gmra.mxu0 %v2458
        %v3747 = vpop.f32.mrf.mxu0
        %v3748 = vadd.f32 0.0, %v3747
        %v3749 = vpop.f32.mrf.mxu0
        %v3750 = vadd.f32 0.0, %v3749
        %v3751 = vpop.f32.mrf.mxu0
        %v3752 = vadd.f32 0.0, %v3751
        %v3753 = vpop.f32.mrf.mxu0
        %v3754 = vadd.f32 0.0, %v3753
        %3755 = vmatprep.mubr.bf16.mxu0 0
        %3756 = vmatmul.mubr.bf16.gmra.mxu0 %v2461
        %v3757 = vpop.f32.mrf.mxu0
        %v3758 = vadd.f32 0.0, %v3757
        %v3759 = vpop.f32.mrf.mxu0
        %v3760 = vadd.f32 0.0, %v3759
        %v3761 = vpop.f32.mrf.mxu0
        %v3762 = vpop.f32.mrf.mxu0
        %3763 = vdwg.mxu0
        %3764 = vmatprep.subr.bf16.mxu0 0
        %3765 = vmatpush1.bf16.msra.mxu0 0
        %3766 = vmatprep.subr.bf16.mxu0 0
        %3767 = vmatpush1.bf16.msra.mxu0 0
        %3768 = vmatprep.subr.bf16.mxu0 0
        %3769 = vmatpush1.bf16.msra.mxu0 0
        %3770 = vmatprep.subr.bf16.mxu0 0
        %3771 = vmatpush1.bf16.msra.mxu0 0
        %3772 = vmatprep.subr.bf16.mxu0 0
        %3773 = vmatpush1.bf16.msra.mxu0 0
        %3774 = vmatprep.subr.bf16.mxu0 0
        %3775 = vmatpush1.bf16.msra.mxu0 0
        %3776 = vmatprep.subr.bf16.mxu0 0
        %3777 = vmatpush1.bf16.msra.mxu0 0
        %3778 = vmatprep.subr.bf16.mxu0 0
        %3779 = vmatpush1.bf16.msra.mxu0 %v3541
        %3780 = vmatprep.subr.bf16.mxu0 0
        %3781 = vmatpush2.bf16.msra.mxu0 0
        %3782 = vmatprep.subr.bf16.mxu0 0
        %3783 = vmatpush2.bf16.msra.mxu0 0
        %3784 = vmatprep.subr.bf16.mxu0 0
        %3785 = vmatpush2.bf16.msra.mxu0 0
        %3786 = vmatprep.subr.bf16.mxu0 0
        %3787 = vmatpush2.bf16.msra.mxu0 0
        %3788 = vmatprep.subr.bf16.mxu0 0
        %3789 = vmatpush2.bf16.msra.mxu0 0
        %3790 = vmatprep.subr.bf16.mxu0 0
        %3791 = vmatpush2.bf16.msra.mxu0 0
        %3792 = vmatprep.subr.bf16.mxu0 0
        %3793 = vmatpush2.bf16.msra.mxu0 0
        %3794 = vmatprep.subr.bf16.mxu0 0
        %3795 = vmatpush2.bf16.msra.mxu0 0
        %3796 = vmatprep.mubr.bf16.mxu0 0
        %3797 = vmatmul.mubr.bf16.gmra.mxu0 %v2440
        %v3798 = vpop.f32.mrf.mxu0
        %v3799 = vadd.f32 0.0, %v3798
        %v3800 = vpop.f32.mrf.mxu0
        %v3801 = vpop.f32.mrf.mxu0
        %v3802 = vadd.f32 0.0, %v3801
        %v3803 = vpop.f32.mrf.mxu0
        %3804 = vmatprep.mubr.bf16.mxu0 0
        %3805 = vmatmul.mubr.bf16.gmra.mxu0 %v2443
        %v3806 = vpop.f32.mrf.mxu0
        %v3807 = vadd.f32 0.0, %v3806
        %v3808 = vpop.f32.mrf.mxu0
        %v3809 = vpop.f32.mrf.mxu0
        %v3810 = vadd.f32 0.0, %v3809
        %v3811 = vpop.f32.mrf.mxu0
        %3812 = vmatprep.mubr.bf16.mxu0 0
        %3813 = vmatmul.mubr.bf16.gmra.mxu0 %v2446
        %v3814 = vpop.f32.mrf.mxu0
        %v3815 = vadd.f32 0.0, %v3814
        %v3816 = vpop.f32.mrf.mxu0
        %v3817 = vpop.f32.mrf.mxu0
        %v3818 = vadd.f32 0.0, %v3817
        %v3819 = vpop.f32.mrf.mxu0
        %3820 = vmatprep.mubr.bf16.mxu0 0
        %3821 = vmatmul.mubr.bf16.gmra.mxu0 %v2449
        %v3822 = vpop.f32.mrf.mxu0
        %v3823 = vadd.f32 0.0, %v3822
        %v3824 = vpop.f32.mrf.mxu0
        %v3825 = vpop.f32.mrf.mxu0
        %v3826 = vadd.f32 0.0, %v3825
        %v3827 = vpop.f32.mrf.mxu0
        %3828 = vmatprep.mubr.bf16.mxu0 0
        %3829 = vmatmul.mubr.bf16.gmra.mxu0 %v2452
        %v3830 = vpop.f32.mrf.mxu0
        %v3831 = vadd.f32 0.0, %v3830
        %v3832 = vpop.f32.mrf.mxu0
        %v3833 = vpop.f32.mrf.mxu0
        %v3834 = vadd.f32 0.0, %v3833
        %v3835 = vpop.f32.mrf.mxu0
        %3836 = vmatprep.mubr.bf16.mxu0 0
        %3837 = vmatmul.mubr.bf16.gmra.mxu0 %v2455
        %v3838 = vpop.f32.mrf.mxu0
        %v3839 = vadd.f32 0.0, %v3838
        %v3840 = vpop.f32.mrf.mxu0
        %v3841 = vpop.f32.mrf.mxu0
        %v3842 = vadd.f32 0.0, %v3841
        %v3843 = vpop.f32.mrf.mxu0
        %3844 = vmatprep.mubr.bf16.mxu0 0
        %3845 = vmatmul.mubr.bf16.gmra.mxu0 %v2458
        %v3846 = vpop.f32.mrf.mxu0
        %v3847 = vadd.f32 0.0, %v3846
        %v3848 = vpop.f32.mrf.mxu0
        %v3849 = vpop.f32.mrf.mxu0
        %v3850 = vadd.f32 0.0, %v3849
        %v3851 = vpop.f32.mrf.mxu0
        %3852 = vmatprep.mubr.bf16.mxu0 0
        %3853 = vmatmul.mubr.bf16.gmra.mxu0 %v2461
        %v3854 = vpop.f32.mrf.mxu0
        %v3855 = vadd.f32 0.0, %v3854
        %v3856 = vpop.f32.mrf.mxu0
        %v3857 = vpop.f32.mrf.mxu0
        %v3858 = vpop.f32.mrf.mxu0
        %3859 = vdwg.mxu0
        %s3860 = scalar_lea.vmem %s301, 1200 [#allocation2]
        %3861 = vst [vmem:[%s3860] sm:$0xff] %v3577
        %3862 = vst [vmem:[%s3860 + $0x8] sm:$0xff] %v3579
        %3863 = vst [vmem:[%s3860 + $0x10] sm:$0xff] %v3688
        %3864 = vst [vmem:[%s3860 + $0x18] sm:$0xff] %v3690
        %3865 = vst [vmem:[%s3860 + $0x20] sm:$0xff] %v3799
        %3866 = vst [vmem:[%s3860 + $0x28] sm:$0xff] %v3581
        %3867 = vst [vmem:[%s3860 + $0x30] sm:$0xff] %v3583
        %3868 = vst [vmem:[%s3860 + $0x38] sm:$0xff] %v3692
        %3869 = vst [vmem:[%s3860 + $0x40] sm:$0xff] %v3694
        %3870 = vst [vmem:[%s3860 + $0x48] sm:$0xff] %v3802
        %3871 = vst [vmem:[%s3860 + $0x50] sm:$0xff] %v3587
        %3872 = vst [vmem:[%s3860 + $0x58] sm:$0xff] %v3589
        %3873 = vst [vmem:[%s3860 + $0x60] sm:$0xff] %v3698
        %3874 = vst [vmem:[%s3860 + $0x68] sm:$0xff] %v3700
        %3875 = vst [vmem:[%s3860 + $0x70] sm:$0xff] %v3807
        %3876 = vst [vmem:[%s3860 + $0x78] sm:$0xff] %v3591
        %3877 = vst [vmem:[%s3860 + $0x80] sm:$0xff] %v3593
        %3878 = vst [vmem:[%s3860 + $0x88] sm:$0xff] %v3702
        %3879 = vst [vmem:[%s3860 + $0x90] sm:$0xff] %v3704
        %3880 = vst [vmem:[%s3860 + $0x98] sm:$0xff] %v3810
        %3881 = vst [vmem:[%s3860 + $0xa0] sm:$0xff] %v3597
        %3882 = vst [vmem:[%s3860 + $0xa8] sm:$0xff] %v3599
        %3883 = vst [vmem:[%s3860 + $0xb0] sm:$0xff] %v3708
        %3884 = vst [vmem:[%s3860 + $0xb8] sm:$0xff] %v3710
        %3885 = vst [vmem:[%s3860 + $0xc0] sm:$0xff] %v3815
        %3886 = vst [vmem:[%s3860 + $0xc8] sm:$0xff] %v3601
        %3887 = vst [vmem:[%s3860 + $0xd0] sm:$0xff] %v3603
        %3888 = vst [vmem:[%s3860 + $0xd8] sm:$0xff] %v3712
        %3889 = vst [vmem:[%s3860 + $0xe0] sm:$0xff] %v3714
        %3890 = vst [vmem:[%s3860 + $0xe8] sm:$0xff] %v3818
        %3891 = vst [vmem:[%s3860 + $0xf0] sm:$0xff] %v3607
        %3892 = vst [vmem:[%s3860 + $0xf8] sm:$0xff] %v3609
        %3893 = vst [vmem:[%s3860 + $0x100] sm:$0xff] %v3718
        %3894 = vst [vmem:[%s3860 + $0x108] sm:$0xff] %v3720
        %3895 = vst [vmem:[%s3860 + $0x110] sm:$0xff] %v3823
        %3896 = vst [vmem:[%s3860 + $0x118] sm:$0xff] %v3611
        %3897 = vst [vmem:[%s3860 + $0x120] sm:$0xff] %v3613
        %3898 = vst [vmem:[%s3860 + $0x128] sm:$0xff] %v3722
        %3899 = vst [vmem:[%s3860 + $0x130] sm:$0xff] %v3724
        %3900 = vst [vmem:[%s3860 + $0x138] sm:$0xff] %v3826
        %3901 = vst [vmem:[%s3860 + $0x140] sm:$0xff] %v3617
        %3902 = vst [vmem:[%s3860 + $0x148] sm:$0xff] %v3619
        %3903 = vst [vmem:[%s3860 + $0x150] sm:$0xff] %v3728
        %3904 = vst [vmem:[%s3860 + $0x158] sm:$0xff] %v3730
        %3905 = vst [vmem:[%s3860 + $0x160] sm:$0xff] %v3831
        %3906 = vst [vmem:[%s3860 + $0x168] sm:$0xff] %v3621
        %3907 = vst [vmem:[%s3860 + $0x170] sm:$0xff] %v3623
        %3908 = vst [vmem:[%s3860 + $0x178] sm:$0xff] %v3732
        %3909 = vst [vmem:[%s3860 + $0x180] sm:$0xff] %v3734
        %3910 = vst [vmem:[%s3860 + $0x188] sm:$0xff] %v3834
        %3911 = vst [vmem:[%s3860 + $0x190] sm:$0xff] %v3627
        %3912 = vst [vmem:[%s3860 + $0x198] sm:$0xff] %v3629
        %3913 = vst [vmem:[%s3860 + $0x1a0] sm:$0xff] %v3738
        %3914 = vst [vmem:[%s3860 + $0x1a8] sm:$0xff] %v3740
        %3915 = vst [vmem:[%s3860 + $0x1b0] sm:$0xff] %v3839
        %3916 = vst [vmem:[%s3860 + $0x1b8] sm:$0xff] %v3631
        %3917 = vst [vmem:[%s3860 + $0x1c0] sm:$0xff] %v3633
        %3918 = vst [vmem:[%s3860 + $0x1c8] sm:$0xff] %v3742
        %3919 = vst [vmem:[%s3860 + $0x1d0] sm:$0xff] %v3744
        %3920 = vst [vmem:[%s3860 + $0x1d8] sm:$0xff] %v3842
        %3921 = vst [vmem:[%s3860 + $0x1e0] sm:$0xff] %v3637
        %3922 = vst [vmem:[%s3860 + $0x1e8] sm:$0xff] %v3639
        %3923 = vst [vmem:[%s3860 + $0x1f0] sm:$0xff] %v3748
        %3924 = vst [vmem:[%s3860 + $0x1f8] sm:$0xff] %v3750
        %3925 = vst [vmem:[%s3860 + $0x200] sm:$0xff] %v3847
        %3926 = vst [vmem:[%s3860 + $0x208] sm:$0xff] %v3641
        %3927 = vst [vmem:[%s3860 + $0x210] sm:$0xff] %v3643
        %3928 = vst [vmem:[%s3860 + $0x218] sm:$0xff] %v3752
        %3929 = vst [vmem:[%s3860 + $0x220] sm:$0xff] %v3754
        %3930 = vst [vmem:[%s3860 + $0x228] sm:$0xff] %v3850
        %3931 = vst [vmem:[%s3860 + $0x230] sm:$0xff] %v3647
        %3932 = vst [vmem:[%s3860 + $0x238] sm:$0xff] %v3649
        %3933 = vst [vmem:[%s3860 + $0x240] sm:$0xff] %v3758
        %3934 = vst [vmem:[%s3860 + $0x248] sm:$0xff] %v3760
        %3935 = vst [vmem:[%s3860 + $0x250] sm:$0xff] %v3855
        %s3936 = sand.u32 %s200, 1
        %s3937 = scalar_lea.sflag [#allocation3], %s3936
        %s3938 = sand.u32 %s200, 1
        %s3939 = smul.addr %s3938, 1800
        %s3940 = scalar_lea.vmem [#allocation2], %s3939
        // Predicated region
        $region49: #{representation_adapter.1} parent=47 // pred_check
          %p3941 = pneg %p210
        $region50: #{representation_adapter.1} parent=47 // pred_check_branch
          %3943 = sbr.rel (%p3941) target = $region52
        $region51: #{representation_adapter.1} parent=47 // pred_region
          #allocation5 [shape = 'u32[6]{0}', space=smem, size = 0x18, scoped, tag = 'DMA stride descriptor']
          %s3944 = smul.u32 15, %s26
          %s3946 = ssub.s32 28800, 28800
          %3947 = vsyncadd %s3937, %s3946
          %s3948 = smul.addr %s3944, 5
          %s3949 = smul.addr %s25, 900
          %s3950 = sadd.s32 %s3948, %s3949
          %s3951 = smul.addr %s3950, 128
          %s3952 = scalar_lea.hbm %s7, %s3951
          %s3954 = sshll.u32 1, 14
          %s3955 = sxor.u32 4294967295, %s3954
          %s3958 = sshll.u32 7, 18
          %s3959 = sxor.u32 4294967295, %s3958
          %s3960 = sand.u32 0, %s3959
          %s3962 = sor.u32 %s3960, 0
          %s3963 = sshll.u32 %s3940, 4
          %s3964 = int_to_ptr.vmem [resolvable:$true] %s3963
          %3970 = sst [smem:[#allocation5]] 9600
          %s3971 = scalar_lea.smem [#allocation5], 1
          %3972 = sst [smem:[%s3971]] 38400
          %s3973 = scalar_lea.smem [#allocation5], 2
          %3974 = sst [smem:[%s3973]] 15
          %s3975 = scalar_lea.smem [#allocation5], 3
          %3976 = sst [smem:[%s3975]] 640
          %s3977 = scalar_lea.smem [#allocation5], 4
          %3978 = sst [smem:[%s3977]] 640
          %s3979 = scalar_lea.smem [#allocation5], 5
          %3980 = sst [smem:[%s3979]] 40
          %3982 = dma.general %s3964, 28800, %s3952, %s3937, 131072, [#allocation5], %s3962, 0
        $region52: #{representation_adapter.1} parent=47 // pred_fallthru
          _
      $region48: #{representation_adapter.1} parent=5 // pred_fallthru
        _
      %p3983 = scmp.le.s32.totalorder 2, %s16
      // Predicated region
      $region53: #{representation_adapter.1} parent=5 // pred_check
        %p3984 = pneg %p3983
      $region54: #{representation_adapter.1} parent=5 // pred_check_branch
        %3986 = sbr.rel (%p3984) target = $region56
      $region55: #{representation_adapter.1} parent=5 // pred_region
        %s3987 = ssub.s32 %s16, 2
        // Predicated region
        $region57: #{representation_adapter.1} parent=55 // pred_check
          %p3988 = pneg %p216
        $region58: #{representation_adapter.1} parent=55 // pred_check_branch
          %3990 = sbr.rel (%p3988) target = $region60
        $region59: #{representation_adapter.1} parent=55 // pred_region
          %s3991 = sand.u32 %s201, 1
          %s3992 = scalar_lea.sflag [#allocation3], %s3991
          %s3993 = sand.u32 %s201, 1
          %s3994 = smul.addr %s3993, 1800
          %s3995 = scalar_lea.vmem [#allocation2], %s3994
          %3996 = dma.done %s3992, 28800
        $region60: #{representation_adapter.1} parent=55 // pred_fallthru
          _
      $region56: #{representation_adapter.1} parent=5 // pred_fallthru
        _
    $region6: #{representation_adapter.1} parent=1 // loop_footer
      %s20 = sadd.s32 1, %s16
    $region7: #{representation_adapter.1} parent=1 // loop_footer_branch
      %15 = sbr.rel target = $region3
    $region8: #{representation_adapter.1} parent=1 // loop_exit
      _
    %3997 = vsyncpa [#allocation3], 1
    %s3998 = scalar_lea.sflag [#allocation3], 1
    %3999 = vsyncpa %s3998, 1

</llo_original>
